<compile_context>
chip_gen: v6e
topology: v6e:2x2x1
jax: 0.10.0
libtpu: 0.0.40
codegen_flags: <defaults>
</compile_context>

<pallas_src>
import math
import functools

import jax
import jax.numpy as jnp
from jax.experimental import pallas as pl
from jax.experimental.pallas import tpu as pltpu

TWO_PI = 2.0 * math.pi
LANE = 128

# Matmul operand dtype. float32 keeps exact parity with the PyTorch forward;
# set to jnp.bfloat16 on v6e/v7x for higher MXU throughput (accumulation stays
# float32 via preferred_element_type).
MATMUL_DTYPE = jnp.float32

LAYER_PARAM_ORDER = (
    "w1i", "w1j", "w1r", "b1", "w2", "b2",
    "wg", "bg",
    "wc1", "bc1", "wc2", "bc2", "wc3", "bc3",
    "wn1f", "wn1m", "bn1", "wn2", "bn2", "wn3", "bn3",
)


def silu(x):
    return x * jax.nn.sigmoid(x)


def _round_up(x, m):
    return ((x + m - 1) // m) * m


def _weight_shapes(hp, h1p):
    return {
        "w1i": (1, h1p), "w1j": (1, h1p), "w1r": (1, h1p), "b1": (1, h1p),
        "w2": (h1p, hp), "b2": (1, hp),
        "wg": (1, hp), "bg": (1, 1),
        "wc1": (hp, hp), "bc1": (1, hp),
        "wc2": (hp, h1p), "bc2": (1, h1p),
        "wc3": (1, h1p), "bc3": (1, 1),
        "wn1f": (1, hp), "wn1m": (hp, hp), "bn1": (1, hp),
        "wn2": (hp, h1p), "bn2": (1, h1p),
        "wn3": (1, h1p), "bn3": (1, 1),
    }


# ---------------------------------------------------------------------------
# Kernel: one grid step = one TorusEGNN layer applied to a tile of i-rows of
# one batch element.  The mean-pool / Linear / LayerNorm head runs in the last
# grid step.
# ---------------------------------------------------------------------------
def network_kernel(*refs, batch, n, ti, num_layers):
    nlp = len(LAYER_PARAM_ORDER)
    c0_ref = refs[0]                   # (N, 1) this batch element's torus angles
    offdiag_ref = refs[1]              # (TI*N, 1) mask column for this i-tile (1 - eye)
    lref = dict(zip(LAYER_PARAM_ORDER, refs[2:2 + nlp]))
    wf_ref, bf_ref, gamma_ref, beta_ref = refs[2 + nlp:6 + nlp]
    out_ref = refs[6 + nlp]
    feats_buf = refs[7 + nlp]          # (2*B*N, 1) double-buffered node features
    coors_buf = refs[8 + nlp]          # (2*B*N, 1) double-buffered node coordinates

    bn = batch * n
    rows = ti * n

    layer = pl.program_id(0)
    bb = pl.program_id(1)
    t = pl.program_id(2)
    n_tiles = pl.num_programs(2)

    rslot = jax.lax.rem(layer, 2)      # read slot  (previous layer's state)
    wslot = 1 - rslot                  # write slot (this layer's output state)

    # ---- initialise the read slot from the input at the first tile of layer 0
    @pl.when(jnp.logical_and(layer == 0, t == 0))
    def _():
        base = pl.multiple_of(bb * n, 8)
        feats_buf[pl.ds(base, n), :] = c0_ref[...]
        coors_buf[pl.ds(base, n), :] = c0_ref[...]

    jbase = pl.multiple_of(rslot * bn + bb * n, 8)            # this batch's j rows
    ibase = pl.multiple_of(rslot * bn + bb * n + t * ti, 8)   # this tile's i rows
    obase = pl.multiple_of(wslot * bn + bb * n + t * ti, 8)   # write-target rows

    coors_j = coors_buf[pl.ds(jbase, n), :]     # (N, 1)
    feats_j = feats_buf[pl.ds(jbase, n), :]
    coors_i = coors_buf[pl.ds(ibase, ti), :]    # (TI, 1)
    feats_i = feats_buf[pl.ds(ibase, ti), :]

    p = {k: lref[k][0] for k in LAYER_PARAM_ORDER}

    def dot(x, y):
        return jnp.dot(x.astype(MATMUL_DTYPE), y.astype(MATMUL_DTYPE),
                       preferred_element_type=jnp.float32)

    od_col = offdiag_ref[...]                   # (rows, 1): 0 where j == i
    eye3 = (1.0 - od_col).reshape(ti, n, 1)     # (TI, N, 1): 1 where j == i

    cj3 = coors_j[None]                         # (1, N, 1)
    fj3 = feats_j[None]
    # i-side values in pair layout, extracted with a width-1 eye reduction
    # (no cross-layout reshape, no H-wide replica of pair_j as in v2).
    ci3 = jnp.sum(cj3 * eye3, axis=1, keepdims=True)    # (TI, 1, 1)
    fi3 = jnp.sum(fj3 * eye3, axis=1, keepdims=True)

    # relative torus coordinates wrapped into [-pi, pi]
    rel = ci3 - cj3                                      # (TI, N, 1)
    rel = rel - TWO_PI * jnp.round(rel * (1.0 / TWO_PI))
    rd = rel * rel

    # edge MLP: Linear(2*feat+1 -> H/2) as broadcast outer products (feat_dim
    # == 1, so no K=1 MXU matmul), SiLU, Linear(H/2 -> H), SiLU.
    h = fi3 * p["w1i"] + fj3 * p["w1j"] + rd * p["w1r"] + p["b1"]   # (TI, N, H1p)
    h = silu(h).reshape(rows, -1)
    m = silu(dot(h, p["w2"]) + p["b2"])                  # (rows, Hp)

    # edge gate (Linear(H->1) + sigmoid); the off-diagonal mask is folded into
    # the scalar gate.  Exact: rel is 0 on the diagonal, so the (PyTorch)
    # post-coors_mlp masking of coor_weights is a no-op, and m_i excludes the
    # diagonal either way.
    gate = jax.nn.sigmoid(jnp.sum(m * p["wg"], axis=-1, keepdims=True) + p["bg"])
    m = m * (gate * od_col)                              # (rows, Hp)

    # coordinate branch (coors_mlp); final Linear(H/2 -> 1) as a lane reduce
    hc = silu(dot(m, p["wc1"]) + p["bc1"])
    hc = silu(dot(hc, p["wc2"]) + p["bc2"])
    cw = jnp.sum(hc * p["wc3"], axis=-1, keepdims=True) + p["bc3"]   # (rows, 1)
    inv = pl.reciprocal(rd + TWO_PI, approx=False)
    coors_new = jnp.sum(cw.reshape(ti, n, 1) * rel * inv, axis=1) + coors_i

    # node branch: message sum over neighbours j (diagonal already zeroed via
    # the gate), node MLP, residual.
    m_i = jnp.sum(m.reshape(ti, n, -1), axis=1)          # (TI, Hp)
    hn = silu(feats_i * p["wn1f"] + dot(m_i, p["wn1m"]) + p["bn1"])  # (TI, Hp)
    hn = silu(dot(hn, p["wn2"]) + p["bn2"])              # (TI, H1p)
    feats_new = (jnp.sum(hn * p["wn3"], axis=-1, keepdims=True)
                 + p["bn3"] + feats_i)                   # (TI, 1)

    feats_buf[pl.ds(obase, ti), :] = feats_new
    coors_buf[pl.ds(obase, ti), :] = coors_new

    # ---- head: mean pool over nodes, Linear(1 -> out), LayerNorm (last step)
    is_last = jnp.logical_and(
        layer == num_layers - 1,
        jnp.logical_and(bb == batch - 1, t == n_tiles - 1))

    @pl.when(is_last)
    def _():
        fbase = pl.multiple_of(wslot * bn, 8)
        feats_fin = feats_buf[pl.ds(fbase, bn), :]                   # (B*N, 1)
        pooled = jnp.mean(feats_fin.reshape(batch, n, 1), axis=1)    # (B, 1)
        y = pooled * wf_ref[...] + bf_ref[...]                       # (B, out)
        mu = jnp.mean(y, axis=-1, keepdims=True)
        var = jnp.mean(jnp.square(y - mu), axis=-1, keepdims=True)
        y = (y - mu) * jax.lax.rsqrt(var + 1e-5)
        out_ref[...] = y * gamma_ref[...] + beta_ref[...]


# ---------------------------------------------------------------------------
# VMEM sizing helpers.
# ---------------------------------------------------------------------------
def _vmem_capacity_bytes():
    try:
        return int(pltpu.get_tpu_info().vmem_capacity_bytes)
    except Exception:
        return 64 * 1024 * 1024        # conservative (v7x) fallback


def _estimate_vmem_bytes(ti, n, bn, hp, h1p):
    rows = ti * n
    hidden = rows * (2 * hp + 2 * h1p) * 4          # live (rows, H) f32 matmul intermediates
    scalar_plane = rows * 512 * 8                   # (TI, N, 1)-style arrays (lane padded)
    per_layer_w = 4 * (h1p * hp + 2 * hp * hp + 2 * hp * h1p + 12 * (hp + h1p) + 8)
    weights = 2 * per_layer_w                       # double-buffered layer weights
    state = 2 * (2 * bn) * 512                      # two (2*B*N, 1) buffers (lane padded)
    mask = 2 * rows * 512                           # offdiag block, double-buffered
    return hidden + scalar_plane + weights + state + mask + (4 << 20)


def _pick_tile(n, bn, hp, h1p, budget):
    best = 8
    for ti in range(8, n + 1, 8):
        if n % ti == 0 and _estimate_vmem_bytes(ti, n, bn, hp, h1p) <= budget:
            best = ti
    return min(best, n)


# ---------------------------------------------------------------------------
# Wrapper: pad hidden dims to lane multiples, stack per-layer weights, call.
# ---------------------------------------------------------------------------
def _pad_to(x, shape):
    out = jnp.zeros(shape, jnp.float32)
    return out.at[tuple(slice(0, s) for s in x.shape)].set(x)


def _pack_layer_params(layers, hp, h1p):
    shapes = _weight_shapes(hp, h1p)
    return [jnp.stack([_pad_to(lp[name], shapes[name]) for lp in layers])
            for name in LAYER_PARAM_ORDER]


def full_equivariant_graph_network(coors_2d, params):
    """coors_2d: (B, N) torus angles -> (B, out_dim)."""
    bsz, n = coors_2d.shape
    assert n % 8 == 0, "num_node must be a multiple of 8 (TPU sublane tiling)"
    layers = params["layers"]
    num_layers = len(layers)
    h1, h = layers[0]["w2"].shape                  # logical hidden//2, hidden
    hp, h1p = _round_up(h, LANE), _round_up(h1, LANE)
    out_dim = params["wf"].shape[1]
    bn = bsz * n

    cap = _vmem_capacity_bytes()
    ti = _pick_tile(n, bn, hp, h1p, budget=int(0.35 * cap))
    est = _estimate_vmem_bytes(ti, n, bn, hp, h1p)
    vmem_limit = int(min(max(2 * est, 48 * 1024 * 1024), 0.9 * cap))

    stacked = _pack_layer_params(layers, hp, h1p)
    c0 = coors_2d.reshape(bn, 1).astype(jnp.float32)

    node = jnp.arange(n)
    offdiag = (node[:, None] != node[None, :]).astype(jnp.float32)   # (N, N), no B replication
    offdiag = offdiag.reshape(n * n, 1)

    shapes = _weight_shapes(hp, h1p)
    weight_specs = [pl.BlockSpec((1,) + shapes[name], lambda l, b, t: (l, 0, 0))
                    for name in LAYER_PARAM_ORDER]
    head_spec = pl.BlockSpec((1, out_dim), lambda l, b, t: (0, 0))

    grid = (num_layers, bsz, n // ti)
    kernel = functools.partial(network_kernel, batch=bsz, n=n, ti=ti,
                               num_layers=num_layers)

    return pl.pallas_call(
        kernel,
        out_shape=jax.ShapeDtypeStruct((bsz, out_dim), jnp.float32),
        grid_spec=pltpu.PrefetchScalarGridSpec(
            num_scalar_prefetch=0,
            grid=grid,
            in_specs=[
                pl.BlockSpec((n, 1), lambda l, b, t: (b, 0)),          # c0 (per batch)
                pl.BlockSpec((ti * n, 1), lambda l, b, t: (t, 0)),     # offdiag (per i-tile)
                *weight_specs,
                head_spec, head_spec, head_spec, head_spec,            # wf, bf, gamma, beta
            ],
            out_specs=pl.BlockSpec((bsz, out_dim), lambda l, b, t: (0, 0)),
            scratch_shapes=[
                pltpu.VMEM((2 * bn, 1), jnp.float32),                  # feats (2 slots)
                pltpu.VMEM((2 * bn, 1), jnp.float32),                  # coors (2 slots)
            ]),
        compiler_params=pltpu.CompilerParams(
            dimension_semantics=("arbitrary", "arbitrary", "arbitrary"),
            vmem_limit_bytes=vmem_limit),
    )(c0, offdiag, *stacked,
      params["wf"], params["bf"], params["gamma"], params["beta"])


# ---------------------------------------------------------------------------
# Deterministic parameter init (logical shapes match TorusEGNN / final head,
# feat_dim == 1 since preprocessing=None makes feats = the torus angle).
# ---------------------------------------------------------------------------
def xavier_normal(key, shape):
    fan_in, fan_out = shape
    std = math.sqrt(2.0 / (fan_in + fan_out))
    return std * jax.random.normal(key, shape, dtype=jnp.float32)


def init_layer_params(key, hidden):
    h, h1 = hidden, hidden // 2
    ks = jax.random.split(key, 9)
    w1 = xavier_normal(ks[0], (3, h1))          # edge_mlp Linear(2*1+1 -> H/2), split rows
    wn1 = xavier_normal(ks[6], (1 + h, h))      # node_mlp Linear(1+H -> H), split rows
    z = lambda *s: jnp.zeros(s, jnp.float32)
    return dict(
        w1i=w1[0:1], w1j=w1[1:2], w1r=w1[2:3], b1=z(1, h1),
        w2=xavier_normal(ks[1], (h1, h)), b2=z(1, h),
        wg=xavier_normal(ks[2], (h, 1)).reshape(1, h), bg=z(1, 1),
        wc1=xavier_normal(ks[3], (h, h)), bc1=z(1, h),
        wc2=xavier_normal(ks[4], (h, h1)), bc2=z(1, h1),
        wc3=xavier_normal(ks[5], (h1, 1)).reshape(1, h1), bc3=z(1, 1),
        wn1f=wn1[0:1], wn1m=wn1[1:], bn1=z(1, h),
        wn2=xavier_normal(ks[7], (h, h1)), bn2=z(1, h1),
        wn3=xavier_normal(ks[8], (h1, 1)).reshape(1, h1), bn3=z(1, 1),
    )


def init_params(key, num_layers, hidden, out_dim):
    keys = jax.random.split(key, num_layers + 1)
    return dict(
        layers=[init_layer_params(keys[i], hidden) for i in range(num_layers)],
        wf=xavier_normal(keys[-1], (1, out_dim)),       # final Linear(feat_dim=1 -> out)
        bf=jnp.zeros((1, out_dim), jnp.float32),
        gamma=jnp.ones((1, out_dim), jnp.float32),      # LayerNorm weight
        beta=jnp.zeros((1, out_dim), jnp.float32),      # LayerNorm bias
    )


if __name__ == "__main__":
    B, N, HIDDEN, OUT_DIM, NUM_LAYERS = 2, 8, 32, 4, 2
    key = jax.random.PRNGKey(0)
    k_in, k_par = jax.random.split(key)
    coors = jax.random.uniform(k_in, (B, N), minval=-math.pi, maxval=math.pi,
                               dtype=jnp.float32)
    params = init_params(k_par, NUM_LAYERS, HIDDEN, OUT_DIM)

    out = full_equivariant_graph_network(coors, params)
    out = jax.block_until_ready(out)
    assert out.shape == (B, OUT_DIM)
    assert bool(jnp.all(jnp.isfinite(out)))
    print("KERNEL_OK")
</pallas_src>

<mosaic_0001>
module attributes {stable_mosaic.version = 11 : i64} {
  func.func @network_kernel(%arg0: i32, %arg1: i32, %arg2: i32, %arg3: memref<8x1xf32, #tpu.memory_space<vmem>>, %arg4: memref<64x1xf32, #tpu.memory_space<vmem>>, %arg5: memref<1x1x128xf32, #tpu.memory_space<vmem>>, %arg6: memref<1x1x128xf32, #tpu.memory_space<vmem>>, %arg7: memref<1x1x128xf32, #tpu.memory_space<vmem>>, %arg8: memref<1x1x128xf32, #tpu.memory_space<vmem>>, %arg9: memref<1x128x128xf32, #tpu.memory_space<vmem>>, %arg10: memref<1x1x128xf32, #tpu.memory_space<vmem>>, %arg11: memref<1x1x128xf32, #tpu.memory_space<vmem>>, %arg12: memref<1x1x1xf32, #tpu.memory_space<vmem>>, %arg13: memref<1x128x128xf32, #tpu.memory_space<vmem>>, %arg14: memref<1x1x128xf32, #tpu.memory_space<vmem>>, %arg15: memref<1x128x128xf32, #tpu.memory_space<vmem>>, %arg16: memref<1x1x128xf32, #tpu.memory_space<vmem>>, %arg17: memref<1x1x128xf32, #tpu.memory_space<vmem>>, %arg18: memref<1x1x1xf32, #tpu.memory_space<vmem>>, %arg19: memref<1x1x128xf32, #tpu.memory_space<vmem>>, %arg20: memref<1x128x128xf32, #tpu.memory_space<vmem>>, %arg21: memref<1x1x128xf32, #tpu.memory_space<vmem>>, %arg22: memref<1x128x128xf32, #tpu.memory_space<vmem>>, %arg23: memref<1x1x128xf32, #tpu.memory_space<vmem>>, %arg24: memref<1x1x128xf32, #tpu.memory_space<vmem>>, %arg25: memref<1x1x1xf32, #tpu.memory_space<vmem>>, %arg26: memref<1x4xf32, #tpu.memory_space<vmem>>, %arg27: memref<1x4xf32, #tpu.memory_space<vmem>>, %arg28: memref<1x4xf32, #tpu.memory_space<vmem>>, %arg29: memref<1x4xf32, #tpu.memory_space<vmem>>, %arg30: memref<2x4xf32, #tpu.memory_space<vmem>>, %arg31: memref<32x1xf32, #tpu.memory_space<vmem>>, %arg32: memref<32x1xf32, #tpu.memory_space<vmem>>) attributes {dimension_semantics = [#tpu.dimension_semantics<arbitrary>, #tpu.dimension_semantics<arbitrary>, #tpu.dimension_semantics<arbitrary>], iteration_bounds = array<i64: 2, 2, 1>, scalar_prefetch = 0 : i64, scratch_operands = 2 : i64, tpu.core_type = #tpu.core_type<tc>, window_params = [{transform_indices = @transform_0, window_bounds = array<i64: 8, 1>}, {transform_indices = @transform_1, window_bounds = array<i64: 64, 1>}, {transform_indices = @transform_2, window_bounds = array<i64: 1, 1, 128>}, {transform_indices = @transform_3, window_bounds = array<i64: 1, 1, 128>}, {transform_indices = @transform_4, window_bounds = array<i64: 1, 1, 128>}, {transform_indices = @transform_5, window_bounds = array<i64: 1, 1, 128>}, {transform_indices = @transform_6, window_bounds = array<i64: 1, 128, 128>}, {transform_indices = @transform_7, window_bounds = array<i64: 1, 1, 128>}, {transform_indices = @transform_8, window_bounds = array<i64: 1, 1, 128>}, {transform_indices = @transform_9, window_bounds = array<i64: 1, 1, 1>}, {transform_indices = @transform_10, window_bounds = array<i64: 1, 128, 128>}, {transform_indices = @transform_11, window_bounds = array<i64: 1, 1, 128>}, {transform_indices = @transform_12, window_bounds = array<i64: 1, 128, 128>}, {transform_indices = @transform_13, window_bounds = array<i64: 1, 1, 128>}, {transform_indices = @transform_14, window_bounds = array<i64: 1, 1, 128>}, {transform_indices = @transform_15, window_bounds = array<i64: 1, 1, 1>}, {transform_indices = @transform_16, window_bounds = array<i64: 1, 1, 128>}, {transform_indices = @transform_17, window_bounds = array<i64: 1, 128, 128>}, {transform_indices = @transform_18, window_bounds = array<i64: 1, 1, 128>}, {transform_indices = @transform_19, window_bounds = array<i64: 1, 128, 128>}, {transform_indices = @transform_20, window_bounds = array<i64: 1, 1, 128>}, {transform_indices = @transform_21, window_bounds = array<i64: 1, 1, 128>}, {transform_indices = @transform_22, window_bounds = array<i64: 1, 1, 1>}, {pipeline_mode = #tpu.pipeline_mode<synchronous>, transform_indices = @transform_23, window_bounds = array<i64: 1, 4>}, {pipeline_mode = #tpu.pipeline_mode<synchronous>, transform_indices = @transform_24, window_bounds = array<i64: 1, 4>}, {pipeline_mode = #tpu.pipeline_mode<synchronous>, transform_indices = @transform_25, window_bounds = array<i64: 1, 4>}, {pipeline_mode = #tpu.pipeline_mode<synchronous>, transform_indices = @transform_26, window_bounds = array<i64: 1, 4>}, {pipeline_mode = #tpu.pipeline_mode<synchronous>, transform_indices = @transform_27, window_bounds = array<i64: 2, 4>}]} {
    %c2_i32 = arith.constant 2 : i32
    %0 = arith.remsi %arg0, %c2_i32 : i32
    %c1_i32 = arith.constant 1 : i32
    %1 = arith.subi %c1_i32, %0 : i32
    %c0_i32 = arith.constant 0 : i32
    %2 = arith.cmpi eq, %arg0, %c0_i32 : i32
    %c0_i32_0 = arith.constant 0 : i32
    %3 = arith.cmpi eq, %arg2, %c0_i32_0 : i32
    %4 = arith.andi %2, %3 : i1
    %5 = arith.extui %4 : i1 to i32
    %c0_i32_1 = arith.constant 0 : i32
    %6 = arith.cmpi ne, %5, %c0_i32_1 : i32
    scf.if %6 {
      %c8_i32_104 = arith.constant 8 : i32
      %220 = arith.muli %arg1, %c8_i32_104 : i32
      %221 = tpu.assume_multiple %220, 8 : i32
      %c0_105 = arith.constant 0 : index
      %c0_106 = arith.constant 0 : index
      %222 = vector.load %arg3[%c0_105, %c0_106] : memref<8x1xf32, #tpu.memory_space<vmem>>, vector<8x1xf32>
      %223 = arith.index_cast %221 : i32 to index
      %c0_107 = arith.constant 0 : index
      %224 = vector.load %arg31[%223, %c0_107] : memref<32x1xf32, #tpu.memory_space<vmem>>, vector<8x1xf32>
      tpu.vector_store %arg31[%223, %c0_107], %222 {strides = array<i32>} : memref<32x1xf32, #tpu.memory_space<vmem>>, vector<8x1xf32>,
      %c0_108 = arith.constant 0 : index
      %c0_109 = arith.constant 0 : index
      %225 = vector.load %arg3[%c0_108, %c0_109] : memref<8x1xf32, #tpu.memory_space<vmem>>, vector<8x1xf32>
      %226 = arith.index_cast %221 : i32 to index
      %c0_110 = arith.constant 0 : index
      %227 = vector.load %arg32[%226, %c0_110] : memref<32x1xf32, #tpu.memory_space<vmem>>, vector<8x1xf32>
      tpu.vector_store %arg32[%226, %c0_110], %225 {strides = array<i32>} : memref<32x1xf32, #tpu.memory_space<vmem>>, vector<8x1xf32>,
    } else {
    }
    %c16_i32 = arith.constant 16 : i32
    %7 = arith.muli %0, %c16_i32 : i32
    %c8_i32 = arith.constant 8 : i32
    %8 = arith.muli %arg1, %c8_i32 : i32
    %9 = arith.addi %7, %8 : i32
    %10 = tpu.assume_multiple %9, 8 : i32
    %c16_i32_2 = arith.constant 16 : i32
    %11 = arith.muli %0, %c16_i32_2 : i32
    %c8_i32_3 = arith.constant 8 : i32
    %12 = arith.muli %arg1, %c8_i32_3 : i32
    %13 = arith.addi %11, %12 : i32
    %c8_i32_4 = arith.constant 8 : i32
    %14 = arith.muli %arg2, %c8_i32_4 : i32
    %15 = arith.addi %13, %14 : i32
    %16 = tpu.assume_multiple %15, 8 : i32
    %c16_i32_5 = arith.constant 16 : i32
    %17 = arith.muli %1, %c16_i32_5 : i32
    %c8_i32_6 = arith.constant 8 : i32
    %18 = arith.muli %arg1, %c8_i32_6 : i32
    %19 = arith.addi %17, %18 : i32
    %c8_i32_7 = arith.constant 8 : i32
    %20 = arith.muli %arg2, %c8_i32_7 : i32
    %21 = arith.addi %19, %20 : i32
    %22 = tpu.assume_multiple %21, 8 : i32
    %23 = arith.index_cast %10 : i32 to index
    %c0 = arith.constant 0 : index
    %24 = vector.load %arg32[%23, %c0] : memref<32x1xf32, #tpu.memory_space<vmem>>, vector<8x1xf32>
    %25 = arith.index_cast %10 : i32 to index
    %c0_8 = arith.constant 0 : index
    %26 = vector.load %arg31[%25, %c0_8] : memref<32x1xf32, #tpu.memory_space<vmem>>, vector<8x1xf32>
    %27 = arith.index_cast %16 : i32 to index
    %c0_9 = arith.constant 0 : index
    %28 = vector.load %arg32[%27, %c0_9] : memref<32x1xf32, #tpu.memory_space<vmem>>, vector<8x1xf32>
    %29 = arith.index_cast %16 : i32 to index
    %c0_10 = arith.constant 0 : index
    %30 = vector.load %arg31[%29, %c0_10] : memref<32x1xf32, #tpu.memory_space<vmem>>, vector<8x1xf32>
    %c0_11 = arith.constant 0 : index
    %c0_12 = arith.constant 0 : index
    %c0_13 = arith.constant 0 : index
    %31 = vector.load %arg5[%c0_11, %c0_12, %c0_13] : memref<1x1x128xf32, #tpu.memory_space<vmem>>, vector<1x1x128xf32>
    %32 = vector.shape_cast %31 : vector<1x1x128xf32> to vector<1x128xf32>
    %c0_14 = arith.constant 0 : index
    %c0_15 = arith.constant 0 : index
    %c0_16 = arith.constant 0 : index
    %33 = vector.load %arg6[%c0_14, %c0_15, %c0_16] : memref<1x1x128xf32, #tpu.memory_space<vmem>>, vector<1x1x128xf32>
    %34 = vector.shape_cast %33 : vector<1x1x128xf32> to vector<1x128xf32>
    %c0_17 = arith.constant 0 : index
    %c0_18 = arith.constant 0 : index
    %c0_19 = arith.constant 0 : index
    %35 = vector.load %arg7[%c0_17, %c0_18, %c0_19] : memref<1x1x128xf32, #tpu.memory_space<vmem>>, vector<1x1x128xf32>
    %36 = vector.shape_cast %35 : vector<1x1x128xf32> to vector<1x128xf32>
    %c0_20 = arith.constant 0 : index
    %c0_21 = arith.constant 0 : index
    %c0_22 = arith.constant 0 : index
    %37 = vector.load %arg8[%c0_20, %c0_21, %c0_22] : memref<1x1x128xf32, #tpu.memory_space<vmem>>, vector<1x1x128xf32>
    %38 = vector.shape_cast %37 : vector<1x1x128xf32> to vector<1x128xf32>
    %c0_23 = arith.constant 0 : index
    %c0_24 = arith.constant 0 : index
    %c0_25 = arith.constant 0 : index
    %39 = vector.load %arg9[%c0_23, %c0_24, %c0_25] : memref<1x128x128xf32, #tpu.memory_space<vmem>>, vector<1x128x128xf32>
    %40 = vector.shape_cast %39 : vector<1x128x128xf32> to vector<128x128xf32>
    %c0_26 = arith.constant 0 : index
    %c0_27 = arith.constant 0 : index
    %c0_28 = arith.constant 0 : index
    %41 = vector.load %arg10[%c0_26, %c0_27, %c0_28] : memref<1x1x128xf32, #tpu.memory_space<vmem>>, vector<1x1x128xf32>
    %42 = vector.shape_cast %41 : vector<1x1x128xf32> to vector<1x128xf32>
    %c0_29 = arith.constant 0 : index
    %c0_30 = arith.constant 0 : index
    %c0_31 = arith.constant 0 : index
    %43 = vector.load %arg11[%c0_29, %c0_30, %c0_31] : memref<1x1x128xf32, #tpu.memory_space<vmem>>, vector<1x1x128xf32>
    %44 = vector.shape_cast %43 : vector<1x1x128xf32> to vector<1x128xf32>
    %c0_32 = arith.constant 0 : index
    %c0_33 = arith.constant 0 : index
    %c0_34 = arith.constant 0 : index
    %45 = vector.load %arg12[%c0_32, %c0_33, %c0_34] : memref<1x1x1xf32, #tpu.memory_space<vmem>>, vector<1x1x1xf32>
    %46 = vector.shape_cast %45 : vector<1x1x1xf32> to vector<1x1xf32>
    %c0_35 = arith.constant 0 : index
    %c0_36 = arith.constant 0 : index
    %c0_37 = arith.constant 0 : index
    %47 = vector.load %arg13[%c0_35, %c0_36, %c0_37] : memref<1x128x128xf32, #tpu.memory_space<vmem>>, vector<1x128x128xf32>
    %48 = vector.shape_cast %47 : vector<1x128x128xf32> to vector<128x128xf32>
    %c0_38 = arith.constant 0 : index
    %c0_39 = arith.constant 0 : index
    %c0_40 = arith.constant 0 : index
    %49 = vector.load %arg14[%c0_38, %c0_39, %c0_40] : memref<1x1x128xf32, #tpu.memory_space<vmem>>, vector<1x1x128xf32>
    %50 = vector.shape_cast %49 : vector<1x1x128xf32> to vector<1x128xf32>
    %c0_41 = arith.constant 0 : index
    %c0_42 = arith.constant 0 : index
    %c0_43 = arith.constant 0 : index
    %51 = vector.load %arg15[%c0_41, %c0_42, %c0_43] : memref<1x128x128xf32, #tpu.memory_space<vmem>>, vector<1x128x128xf32>
    %52 = vector.shape_cast %51 : vector<1x128x128xf32> to vector<128x128xf32>
    %c0_44 = arith.constant 0 : index
    %c0_45 = arith.constant 0 : index
    %c0_46 = arith.constant 0 : index
    %53 = vector.load %arg16[%c0_44, %c0_45, %c0_46] : memref<1x1x128xf32, #tpu.memory_space<vmem>>, vector<1x1x128xf32>
    %54 = vector.shape_cast %53 : vector<1x1x128xf32> to vector<1x128xf32>
    %c0_47 = arith.constant 0 : index
    %c0_48 = arith.constant 0 : index
    %c0_49 = arith.constant 0 : index
    %55 = vector.load %arg17[%c0_47, %c0_48, %c0_49] : memref<1x1x128xf32, #tpu.memory_space<vmem>>, vector<1x1x128xf32>
    %56 = vector.shape_cast %55 : vector<1x1x128xf32> to vector<1x128xf32>
    %c0_50 = arith.constant 0 : index
    %c0_51 = arith.constant 0 : index
    %c0_52 = arith.constant 0 : index
    %57 = vector.load %arg18[%c0_50, %c0_51, %c0_52] : memref<1x1x1xf32, #tpu.memory_space<vmem>>, vector<1x1x1xf32>
    %58 = vector.shape_cast %57 : vector<1x1x1xf32> to vector<1x1xf32>
    %c0_53 = arith.constant 0 : index
    %c0_54 = arith.constant 0 : index
    %c0_55 = arith.constant 0 : index
    %59 = vector.load %arg19[%c0_53, %c0_54, %c0_55] : memref<1x1x128xf32, #tpu.memory_space<vmem>>, vector<1x1x128xf32>
    %60 = vector.shape_cast %59 : vector<1x1x128xf32> to vector<1x128xf32>
    %c0_56 = arith.constant 0 : index
    %c0_57 = arith.constant 0 : index
    %c0_58 = arith.constant 0 : index
    %61 = vector.load %arg20[%c0_56, %c0_57, %c0_58] : memref<1x128x128xf32, #tpu.memory_space<vmem>>, vector<1x128x128xf32>
    %62 = vector.shape_cast %61 : vector<1x128x128xf32> to vector<128x128xf32>
    %c0_59 = arith.constant 0 : index
    %c0_60 = arith.constant 0 : index
    %c0_61 = arith.constant 0 : index
    %63 = vector.load %arg21[%c0_59, %c0_60, %c0_61] : memref<1x1x128xf32, #tpu.memory_space<vmem>>, vector<1x1x128xf32>
    %64 = vector.shape_cast %63 : vector<1x1x128xf32> to vector<1x128xf32>
    %c0_62 = arith.constant 0 : index
    %c0_63 = arith.constant 0 : index
    %c0_64 = arith.constant 0 : index
    %65 = vector.load %arg22[%c0_62, %c0_63, %c0_64] : memref<1x128x128xf32, #tpu.memory_space<vmem>>, vector<1x128x128xf32>
    %66 = vector.shape_cast %65 : vector<1x128x128xf32> to vector<128x128xf32>
    %c0_65 = arith.constant 0 : index
    %c0_66 = arith.constant 0 : index
    %c0_67 = arith.constant 0 : index
    %67 = vector.load %arg23[%c0_65, %c0_66, %c0_67] : memref<1x1x128xf32, #tpu.memory_space<vmem>>, vector<1x1x128xf32>
    %68 = vector.shape_cast %67 : vector<1x1x128xf32> to vector<1x128xf32>
    %c0_68 = arith.constant 0 : index
    %c0_69 = arith.constant 0 : index
    %c0_70 = arith.constant 0 : index
    %69 = vector.load %arg24[%c0_68, %c0_69, %c0_70] : memref<1x1x128xf32, #tpu.memory_space<vmem>>, vector<1x1x128xf32>
    %70 = vector.shape_cast %69 : vector<1x1x128xf32> to vector<1x128xf32>
    %c0_71 = arith.constant 0 : index
    %c0_72 = arith.constant 0 : index
    %c0_73 = arith.constant 0 : index
    %71 = vector.load %arg25[%c0_71, %c0_72, %c0_73] : memref<1x1x1xf32, #tpu.memory_space<vmem>>, vector<1x1x1xf32>
    %72 = vector.shape_cast %71 : vector<1x1x1xf32> to vector<1x1xf32>
    %c0_74 = arith.constant 0 : index
    %c0_75 = arith.constant 0 : index
    %73 = vector.load %arg4[%c0_74, %c0_75] : memref<64x1xf32, #tpu.memory_space<vmem>>, vector<64x1xf32>
    %cst = arith.constant 1.000000e+00 : f32
    %74 = vector.broadcast %cst : f32 to vector<64x1xf32>
    %75 = arith.subf %74, %73 : vector<64x1xf32>
    %76 = vector.shape_cast %75 : vector<64x1xf32> to vector<8x8x1xf32>
    %77 = vector.shape_cast %24 : vector<8x1xf32> to vector<1x8x1xf32>
    %78 = vector.shape_cast %26 : vector<8x1xf32> to vector<1x8x1xf32>
    %79 = vector.broadcast %77 : vector<1x8x1xf32> to vector<8x8x1xf32>
    %80 = arith.mulf %79, %76 : vector<8x8x1xf32>
    %cst_76 = arith.constant dense<0.000000e+00> : vector<8x1xf32>
    %81 = vector.multi_reduction <add>, %80, %cst_76 [1] : vector<8x8x1xf32> to vector<8x1xf32>
    %82 = vector.shape_cast %81 : vector<8x1xf32> to vector<8x1x1xf32>
    %83 = vector.broadcast %78 : vector<1x8x1xf32> to vector<8x8x1xf32>
    %84 = arith.mulf %83, %76 : vector<8x8x1xf32>
    %cst_77 = arith.constant dense<0.000000e+00> : vector<8x1xf32>
    %85 = vector.multi_reduction <add>, %84, %cst_77 [1] : vector<8x8x1xf32> to vector<8x1xf32>
    %86 = vector.shape_cast %85 : vector<8x1xf32> to vector<8x1x1xf32>
    %87 = vector.broadcast %82 : vector<8x1x1xf32> to vector<8x8x1xf32>
    %88 = vector.broadcast %77 : vector<1x8x1xf32> to vector<8x8x1xf32>
    %89 = arith.subf %87, %88 : vector<8x8x1xf32>
    %cst_78 = arith.constant 0.159154937 : f32
    %90 = vector.broadcast %cst_78 : f32 to vector<8x8x1xf32>
    %91 = arith.mulf %89, %90 : vector<8x8x1xf32>
    %92 = math.roundeven %91 : vector<8x8x1xf32>
    %cst_79 = arith.constant 6.28318548 : f32
    %93 = vector.broadcast %cst_79 : f32 to vector<8x8x1xf32>
    %94 = arith.mulf %93, %92 : vector<8x8x1xf32>
    %95 = arith.subf %89, %94 : vector<8x8x1xf32>
    %96 = arith.mulf %95, %95 : vector<8x8x1xf32>
    %97 = vector.shape_cast %32 : vector<1x128xf32> to vector<1x1x128xf32>
    %98 = vector.broadcast %86 : vector<8x1x1xf32> to vector<8x1x128xf32>
    %99 = vector.broadcast %97 : vector<1x1x128xf32> to vector<8x1x128xf32>
    %100 = arith.mulf %98, %99 : vector<8x1x128xf32>
    %101 = vector.shape_cast %34 : vector<1x128xf32> to vector<1x1x128xf32>
    %102 = vector.broadcast %78 : vector<1x8x1xf32> to vector<1x8x128xf32>
    %103 = vector.broadcast %101 : vector<1x1x128xf32> to vector<1x8x128xf32>
    %104 = arith.mulf %102, %103 : vector<1x8x128xf32>
    %105 = vector.broadcast %100 : vector<8x1x128xf32> to vector<8x8x128xf32>
    %106 = vector.broadcast %104 : vector<1x8x128xf32> to vector<8x8x128xf32>
    %107 = arith.addf %105, %106 : vector<8x8x128xf32>
    %108 = vector.shape_cast %36 : vector<1x128xf32> to vector<1x1x128xf32>
    %109 = vector.broadcast %96 : vector<8x8x1xf32> to vector<8x8x128xf32>
    %110 = vector.broadcast %108 : vector<1x1x128xf32> to vector<8x8x128xf32>
    %111 = arith.mulf %109, %110 : vector<8x8x128xf32>
    %112 = arith.addf %107, %111 : vector<8x8x128xf32>
    %113 = vector.shape_cast %38 : vector<1x128xf32> to vector<1x1x128xf32>
    %114 = vector.broadcast %113 : vector<1x1x128xf32> to vector<8x8x128xf32>
    %115 = arith.addf %112, %114 : vector<8x8x128xf32>
    %116 = arith.negf %115 : vector<8x8x128xf32>
    %117 = math.exp %116 : vector<8x8x128xf32>
    %cst_80 = arith.constant 1.000000e+00 : f32
    %118 = vector.broadcast %cst_80 : f32 to vector<8x8x128xf32>
    %119 = arith.addf %118, %117 : vector<8x8x128xf32>
    %120 = arith.divf %118, %119 : vector<8x8x128xf32>
    %121 = arith.mulf %115, %120 : vector<8x8x128xf32>
    %122 = vector.shape_cast %121 : vector<8x8x128xf32> to vector<64x128xf32>
    %cst_81 = arith.constant dense<0.000000e+00> : vector<64x128xf32>
    %123 = tpu.matmul %122, %40, %cst_81 {dimension_numbers = #tpu.dot_dimension_numbers<[1], [0], [0], [1], [0, 0, 1, 1], [], []>} : vector<64x128xf32>, vector<128x128xf32>, vector<64x128xf32> -> vector<64x128xf32>
    %124 = vector.broadcast %42 : vector<1x128xf32> to vector<64x128xf32>
    %125 = arith.addf %123, %124 : vector<64x128xf32>
    %126 = arith.negf %125 : vector<64x128xf32>
    %127 = math.exp %126 : vector<64x128xf32>
    %cst_82 = arith.constant 1.000000e+00 : f32
    %128 = vector.broadcast %cst_82 : f32 to vector<64x128xf32>
    %129 = arith.addf %128, %127 : vector<64x128xf32>
    %130 = arith.divf %128, %129 : vector<64x128xf32>
    %131 = arith.mulf %125, %130 : vector<64x128xf32>
    %132 = vector.broadcast %44 : vector<1x128xf32> to vector<64x128xf32>
    %133 = arith.mulf %131, %132 : vector<64x128xf32>
    %cst_83 = arith.constant dense<0.000000e+00> : vector<64xf32>
    %134 = vector.multi_reduction <add>, %133, %cst_83 [1] : vector<64x128xf32> to vector<64xf32>
    %135 = vector.shape_cast %134 : vector<64xf32> to vector<64x1xf32>
    %136 = vector.broadcast %46 : vector<1x1xf32> to vector<64x1xf32>
    %137 = arith.addf %135, %136 : vector<64x1xf32>
    %138 = arith.negf %137 : vector<64x1xf32>
    %139 = math.exp %138 : vector<64x1xf32>
    %cst_84 = arith.constant 1.000000e+00 : f32
    %140 = vector.broadcast %cst_84 : f32 to vector<64x1xf32>
    %141 = arith.addf %140, %139 : vector<64x1xf32>
    %142 = arith.divf %140, %141 : vector<64x1xf32>
    %143 = arith.mulf %142, %73 : vector<64x1xf32>
    %144 = vector.broadcast %143 : vector<64x1xf32> to vector<64x128xf32>
    %145 = arith.mulf %131, %144 : vector<64x128xf32>
    %cst_85 = arith.constant dense<0.000000e+00> : vector<64x128xf32>
    %146 = tpu.matmul %145, %48, %cst_85 {dimension_numbers = #tpu.dot_dimension_numbers<[1], [0], [0], [1], [0, 0, 1, 1], [], []>} : vector<64x128xf32>, vector<128x128xf32>, vector<64x128xf32> -> vector<64x128xf32>
    %147 = vector.broadcast %50 : vector<1x128xf32> to vector<64x128xf32>
    %148 = arith.addf %146, %147 : vector<64x128xf32>
    %149 = arith.negf %148 : vector<64x128xf32>
    %150 = math.exp %149 : vector<64x128xf32>
    %cst_86 = arith.constant 1.000000e+00 : f32
    %151 = vector.broadcast %cst_86 : f32 to vector<64x128xf32>
    %152 = arith.addf %151, %150 : vector<64x128xf32>
    %153 = arith.divf %151, %152 : vector<64x128xf32>
    %154 = arith.mulf %148, %153 : vector<64x128xf32>
    %cst_87 = arith.constant dense<0.000000e+00> : vector<64x128xf32>
    %155 = tpu.matmul %154, %52, %cst_87 {dimension_numbers = #tpu.dot_dimension_numbers<[1], [0], [0], [1], [0, 0, 1, 1], [], []>} : vector<64x128xf32>, vector<128x128xf32>, vector<64x128xf32> -> vector<64x128xf32>
    %156 = vector.broadcast %54 : vector<1x128xf32> to vector<64x128xf32>
    %157 = arith.addf %155, %156 : vector<64x128xf32>
    %158 = arith.negf %157 : vector<64x128xf32>
    %159 = math.exp %158 : vector<64x128xf32>
    %cst_88 = arith.constant 1.000000e+00 : f32
    %160 = vector.broadcast %cst_88 : f32 to vector<64x128xf32>
    %161 = arith.addf %160, %159 : vector<64x128xf32>
    %162 = arith.divf %160, %161 : vector<64x128xf32>
    %163 = arith.mulf %157, %162 : vector<64x128xf32>
    %164 = vector.broadcast %56 : vector<1x128xf32> to vector<64x128xf32>
    %165 = arith.mulf %163, %164 : vector<64x128xf32>
    %cst_89 = arith.constant dense<0.000000e+00> : vector<64xf32>
    %166 = vector.multi_reduction <add>, %165, %cst_89 [1] : vector<64x128xf32> to vector<64xf32>
    %167 = vector.shape_cast %166 : vector<64xf32> to vector<64x1xf32>
    %168 = vector.broadcast %58 : vector<1x1xf32> to vector<64x1xf32>
    %169 = arith.addf %167, %168 : vector<64x1xf32>
    %cst_90 = arith.constant 6.28318548 : f32
    %170 = vector.broadcast %cst_90 : f32 to vector<8x8x1xf32>
    %171 = arith.addf %96, %170 : vector<8x8x1xf32>
    %172 = tpu.reciprocal %171 : vector<8x8x1xf32> -> vector<8x8x1xf32>
    %173 = vector.shape_cast %169 : vector<64x1xf32> to vector<8x8x1xf32>
    %174 = arith.mulf %173, %95 : vector<8x8x1xf32>
    %175 = arith.mulf %174, %172 : vector<8x8x1xf32>
    %cst_91 = arith.constant dense<0.000000e+00> : vector<8x1xf32>
    %176 = vector.multi_reduction <add>, %175, %cst_91 [1] : vector<8x8x1xf32> to vector<8x1xf32>
    %177 = arith.addf %176, %28 : vector<8x1xf32>
    %178 = vector.shape_cast %145 : vector<64x128xf32> to vector<8x8x128xf32>
    %cst_92 = arith.constant dense<0.000000e+00> : vector<8x128xf32>
    %179 = vector.multi_reduction <add>, %178, %cst_92 [1] : vector<8x8x128xf32> to vector<8x128xf32>
    %180 = vector.broadcast %30 : vector<8x1xf32> to vector<8x128xf32>
    %181 = vector.broadcast %60 : vector<1x128xf32> to vector<8x128xf32>
    %182 = arith.mulf %180, %181 : vector<8x128xf32>
    %cst_93 = arith.constant dense<0.000000e+00> : vector<8x128xf32>
    %183 = tpu.matmul %179, %62, %cst_93 {dimension_numbers = #tpu.dot_dimension_numbers<[1], [0], [0], [1], [0, 0, 1, 1], [], []>} : vector<8x128xf32>, vector<128x128xf32>, vector<8x128xf32> -> vector<8x128xf32>
    %184 = arith.addf %182, %183 : vector<8x128xf32>
    %185 = vector.broadcast %64 : vector<1x128xf32> to vector<8x128xf32>
    %186 = arith.addf %184, %185 : vector<8x128xf32>
    %187 = arith.negf %186 : vector<8x128xf32>
    %188 = math.exp %187 : vector<8x128xf32>
    %cst_94 = arith.constant 1.000000e+00 : f32
    %189 = vector.broadcast %cst_94 : f32 to vector<8x128xf32>
    %190 = arith.addf %189, %188 : vector<8x128xf32>
    %191 = arith.divf %189, %190 : vector<8x128xf32>
    %192 = arith.mulf %186, %191 : vector<8x128xf32>
    %cst_95 = arith.constant dense<0.000000e+00> : vector<8x128xf32>
    %193 = tpu.matmul %192, %66, %cst_95 {dimension_numbers = #tpu.dot_dimension_numbers<[1], [0], [0], [1], [0, 0, 1, 1], [], []>} : vector<8x128xf32>, vector<128x128xf32>, vector<8x128xf32> -> vector<8x128xf32>
    %194 = vector.broadcast %68 : vector<1x128xf32> to vector<8x128xf32>
    %195 = arith.addf %193, %194 : vector<8x128xf32>
    %196 = arith.negf %195 : vector<8x128xf32>
    %197 = math.exp %196 : vector<8x128xf32>
    %cst_96 = arith.constant 1.000000e+00 : f32
    %198 = vector.broadcast %cst_96 : f32 to vector<8x128xf32>
    %199 = arith.addf %198, %197 : vector<8x128xf32>
    %200 = arith.divf %198, %199 : vector<8x128xf32>
    %201 = arith.mulf %195, %200 : vector<8x128xf32>
    %202 = vector.broadcast %70 : vector<1x128xf32> to vector<8x128xf32>
    %203 = arith.mulf %201, %202 : vector<8x128xf32>
    %cst_97 = arith.constant dense<0.000000e+00> : vector<8xf32>
    %204 = vector.multi_reduction <add>, %203, %cst_97 [1] : vector<8x128xf32> to vector<8xf32>
    %205 = vector.shape_cast %204 : vector<8xf32> to vector<8x1xf32>
    %206 = vector.broadcast %72 : vector<1x1xf32> to vector<8x1xf32>
    %207 = arith.addf %205, %206 : vector<8x1xf32>
    %208 = arith.addf %207, %30 : vector<8x1xf32>
    %209 = arith.index_cast %22 : i32 to index
    %c0_98 = arith.constant 0 : index
    %210 = vector.load %arg31[%209, %c0_98] : memref<32x1xf32, #tpu.memory_space<vmem>>, vector<8x1xf32>
    tpu.vector_store %arg31[%209, %c0_98], %208 {strides = array<i32>} : memref<32x1xf32, #tpu.memory_space<vmem>>, vector<8x1xf32>,
    %211 = arith.index_cast %22 : i32 to index
    %c0_99 = arith.constant 0 : index
    %212 = vector.load %arg32[%211, %c0_99] : memref<32x1xf32, #tpu.memory_space<vmem>>, vector<8x1xf32>
    tpu.vector_store %arg32[%211, %c0_99], %177 {strides = array<i32>} : memref<32x1xf32, #tpu.memory_space<vmem>>, vector<8x1xf32>,
    %c1_i32_100 = arith.constant 1 : i32
    %213 = arith.cmpi eq, %arg0, %c1_i32_100 : i32
    %c1_i32_101 = arith.constant 1 : i32
    %214 = arith.cmpi eq, %arg1, %c1_i32_101 : i32
    %c0_i32_102 = arith.constant 0 : i32
    %215 = arith.cmpi eq, %arg2, %c0_i32_102 : i32
    %216 = arith.andi %214, %215 : i1
    %217 = arith.andi %213, %216 : i1
    %218 = arith.extui %217 : i1 to i32
    %c0_i32_103 = arith.constant 0 : i32
    %219 = arith.cmpi ne, %218, %c0_i32_103 : i32
    scf.if %219 {
      %c16_i32_104 = arith.constant 16 : i32
      %220 = arith.muli %1, %c16_i32_104 : i32
      %221 = tpu.assume_multiple %220, 8 : i32
      %222 = arith.index_cast %221 : i32 to index
      %c0_105 = arith.constant 0 : index
      %223 = vector.load %arg31[%222, %c0_105] : memref<32x1xf32, #tpu.memory_space<vmem>>, vector<16x1xf32>
      %224 = vector.shape_cast %223 : vector<16x1xf32> to vector<2x8x1xf32>
      %cst_106 = arith.constant dense<0.000000e+00> : vector<2x1xf32>
      %225 = vector.multi_reduction <add>, %224, %cst_106 [1] : vector<2x8x1xf32> to vector<2x1xf32>
      %cst_107 = arith.constant 8.000000e+00 : f32
      %226 = vector.broadcast %cst_107 : f32 to vector<2x1xf32>
      %227 = arith.divf %225, %226 : vector<2x1xf32>
      %c0_108 = arith.constant 0 : index
      %c0_109 = arith.constant 0 : index
      %228 = vector.load %arg26[%c0_108, %c0_109] : memref<1x4xf32, #tpu.memory_space<vmem>>, vector<1x4xf32>
      %229 = vector.broadcast %227 : vector<2x1xf32> to vector<2x4xf32>
      %230 = vector.broadcast %228 : vector<1x4xf32> to vector<2x4xf32>
      %231 = arith.mulf %229, %230 : vector<2x4xf32>
      %c0_110 = arith.constant 0 : index
      %c0_111 = arith.constant 0 : index
      %232 = vector.load %arg27[%c0_110, %c0_111] : memref<1x4xf32, #tpu.memory_space<vmem>>, vector<1x4xf32>
      %233 = vector.broadcast %232 : vector<1x4xf32> to vector<2x4xf32>
      %234 = arith.addf %231, %233 : vector<2x4xf32>
      %cst_112 = arith.constant dense<0.000000e+00> : vector<2xf32>
      %235 = vector.multi_reduction <add>, %234, %cst_112 [1] : vector<2x4xf32> to vector<2xf32>
      %236 = vector.shape_cast %235 : vector<2xf32> to vector<2x1xf32>
      %cst_113 = arith.constant 4.000000e+00 : f32
      %237 = vector.broadcast %cst_113 : f32 to vector<2x1xf32>
      %238 = arith.divf %236, %237 : vector<2x1xf32>
      %239 = vector.broadcast %238 : vector<2x1xf32> to vector<2x4xf32>
      %240 = arith.subf %234, %239 : vector<2x4xf32>
      %241 = arith.mulf %240, %240 : vector<2x4xf32>
      %cst_114 = arith.constant dense<0.000000e+00> : vector<2xf32>
      %242 = vector.multi_reduction <add>, %241, %cst_114 [1] : vector<2x4xf32> to vector<2xf32>
      %243 = vector.shape_cast %242 : vector<2xf32> to vector<2x1xf32>
      %cst_115 = arith.constant 4.000000e+00 : f32
      %244 = vector.broadcast %cst_115 : f32 to vector<2x1xf32>
      %245 = arith.divf %243, %244 : vector<2x1xf32>
      %246 = vector.broadcast %238 : vector<2x1xf32> to vector<2x4xf32>
      %247 = arith.subf %234, %246 : vector<2x4xf32>
      %cst_116 = arith.constant 9.99999974E-6 : f32
      %248 = vector.broadcast %cst_116 : f32 to vector<2x1xf32>
      %249 = arith.addf %245, %248 : vector<2x1xf32>
      %250 = math.rsqrt %249 : vector<2x1xf32>
      %251 = vector.broadcast %250 : vector<2x1xf32> to vector<2x4xf32>
      %252 = arith.mulf %247, %251 : vector<2x4xf32>
      %c0_117 = arith.constant 0 : index
      %c0_118 = arith.constant 0 : index
      %253 = vector.load %arg28[%c0_117, %c0_118] : memref<1x4xf32, #tpu.memory_space<vmem>>, vector<1x4xf32>
      %254 = vector.broadcast %253 : vector<1x4xf32> to vector<2x4xf32>
      %255 = arith.mulf %252, %254 : vector<2x4xf32>
      %c0_119 = arith.constant 0 : index
      %c0_120 = arith.constant 0 : index
      %256 = vector.load %arg29[%c0_119, %c0_120] : memref<1x4xf32, #tpu.memory_space<vmem>>, vector<1x4xf32>
      %257 = vector.broadcast %256 : vector<1x4xf32> to vector<2x4xf32>
      %258 = arith.addf %255, %257 : vector<2x4xf32>
      %c0_121 = arith.constant 0 : index
      %c0_122 = arith.constant 0 : index
      %259 = vector.load %arg30[%c0_121, %c0_122] : memref<2x4xf32, #tpu.memory_space<vmem>>, vector<2x4xf32>
      tpu.vector_store %arg30[%c0_121, %c0_122], %258 {strides = array<i32>} : memref<2x4xf32, #tpu.memory_space<vmem>>, vector<2x4xf32>,
    } else {
    }
    return
  }
  func.func @transform_0(%arg0: i32, %arg1: i32, %arg2: i32) -> (i32, i32) {
    %c0_i32 = arith.constant 0 : i32
    %c0_i32_0 = arith.constant 0 : i32
    return %arg1, %c0_i32 : i32, i32
  }
  func.func @transform_1(%arg0: i32, %arg1: i32, %arg2: i32) -> (i32, i32) {
    %c0_i32 = arith.constant 0 : i32
    %c0_i32_0 = arith.constant 0 : i32
    return %arg2, %c0_i32 : i32, i32
  }
  func.func @transform_2(%arg0: i32, %arg1: i32, %arg2: i32) -> (i32, i32, i32) {
    %c0_i32 = arith.constant 0 : i32
    %c0_i32_0 = arith.constant 0 : i32
    %c0_i32_1 = arith.constant 0 : i32
    return %arg0, %c0_i32, %c0_i32_0 : i32, i32, i32
  }
  func.func @transform_3(%arg0: i32, %arg1: i32, %arg2: i32) -> (i32, i32, i32) {
    %c0_i32 = arith.constant 0 : i32
    %c0_i32_0 = arith.constant 0 : i32
    %c0_i32_1 = arith.constant 0 : i32
    return %arg0, %c0_i32, %c0_i32_0 : i32, i32, i32
  }
  func.func @transform_4(%arg0: i32, %arg1: i32, %arg2: i32) -> (i32, i32, i32) {
    %c0_i32 = arith.constant 0 : i32
    %c0_i32_0 = arith.constant 0 : i32
    %c0_i32_1 = arith.constant 0 : i32
    return %arg0, %c0_i32, %c0_i32_0 : i32, i32, i32
  }
  func.func @transform_5(%arg0: i32, %arg1: i32, %arg2: i32) -> (i32, i32, i32) {
    %c0_i32 = arith.constant 0 : i32
    %c0_i32_0 = arith.constant 0 : i32
    %c0_i32_1 = arith.constant 0 : i32
    return %arg0, %c0_i32, %c0_i32_0 : i32, i32, i32
  }
  func.func @transform_6(%arg0: i32, %arg1: i32, %arg2: i32) -> (i32, i32, i32) {
    %c0_i32 = arith.constant 0 : i32
    %c0_i32_0 = arith.constant 0 : i32
    %c0_i32_1 = arith.constant 0 : i32
    return %arg0, %c0_i32, %c0_i32_0 : i32, i32, i32
  }
  func.func @transform_7(%arg0: i32, %arg1: i32, %arg2: i32) -> (i32, i32, i32) {
    %c0_i32 = arith.constant 0 : i32
    %c0_i32_0 = arith.constant 0 : i32
    %c0_i32_1 = arith.constant 0 : i32
    return %arg0, %c0_i32, %c0_i32_0 : i32, i32, i32
  }
  func.func @transform_8(%arg0: i32, %arg1: i32, %arg2: i32) -> (i32, i32, i32) {
    %c0_i32 = arith.constant 0 : i32
    %c0_i32_0 = arith.constant 0 : i32
    %c0_i32_1 = arith.constant 0 : i32
    return %arg0, %c0_i32, %c0_i32_0 : i32, i32, i32
  }
  func.func @transform_9(%arg0: i32, %arg1: i32, %arg2: i32) -> (i32, i32, i32) {
    %c0_i32 = arith.constant 0 : i32
    %c0_i32_0 = arith.constant 0 : i32
    %c0_i32_1 = arith.constant 0 : i32
    return %arg0, %c0_i32, %c0_i32_0 : i32, i32, i32
  }
  func.func @transform_10(%arg0: i32, %arg1: i32, %arg2: i32) -> (i32, i32, i32) {
    %c0_i32 = arith.constant 0 : i32
    %c0_i32_0 = arith.constant 0 : i32
    %c0_i32_1 = arith.constant 0 : i32
    return %arg0, %c0_i32, %c0_i32_0 : i32, i32, i32
  }
  func.func @transform_11(%arg0: i32, %arg1: i32, %arg2: i32) -> (i32, i32, i32) {
    %c0_i32 = arith.constant 0 : i32
    %c0_i32_0 = arith.constant 0 : i32
    %c0_i32_1 = arith.constant 0 : i32
    return %arg0, %c0_i32, %c0_i32_0 : i32, i32, i32
  }
  func.func @transform_12(%arg0: i32, %arg1: i32, %arg2: i32) -> (i32, i32, i32) {
    %c0_i32 = arith.constant 0 : i32
    %c0_i32_0 = arith.constant 0 : i32
    %c0_i32_1 = arith.constant 0 : i32
    return %arg0, %c0_i32, %c0_i32_0 : i32, i32, i32
  }
  func.func @transform_13(%arg0: i32, %arg1: i32, %arg2: i32) -> (i32, i32, i32) {
    %c0_i32 = arith.constant 0 : i32
    %c0_i32_0 = arith.constant 0 : i32
    %c0_i32_1 = arith.constant 0 : i32
    return %arg0, %c0_i32, %c0_i32_0 : i32, i32, i32
  }
  func.func @transform_14(%arg0: i32, %arg1: i32, %arg2: i32) -> (i32, i32, i32) {
    %c0_i32 = arith.constant 0 : i32
    %c0_i32_0 = arith.constant 0 : i32
    %c0_i32_1 = arith.constant 0 : i32
    return %arg0, %c0_i32, %c0_i32_0 : i32, i32, i32
  }
  func.func @transform_15(%arg0: i32, %arg1: i32, %arg2: i32) -> (i32, i32, i32) {
    %c0_i32 = arith.constant 0 : i32
    %c0_i32_0 = arith.constant 0 : i32
    %c0_i32_1 = arith.constant 0 : i32
    return %arg0, %c0_i32, %c0_i32_0 : i32, i32, i32
  }
  func.func @transform_16(%arg0: i32, %arg1: i32, %arg2: i32) -> (i32, i32, i32) {
    %c0_i32 = arith.constant 0 : i32
    %c0_i32_0 = arith.constant 0 : i32
    %c0_i32_1 = arith.constant 0 : i32
    return %arg0, %c0_i32, %c0_i32_0 : i32, i32, i32
  }
  func.func @transform_17(%arg0: i32, %arg1: i32, %arg2: i32) -> (i32, i32, i32) {
    %c0_i32 = arith.constant 0 : i32
    %c0_i32_0 = arith.constant 0 : i32
    %c0_i32_1 = arith.constant 0 : i32
    return %arg0, %c0_i32, %c0_i32_0 : i32, i32, i32
  }
  func.func @transform_18(%arg0: i32, %arg1: i32, %arg2: i32) -> (i32, i32, i32) {
    %c0_i32 = arith.constant 0 : i32
    %c0_i32_0 = arith.constant 0 : i32
    %c0_i32_1 = arith.constant 0 : i32
    return %arg0, %c0_i32, %c0_i32_0 : i32, i32, i32
  }
  func.func @transform_19(%arg0: i32, %arg1: i32, %arg2: i32) -> (i32, i32, i32) {
    %c0_i32 = arith.constant 0 : i32
    %c0_i32_0 = arith.constant 0 : i32
    %c0_i32_1 = arith.constant 0 : i32
    return %arg0, %c0_i32, %c0_i32_0 : i32, i32, i32
  }
  func.func @transform_20(%arg0: i32, %arg1: i32, %arg2: i32) -> (i32, i32, i32) {
    %c0_i32 = arith.constant 0 : i32
    %c0_i32_0 = arith.constant 0 : i32
    %c0_i32_1 = arith.constant 0 : i32
    return %arg0, %c0_i32, %c0_i32_0 : i32, i32, i32
  }
  func.func @transform_21(%arg0: i32, %arg1: i32, %arg2: i32) -> (i32, i32, i32) {
    %c0_i32 = arith.constant 0 : i32
    %c0_i32_0 = arith.constant 0 : i32
    %c0_i32_1 = arith.constant 0 : i32
    return %arg0, %c0_i32, %c0_i32_0 : i32, i32, i32
  }
  func.func @transform_22(%arg0: i32, %arg1: i32, %arg2: i32) -> (i32, i32, i32) {
    %c0_i32 = arith.constant 0 : i32
    %c0_i32_0 = arith.constant 0 : i32
    %c0_i32_1 = arith.constant 0 : i32
    return %arg0, %c0_i32, %c0_i32_0 : i32, i32, i32
  }
  func.func @transform_23(%arg0: i32, %arg1: i32, %arg2: i32) -> (i32, i32) {
    %c0_i32 = arith.constant 0 : i32
    %c0_i32_0 = arith.constant 0 : i32
    %c0_i32_1 = arith.constant 0 : i32
    return %c0_i32, %c0_i32_0 : i32, i32
  }
  func.func @transform_24(%arg0: i32, %arg1: i32, %arg2: i32) -> (i32, i32) {
    %c0_i32 = arith.constant 0 : i32
    %c0_i32_0 = arith.constant 0 : i32
    %c0_i32_1 = arith.constant 0 : i32
    return %c0_i32, %c0_i32_0 : i32, i32
  }
  func.func @transform_25(%arg0: i32, %arg1: i32, %arg2: i32) -> (i32, i32) {
    %c0_i32 = arith.constant 0 : i32
    %c0_i32_0 = arith.constant 0 : i32
    %c0_i32_1 = arith.constant 0 : i32
    return %c0_i32, %c0_i32_0 : i32, i32
  }
  func.func @transform_26(%arg0: i32, %arg1: i32, %arg2: i32) -> (i32, i32) {
    %c0_i32 = arith.constant 0 : i32
    %c0_i32_0 = arith.constant 0 : i32
    %c0_i32_1 = arith.constant 0 : i32
    return %c0_i32, %c0_i32_0 : i32, i32
  }
  func.func @transform_27(%arg0: i32, %arg1: i32, %arg2: i32) -> (i32, i32) {
    %c0_i32 = arith.constant 0 : i32
    %c0_i32_0 = arith.constant 0 : i32
    %c0_i32_1 = arith.constant 0 : i32
    return %c0_i32, %c0_i32_0 : i32, i32
  }
}

</mosaic_0001>

<llo_original>
// kernel: tpu_custom_call.1
$region0: #{tpu_custom_call.1}
  #allocation0 [shape = 'u32[]', space=smem, size = 0x4, offset = 0x4, fixed_abs, tag = 'smem constant byte address 0x4 - core index']
  #allocation1 [shape = 'u32[144,128]{1,0:T(1,128)}', space=vmem, size = 0x12000, scoped, tag = 'internal scratch']
  #allocation2 [shape = 'f32[32,1]{1,0:T(8,128)}', space=vmem, size = 0x4000, scoped, tag = 'scratch operand']
  #allocation3 [shape = 'f32[32,1]{1,0:T(8,128)}', space=vmem, size = 0x4000, scoped, tag = 'scratch operand']
  %s0 = inlined_call_operand.vmem [shape: f32[16,1], index: 0, kind: input, shape index: {}]
  %s1 = inlined_call_operand.vmem [shape: f32[64,1], index: 1, kind: input, shape index: {}]
  %s2 = inlined_call_operand.vmem [shape: f32[2,1,128], index: 2, kind: input, shape index: {}]
  %s3 = inlined_call_operand.vmem [shape: f32[2,1,128], index: 3, kind: input, shape index: {}]
  %s4 = inlined_call_operand.vmem [shape: f32[2,1,128], index: 4, kind: input, shape index: {}]
  %s5 = inlined_call_operand.vmem [shape: f32[2,1,128], index: 5, kind: input, shape index: {}]
  %s6 = inlined_call_operand.hbm [shape: f32[2,128,128], index: 6, kind: input, shape index: {}]
  %s7 = inlined_call_operand.vmem [shape: f32[2,1,128], index: 7, kind: input, shape index: {}]
  %s8 = inlined_call_operand.vmem [shape: f32[2,1,128], index: 8, kind: input, shape index: {}]
  %s9 = inlined_call_operand.vmem [shape: f32[2,1,1], index: 9, kind: input, shape index: {}]
  %s10 = inlined_call_operand.hbm [shape: f32[2,128,128], index: 10, kind: input, shape index: {}]
  %s11 = inlined_call_operand.vmem [shape: f32[2,1,128], index: 11, kind: input, shape index: {}]
  %s12 = inlined_call_operand.hbm [shape: f32[2,128,128], index: 12, kind: input, shape index: {}]
  %s13 = inlined_call_operand.vmem [shape: f32[2,1,128], index: 13, kind: input, shape index: {}]
  %s14 = inlined_call_operand.vmem [shape: f32[2,1,128], index: 14, kind: input, shape index: {}]
  %s15 = inlined_call_operand.vmem [shape: f32[2,1,1], index: 15, kind: input, shape index: {}]
  %s16 = inlined_call_operand.vmem [shape: f32[2,1,128], index: 16, kind: input, shape index: {}]
  %s17 = inlined_call_operand.hbm [shape: f32[2,128,128], index: 17, kind: input, shape index: {}]
  %s18 = inlined_call_operand.vmem [shape: f32[2,1,128], index: 18, kind: input, shape index: {}]
  %s19 = inlined_call_operand.hbm [shape: f32[2,128,128], index: 19, kind: input, shape index: {}]
  %s20 = inlined_call_operand.vmem [shape: f32[2,1,128], index: 20, kind: input, shape index: {}]
  %s21 = inlined_call_operand.vmem [shape: f32[2,1,128], index: 21, kind: input, shape index: {}]
  %s22 = inlined_call_operand.vmem [shape: f32[2,1,1], index: 22, kind: input, shape index: {}]
  %s23 = inlined_call_operand.vmem [shape: f32[1,4], index: 23, kind: input, shape index: {}]
  %s24 = inlined_call_operand.vmem [shape: f32[1,4], index: 24, kind: input, shape index: {}]
  %s25 = inlined_call_operand.vmem [shape: f32[1,4], index: 25, kind: input, shape index: {}]
  %s26 = inlined_call_operand.vmem [shape: f32[1,4], index: 26, kind: input, shape index: {}]
  %s27 = inlined_call_operand.hbm [shape: f32[2,4], index: 27, kind: output, shape index: {}]
  %s28 = sld [smem:[#allocation0]]
  $region169: #{tpu_custom_call.1} parent=0
    _
  %s30 = ssub.s32 1, %s28
  %s31 = scalar_select 0, %s30, %s28
  $region1: #{tpu_custom_call.1} parent=0
    #allocation4 [shape = 'u8[131072]{0}', space=vmem, size = 0x20000, scoped, tag = 'input window, operand 6']
    #allocation5 [shape = 's32[2]{0}', space=sflag, size = 0x8, scoped, tag = 'scoped memory for tpu_custom_call.1']
    #allocation6 [shape = 's32[2]{0}', space=sflag, size = 0x8, scoped, tag = 'scoped memory for tpu_custom_call.1']
    #allocation7 [shape = 'u8[131072]{0}', space=vmem, size = 0x20000, scoped, tag = 'input window, operand 10']
    #allocation8 [shape = 's32[2]{0}', space=sflag, size = 0x8, scoped, tag = 'scoped memory for tpu_custom_call.1']
    #allocation9 [shape = 'u8[131072]{0}', space=vmem, size = 0x20000, scoped, tag = 'input window, operand 12']
    #allocation10 [shape = 'u8[131072]{0}', space=vmem, size = 0x20000, scoped, tag = 'input window, operand 17']
    #allocation11 [shape = 's32[2]{0}', space=sflag, size = 0x8, scoped, tag = 'scoped memory for tpu_custom_call.1']
    #allocation12 [shape = 'u8[131072]{0}', space=vmem, size = 0x20000, scoped, tag = 'input window, operand 19']
    #allocation13 [shape = 'u8[1024]{0}', space=vmem, size = 0x400, scoped, tag = 'output window, operand 0, single buffered']
    %32 = vsyncpa [#allocation5], 0
    %s33 = scalar_lea.sflag [#allocation5], 1
    %34 = vsyncpa %s33, 0
    %35 = vsyncpa [#allocation8], 0
    %s36 = scalar_lea.sflag [#allocation8], 1
    %37 = vsyncpa %s36, 0
    %38 = vsyncpa [#allocation11], 0
    %s39 = scalar_lea.sflag [#allocation11], 1
    %40 = vsyncpa %s39, 0
    %41 = vsyncpa [#allocation6], 0
    loop: start=0, step=1, limit=6
    $region2: #{tpu_custom_call.1} parent=1 // loop_pre_header
      _
    $region3: #{tpu_custom_call.1} parent=1 // loop_header
      %s43 = sphi 0, %s47
      %p44 = scmp.ge.s32.totalorder %s43, 6
      %s50 = sphi 0, %s69
      %s51 = sphi 0, %s65
      %s52 = sphi 0, %s61
      %s53 = sphi 0, %s50
      %s54 = sphi 0, %s51
      %s55 = sphi 0, %s52
      %s56 = sphi 0, %s53
      %s57 = sphi 0, %s54
      %s58 = sphi 0, %s55
      %s72 = sphi 0, %s74
      %s75 = sphi 0, %s72
      %s76 = sphi 0, %s75
      %s92 = sphi 0, %s76
      %s98 = sphi 0, %s100
      %s101 = sphi 0, %s98
      %s102 = sphi 0, %s101
      %s118 = sphi 0, %s102
      %s124 = sphi 0, %s126
      %s127 = sphi 0, %s124
      %s128 = sphi 0, %s127
      %s144 = sphi 0, %s128
      %s150 = sphi 0, %s152
      %s153 = sphi 0, %s150
      %s154 = sphi 0, %s153
      %s170 = sphi 0, %s154
      %s176 = sphi 0, %s178
      %s179 = sphi 0, %s176
      %s180 = sphi 0, %s179
      %s196 = sphi 0, %s180
      %s202 = sphi 0, %s204
      %s205 = sphi 0, %s202
      %s206 = sphi 0, %s205
      %s222 = sphi 0, %s206
      %s228 = sphi 0, %s230
      %s231 = sphi 0, %s228
      %s232 = sphi 0, %s231
      %s248 = sphi 0, %s232
      %s254 = sphi 0, %s256
      %s257 = sphi 0, %s254
      %s258 = sphi 0, %s257
      %s274 = sphi 0, %s258
      %s280 = sphi 0, %s282
      %s283 = sphi 0, %s280
      %s284 = sphi 0, %s283
      %s300 = sphi 0, %s284
      %s306 = sphi 0, %s308
      %s309 = sphi 0, %s306
      %s310 = sphi 0, %s309
      %s326 = sphi 0, %s310
      %s332 = sphi 0, %s334
      %s335 = sphi 0, %s332
      %s336 = sphi 0, %s335
      %s352 = sphi 0, %s336
      %s358 = sphi 0, %s360
      %s361 = sphi 0, %s358
      %s362 = sphi 0, %s361
      %s378 = sphi 0, %s362
      %s384 = sphi 0, %s386
      %s387 = sphi 0, %s384
      %s388 = sphi 0, %s387
      %s404 = sphi 0, %s388
      %s410 = sphi 0, %s412
      %s413 = sphi 0, %s410
      %s414 = sphi 0, %s413
      %s430 = sphi 0, %s414
      %s436 = sphi 0, %s438
      %s439 = sphi 0, %s436
      %s440 = sphi 0, %s439
      %s456 = sphi 0, %s440
      %s462 = sphi 0, %s464
      %s465 = sphi 0, %s462
      %s466 = sphi 0, %s465
      %s482 = sphi 0, %s466
      %s488 = sphi 0, %s490
      %s491 = sphi 0, %s488
      %s492 = sphi 0, %s491
      %s508 = sphi 0, %s492
      %s514 = sphi 0, %s516
      %s517 = sphi 0, %s514
      %s518 = sphi 0, %s517
      %s534 = sphi 0, %s518
      %s540 = sphi 0, %s542
      %s543 = sphi 0, %s540
      %s544 = sphi 0, %s543
      %s560 = sphi 0, %s544
      %s566 = sphi 0, %s568
      %s569 = sphi 0, %s566
      %s570 = sphi 0, %s569
      %s586 = sphi 0, %s570
      %s592 = sphi 0, %s594
      %s595 = sphi 0, %s592
      %s596 = sphi 0, %s595
      %s612 = sphi 0, %s596
      %s618 = sphi 0, %s620
      %s621 = sphi 0, %s618
      %s622 = sphi 0, %s621
      %s638 = sphi 0, %s622
      %s644 = sphi 0, %s646
      %s647 = sphi 0, %s644
      %s648 = sphi 0, %s647
      %s664 = sphi 0, %s648
      %s668 = sphi 0, %s668
      %s670 = sphi 0, %s668
      %s671 = sphi 0, %s670
      %s685 = sphi 0, %s671
      %s689 = sphi 0, %s689
      %s691 = sphi 0, %s689
      %s692 = sphi 0, %s691
      %s706 = sphi 0, %s692
      %s710 = sphi 0, %s710
      %s712 = sphi 0, %s710
      %s713 = sphi 0, %s712
      %s727 = sphi 0, %s713
      %s731 = sphi 0, %s731
      %s733 = sphi 0, %s731
      %s734 = sphi 0, %s733
      %s748 = sphi 0, %s734
      %s752 = sphi 0, %s752
      %s754 = sphi 0, %s752
      %s755 = sphi 0, %s754
      %s769 = sphi 0, %s755
    $region4: #{tpu_custom_call.1} parent=1 // loop_header_branch
      %46 = sbr.rel (%p44) target = $region8
    $region5: #{tpu_custom_call.1} parent=1 // loop_body
      %s48 = ssub.s32 %s43, 1
      %s49 = ssub.s32 %s43, 2
      %s59 = sadd.s32 1, %s52
      %p60 = scmp.ge.s32.totalorder %s59, 1
      %s61 = scalar_select %p60, 0, %s59
      %s62 = sadd.s32 1, %s51
      %s63 = scalar_select %p60, %s62, %s51
      %p64 = scmp.ge.s32.totalorder %s63, 2
      %s65 = scalar_select %p64, 0, %s63
      %s66 = sadd.s32 1, %s50
      %s67 = scalar_select %p64, %s66, %s50
      %p68 = scmp.ge.s32.totalorder %s67, 2
      %s69 = scalar_select %p68, 0, %s67
      %s70 = ssub.s32 %s51, %s65
      %p71 = scmp.eq.s32.totalorder %s70, 0
      %s73 = sadd.s32 %s72, 1
      %s74 = scalar_select %p71, %s72, %s73
      %p77 = pneg %p71
      %p78 = scmp.eq.s32.totalorder %s43, 3
      %p79 = por %p77, %p78
      %p80 = scmp.ne.s32.totalorder %s72, %s75
      %p81 = scmp.eq.s32.totalorder %s43, 0
      %p82 = por %p80, %p81
      %p83 = scmp.ne.s32.totalorder %s72, %s75
      %p84 = scmp.eq.s32.totalorder %s48, 3
      %p85 = por %p83, %p84
      %p86 = scmp.ne.s32.totalorder %s75, %s76
      %p87 = scmp.eq.s32.totalorder %s48, 0
      %p88 = por %p86, %p87
      %p89 = scmp.ne.s32.totalorder %s75, %s76
      %p90 = scmp.eq.s32.totalorder %s49, 3
      %p91 = por %p89, %p90
      %p93 = scmp.ne.s32.totalorder %s76, %s92
      %p94 = scmp.eq.s32.totalorder %s49, 0
      %p95 = por %p93, %p94
      %s96 = ssub.s32 %s52, %s61
      %p97 = scmp.eq.s32.totalorder %s96, 0
      %s99 = sadd.s32 %s98, 1
      %s100 = scalar_select %p97, %s98, %s99
      %p103 = pneg %p97
      %p104 = scmp.eq.s32.totalorder %s43, 3
      %p105 = por %p103, %p104
      %p106 = scmp.ne.s32.totalorder %s98, %s101
      %p107 = scmp.eq.s32.totalorder %s43, 0
      %p108 = por %p106, %p107
      %p109 = scmp.ne.s32.totalorder %s98, %s101
      %p110 = scmp.eq.s32.totalorder %s48, 3
      %p111 = por %p109, %p110
      %p112 = scmp.ne.s32.totalorder %s101, %s102
      %p113 = scmp.eq.s32.totalorder %s48, 0
      %p114 = por %p112, %p113
      %p115 = scmp.ne.s32.totalorder %s101, %s102
      %p116 = scmp.eq.s32.totalorder %s49, 3
      %p117 = por %p115, %p116
      %p119 = scmp.ne.s32.totalorder %s102, %s118
      %p120 = scmp.eq.s32.totalorder %s49, 0
      %p121 = por %p119, %p120
      %s122 = ssub.s32 %s50, %s69
      %p123 = scmp.eq.s32.totalorder %s122, 0
      %s125 = sadd.s32 %s124, 1
      %s126 = scalar_select %p123, %s124, %s125
      %p129 = pneg %p123
      %p130 = scmp.eq.s32.totalorder %s43, 3
      %p131 = por %p129, %p130
      %p132 = scmp.ne.s32.totalorder %s124, %s127
      %p133 = scmp.eq.s32.totalorder %s43, 0
      %p134 = por %p132, %p133
      %p135 = scmp.ne.s32.totalorder %s124, %s127
      %p136 = scmp.eq.s32.totalorder %s48, 3
      %p137 = por %p135, %p136
      %p138 = scmp.ne.s32.totalorder %s127, %s128
      %p139 = scmp.eq.s32.totalorder %s48, 0
      %p140 = por %p138, %p139
      %p141 = scmp.ne.s32.totalorder %s127, %s128
      %p142 = scmp.eq.s32.totalorder %s49, 3
      %p143 = por %p141, %p142
      %p145 = scmp.ne.s32.totalorder %s128, %s144
      %p146 = scmp.eq.s32.totalorder %s49, 0
      %p147 = por %p145, %p146
      %s148 = ssub.s32 %s50, %s69
      %p149 = scmp.eq.s32.totalorder %s148, 0
      %s151 = sadd.s32 %s150, 1
      %s152 = scalar_select %p149, %s150, %s151
      %p155 = pneg %p149
      %p156 = scmp.eq.s32.totalorder %s43, 3
      %p157 = por %p155, %p156
      %p158 = scmp.ne.s32.totalorder %s150, %s153
      %p159 = scmp.eq.s32.totalorder %s43, 0
      %p160 = por %p158, %p159
      %p161 = scmp.ne.s32.totalorder %s150, %s153
      %p162 = scmp.eq.s32.totalorder %s48, 3
      %p163 = por %p161, %p162
      %p164 = scmp.ne.s32.totalorder %s153, %s154
      %p165 = scmp.eq.s32.totalorder %s48, 0
      %p166 = por %p164, %p165
      %p167 = scmp.ne.s32.totalorder %s153, %s154
      %p168 = scmp.eq.s32.totalorder %s49, 3
      %p169 = por %p167, %p168
      %p171 = scmp.ne.s32.totalorder %s154, %s170
      %p172 = scmp.eq.s32.totalorder %s49, 0
      %p173 = por %p171, %p172
      %s174 = ssub.s32 %s50, %s69
      %p175 = scmp.eq.s32.totalorder %s174, 0
      %s177 = sadd.s32 %s176, 1
      %s178 = scalar_select %p175, %s176, %s177
      %p181 = pneg %p175
      %p182 = scmp.eq.s32.totalorder %s43, 3
      %p183 = por %p181, %p182
      %p184 = scmp.ne.s32.totalorder %s176, %s179
      %p185 = scmp.eq.s32.totalorder %s43, 0
      %p186 = por %p184, %p185
      %p187 = scmp.ne.s32.totalorder %s176, %s179
      %p188 = scmp.eq.s32.totalorder %s48, 3
      %p189 = por %p187, %p188
      %p190 = scmp.ne.s32.totalorder %s179, %s180
      %p191 = scmp.eq.s32.totalorder %s48, 0
      %p192 = por %p190, %p191
      %p193 = scmp.ne.s32.totalorder %s179, %s180
      %p194 = scmp.eq.s32.totalorder %s49, 3
      %p195 = por %p193, %p194
      %p197 = scmp.ne.s32.totalorder %s180, %s196
      %p198 = scmp.eq.s32.totalorder %s49, 0
      %p199 = por %p197, %p198
      %s200 = ssub.s32 %s50, %s69
      %p201 = scmp.eq.s32.totalorder %s200, 0
      %s203 = sadd.s32 %s202, 1
      %s204 = scalar_select %p201, %s202, %s203
      %p207 = pneg %p201
      %p208 = scmp.eq.s32.totalorder %s43, 3
      %p209 = por %p207, %p208
      %p210 = scmp.ne.s32.totalorder %s202, %s205
      %p211 = scmp.eq.s32.totalorder %s43, 0
      %p212 = por %p210, %p211
      %p213 = scmp.ne.s32.totalorder %s202, %s205
      %p214 = scmp.eq.s32.totalorder %s48, 3
      %p215 = por %p213, %p214
      %p216 = scmp.ne.s32.totalorder %s205, %s206
      %p217 = scmp.eq.s32.totalorder %s48, 0
      %p218 = por %p216, %p217
      %p219 = scmp.ne.s32.totalorder %s205, %s206
      %p220 = scmp.eq.s32.totalorder %s49, 3
      %p221 = por %p219, %p220
      %p223 = scmp.ne.s32.totalorder %s206, %s222
      %p224 = scmp.eq.s32.totalorder %s49, 0
      %p225 = por %p223, %p224
      %s226 = ssub.s32 %s50, %s69
      %p227 = scmp.eq.s32.totalorder %s226, 0
      %s229 = sadd.s32 %s228, 1
      %s230 = scalar_select %p227, %s228, %s229
      %p233 = pneg %p227
      %p234 = scmp.eq.s32.totalorder %s43, 3
      %p235 = por %p233, %p234
      %p236 = scmp.ne.s32.totalorder %s228, %s231
      %p237 = scmp.eq.s32.totalorder %s43, 0
      %p238 = por %p236, %p237
      %p239 = scmp.ne.s32.totalorder %s228, %s231
      %p240 = scmp.eq.s32.totalorder %s48, 3
      %p241 = por %p239, %p240
      %p242 = scmp.ne.s32.totalorder %s231, %s232
      %p243 = scmp.eq.s32.totalorder %s48, 0
      %p244 = por %p242, %p243
      %p245 = scmp.ne.s32.totalorder %s231, %s232
      %p246 = scmp.eq.s32.totalorder %s49, 3
      %p247 = por %p245, %p246
      %p249 = scmp.ne.s32.totalorder %s232, %s248
      %p250 = scmp.eq.s32.totalorder %s49, 0
      %p251 = por %p249, %p250
      %s252 = ssub.s32 %s50, %s69
      %p253 = scmp.eq.s32.totalorder %s252, 0
      %s255 = sadd.s32 %s254, 1
      %s256 = scalar_select %p253, %s254, %s255
      %p259 = pneg %p253
      %p260 = scmp.eq.s32.totalorder %s43, 3
      %p261 = por %p259, %p260
      %p262 = scmp.ne.s32.totalorder %s254, %s257
      %p263 = scmp.eq.s32.totalorder %s43, 0
      %p264 = por %p262, %p263
      %p265 = scmp.ne.s32.totalorder %s254, %s257
      %p266 = scmp.eq.s32.totalorder %s48, 3
      %p267 = por %p265, %p266
      %p268 = scmp.ne.s32.totalorder %s257, %s258
      %p269 = scmp.eq.s32.totalorder %s48, 0
      %p270 = por %p268, %p269
      %p271 = scmp.ne.s32.totalorder %s257, %s258
      %p272 = scmp.eq.s32.totalorder %s49, 3
      %p273 = por %p271, %p272
      %p275 = scmp.ne.s32.totalorder %s258, %s274
      %p276 = scmp.eq.s32.totalorder %s49, 0
      %p277 = por %p275, %p276
      %s278 = ssub.s32 %s50, %s69
      %p279 = scmp.eq.s32.totalorder %s278, 0
      %s281 = sadd.s32 %s280, 1
      %s282 = scalar_select %p279, %s280, %s281
      %p285 = pneg %p279
      %p286 = scmp.eq.s32.totalorder %s43, 3
      %p287 = por %p285, %p286
      %p288 = scmp.ne.s32.totalorder %s280, %s283
      %p289 = scmp.eq.s32.totalorder %s43, 0
      %p290 = por %p288, %p289
      %p291 = scmp.ne.s32.totalorder %s280, %s283
      %p292 = scmp.eq.s32.totalorder %s48, 3
      %p293 = por %p291, %p292
      %p294 = scmp.ne.s32.totalorder %s283, %s284
      %p295 = scmp.eq.s32.totalorder %s48, 0
      %p296 = por %p294, %p295
      %p297 = scmp.ne.s32.totalorder %s283, %s284
      %p298 = scmp.eq.s32.totalorder %s49, 3
      %p299 = por %p297, %p298
      %p301 = scmp.ne.s32.totalorder %s284, %s300
      %p302 = scmp.eq.s32.totalorder %s49, 0
      %p303 = por %p301, %p302
      %s304 = ssub.s32 %s50, %s69
      %p305 = scmp.eq.s32.totalorder %s304, 0
      %s307 = sadd.s32 %s306, 1
      %s308 = scalar_select %p305, %s306, %s307
      %p311 = pneg %p305
      %p312 = scmp.eq.s32.totalorder %s43, 3
      %p313 = por %p311, %p312
      %p314 = scmp.ne.s32.totalorder %s306, %s309
      %p315 = scmp.eq.s32.totalorder %s43, 0
      %p316 = por %p314, %p315
      %p317 = scmp.ne.s32.totalorder %s306, %s309
      %p318 = scmp.eq.s32.totalorder %s48, 3
      %p319 = por %p317, %p318
      %p320 = scmp.ne.s32.totalorder %s309, %s310
      %p321 = scmp.eq.s32.totalorder %s48, 0
      %p322 = por %p320, %p321
      %p323 = scmp.ne.s32.totalorder %s309, %s310
      %p324 = scmp.eq.s32.totalorder %s49, 3
      %p325 = por %p323, %p324
      %p327 = scmp.ne.s32.totalorder %s310, %s326
      %p328 = scmp.eq.s32.totalorder %s49, 0
      %p329 = por %p327, %p328
      %s330 = ssub.s32 %s50, %s69
      %p331 = scmp.eq.s32.totalorder %s330, 0
      %s333 = sadd.s32 %s332, 1
      %s334 = scalar_select %p331, %s332, %s333
      %p337 = pneg %p331
      %p338 = scmp.eq.s32.totalorder %s43, 3
      %p339 = por %p337, %p338
      %p340 = scmp.ne.s32.totalorder %s332, %s335
      %p341 = scmp.eq.s32.totalorder %s43, 0
      %p342 = por %p340, %p341
      %p343 = scmp.ne.s32.totalorder %s332, %s335
      %p344 = scmp.eq.s32.totalorder %s48, 3
      %p345 = por %p343, %p344
      %p346 = scmp.ne.s32.totalorder %s335, %s336
      %p347 = scmp.eq.s32.totalorder %s48, 0
      %p348 = por %p346, %p347
      %p349 = scmp.ne.s32.totalorder %s335, %s336
      %p350 = scmp.eq.s32.totalorder %s49, 3
      %p351 = por %p349, %p350
      %p353 = scmp.ne.s32.totalorder %s336, %s352
      %p354 = scmp.eq.s32.totalorder %s49, 0
      %p355 = por %p353, %p354
      %s356 = ssub.s32 %s50, %s69
      %p357 = scmp.eq.s32.totalorder %s356, 0
      %s359 = sadd.s32 %s358, 1
      %s360 = scalar_select %p357, %s358, %s359
      %p363 = pneg %p357
      %p364 = scmp.eq.s32.totalorder %s43, 3
      %p365 = por %p363, %p364
      %p366 = scmp.ne.s32.totalorder %s358, %s361
      %p367 = scmp.eq.s32.totalorder %s43, 0
      %p368 = por %p366, %p367
      %p369 = scmp.ne.s32.totalorder %s358, %s361
      %p370 = scmp.eq.s32.totalorder %s48, 3
      %p371 = por %p369, %p370
      %p372 = scmp.ne.s32.totalorder %s361, %s362
      %p373 = scmp.eq.s32.totalorder %s48, 0
      %p374 = por %p372, %p373
      %p375 = scmp.ne.s32.totalorder %s361, %s362
      %p376 = scmp.eq.s32.totalorder %s49, 3
      %p377 = por %p375, %p376
      %p379 = scmp.ne.s32.totalorder %s362, %s378
      %p380 = scmp.eq.s32.totalorder %s49, 0
      %p381 = por %p379, %p380
      %s382 = ssub.s32 %s50, %s69
      %p383 = scmp.eq.s32.totalorder %s382, 0
      %s385 = sadd.s32 %s384, 1
      %s386 = scalar_select %p383, %s384, %s385
      %p389 = pneg %p383
      %p390 = scmp.eq.s32.totalorder %s43, 3
      %p391 = por %p389, %p390
      %p392 = scmp.ne.s32.totalorder %s384, %s387
      %p393 = scmp.eq.s32.totalorder %s43, 0
      %p394 = por %p392, %p393
      %p395 = scmp.ne.s32.totalorder %s384, %s387
      %p396 = scmp.eq.s32.totalorder %s48, 3
      %p397 = por %p395, %p396
      %p398 = scmp.ne.s32.totalorder %s387, %s388
      %p399 = scmp.eq.s32.totalorder %s48, 0
      %p400 = por %p398, %p399
      %p401 = scmp.ne.s32.totalorder %s387, %s388
      %p402 = scmp.eq.s32.totalorder %s49, 3
      %p403 = por %p401, %p402
      %p405 = scmp.ne.s32.totalorder %s388, %s404
      %p406 = scmp.eq.s32.totalorder %s49, 0
      %p407 = por %p405, %p406
      %s408 = ssub.s32 %s50, %s69
      %p409 = scmp.eq.s32.totalorder %s408, 0
      %s411 = sadd.s32 %s410, 1
      %s412 = scalar_select %p409, %s410, %s411
      %p415 = pneg %p409
      %p416 = scmp.eq.s32.totalorder %s43, 3
      %p417 = por %p415, %p416
      %p418 = scmp.ne.s32.totalorder %s410, %s413
      %p419 = scmp.eq.s32.totalorder %s43, 0
      %p420 = por %p418, %p419
      %p421 = scmp.ne.s32.totalorder %s410, %s413
      %p422 = scmp.eq.s32.totalorder %s48, 3
      %p423 = por %p421, %p422
      %p424 = scmp.ne.s32.totalorder %s413, %s414
      %p425 = scmp.eq.s32.totalorder %s48, 0
      %p426 = por %p424, %p425
      %p427 = scmp.ne.s32.totalorder %s413, %s414
      %p428 = scmp.eq.s32.totalorder %s49, 3
      %p429 = por %p427, %p428
      %p431 = scmp.ne.s32.totalorder %s414, %s430
      %p432 = scmp.eq.s32.totalorder %s49, 0
      %p433 = por %p431, %p432
      %s434 = ssub.s32 %s50, %s69
      %p435 = scmp.eq.s32.totalorder %s434, 0
      %s437 = sadd.s32 %s436, 1
      %s438 = scalar_select %p435, %s436, %s437
      %p441 = pneg %p435
      %p442 = scmp.eq.s32.totalorder %s43, 3
      %p443 = por %p441, %p442
      %p444 = scmp.ne.s32.totalorder %s436, %s439
      %p445 = scmp.eq.s32.totalorder %s43, 0
      %p446 = por %p444, %p445
      %p447 = scmp.ne.s32.totalorder %s436, %s439
      %p448 = scmp.eq.s32.totalorder %s48, 3
      %p449 = por %p447, %p448
      %p450 = scmp.ne.s32.totalorder %s439, %s440
      %p451 = scmp.eq.s32.totalorder %s48, 0
      %p452 = por %p450, %p451
      %p453 = scmp.ne.s32.totalorder %s439, %s440
      %p454 = scmp.eq.s32.totalorder %s49, 3
      %p455 = por %p453, %p454
      %p457 = scmp.ne.s32.totalorder %s440, %s456
      %p458 = scmp.eq.s32.totalorder %s49, 0
      %p459 = por %p457, %p458
      %s460 = ssub.s32 %s50, %s69
      %p461 = scmp.eq.s32.totalorder %s460, 0
      %s463 = sadd.s32 %s462, 1
      %s464 = scalar_select %p461, %s462, %s463
      %p467 = pneg %p461
      %p468 = scmp.eq.s32.totalorder %s43, 3
      %p469 = por %p467, %p468
      %p470 = scmp.ne.s32.totalorder %s462, %s465
      %p471 = scmp.eq.s32.totalorder %s43, 0
      %p472 = por %p470, %p471
      %p473 = scmp.ne.s32.totalorder %s462, %s465
      %p474 = scmp.eq.s32.totalorder %s48, 3
      %p475 = por %p473, %p474
      %p476 = scmp.ne.s32.totalorder %s465, %s466
      %p477 = scmp.eq.s32.totalorder %s48, 0
      %p478 = por %p476, %p477
      %p479 = scmp.ne.s32.totalorder %s465, %s466
      %p480 = scmp.eq.s32.totalorder %s49, 3
      %p481 = por %p479, %p480
      %p483 = scmp.ne.s32.totalorder %s466, %s482
      %p484 = scmp.eq.s32.totalorder %s49, 0
      %p485 = por %p483, %p484
      %s486 = ssub.s32 %s50, %s69
      %p487 = scmp.eq.s32.totalorder %s486, 0
      %s489 = sadd.s32 %s488, 1
      %s490 = scalar_select %p487, %s488, %s489
      %p493 = pneg %p487
      %p494 = scmp.eq.s32.totalorder %s43, 3
      %p495 = por %p493, %p494
      %p496 = scmp.ne.s32.totalorder %s488, %s491
      %p497 = scmp.eq.s32.totalorder %s43, 0
      %p498 = por %p496, %p497
      %p499 = scmp.ne.s32.totalorder %s488, %s491
      %p500 = scmp.eq.s32.totalorder %s48, 3
      %p501 = por %p499, %p500
      %p502 = scmp.ne.s32.totalorder %s491, %s492
      %p503 = scmp.eq.s32.totalorder %s48, 0
      %p504 = por %p502, %p503
      %p505 = scmp.ne.s32.totalorder %s491, %s492
      %p506 = scmp.eq.s32.totalorder %s49, 3
      %p507 = por %p505, %p506
      %p509 = scmp.ne.s32.totalorder %s492, %s508
      %p510 = scmp.eq.s32.totalorder %s49, 0
      %p511 = por %p509, %p510
      %s512 = ssub.s32 %s50, %s69
      %p513 = scmp.eq.s32.totalorder %s512, 0
      %s515 = sadd.s32 %s514, 1
      %s516 = scalar_select %p513, %s514, %s515
      %p519 = pneg %p513
      %p520 = scmp.eq.s32.totalorder %s43, 3
      %p521 = por %p519, %p520
      %p522 = scmp.ne.s32.totalorder %s514, %s517
      %p523 = scmp.eq.s32.totalorder %s43, 0
      %p524 = por %p522, %p523
      %p525 = scmp.ne.s32.totalorder %s514, %s517
      %p526 = scmp.eq.s32.totalorder %s48, 3
      %p527 = por %p525, %p526
      %p528 = scmp.ne.s32.totalorder %s517, %s518
      %p529 = scmp.eq.s32.totalorder %s48, 0
      %p530 = por %p528, %p529
      %p531 = scmp.ne.s32.totalorder %s517, %s518
      %p532 = scmp.eq.s32.totalorder %s49, 3
      %p533 = por %p531, %p532
      %p535 = scmp.ne.s32.totalorder %s518, %s534
      %p536 = scmp.eq.s32.totalorder %s49, 0
      %p537 = por %p535, %p536
      %s538 = ssub.s32 %s50, %s69
      %p539 = scmp.eq.s32.totalorder %s538, 0
      %s541 = sadd.s32 %s540, 1
      %s542 = scalar_select %p539, %s540, %s541
      %p545 = pneg %p539
      %p546 = scmp.eq.s32.totalorder %s43, 3
      %p547 = por %p545, %p546
      %p548 = scmp.ne.s32.totalorder %s540, %s543
      %p549 = scmp.eq.s32.totalorder %s43, 0
      %p550 = por %p548, %p549
      %p551 = scmp.ne.s32.totalorder %s540, %s543
      %p552 = scmp.eq.s32.totalorder %s48, 3
      %p553 = por %p551, %p552
      %p554 = scmp.ne.s32.totalorder %s543, %s544
      %p555 = scmp.eq.s32.totalorder %s48, 0
      %p556 = por %p554, %p555
      %p557 = scmp.ne.s32.totalorder %s543, %s544
      %p558 = scmp.eq.s32.totalorder %s49, 3
      %p559 = por %p557, %p558
      %p561 = scmp.ne.s32.totalorder %s544, %s560
      %p562 = scmp.eq.s32.totalorder %s49, 0
      %p563 = por %p561, %p562
      %s564 = ssub.s32 %s50, %s69
      %p565 = scmp.eq.s32.totalorder %s564, 0
      %s567 = sadd.s32 %s566, 1
      %s568 = scalar_select %p565, %s566, %s567
      %p571 = pneg %p565
      %p572 = scmp.eq.s32.totalorder %s43, 3
      %p573 = por %p571, %p572
      %p574 = scmp.ne.s32.totalorder %s566, %s569
      %p575 = scmp.eq.s32.totalorder %s43, 0
      %p576 = por %p574, %p575
      %p577 = scmp.ne.s32.totalorder %s566, %s569
      %p578 = scmp.eq.s32.totalorder %s48, 3
      %p579 = por %p577, %p578
      %p580 = scmp.ne.s32.totalorder %s569, %s570
      %p581 = scmp.eq.s32.totalorder %s48, 0
      %p582 = por %p580, %p581
      %p583 = scmp.ne.s32.totalorder %s569, %s570
      %p584 = scmp.eq.s32.totalorder %s49, 3
      %p585 = por %p583, %p584
      %p587 = scmp.ne.s32.totalorder %s570, %s586
      %p588 = scmp.eq.s32.totalorder %s49, 0
      %p589 = por %p587, %p588
      %s590 = ssub.s32 %s50, %s69
      %p591 = scmp.eq.s32.totalorder %s590, 0
      %s593 = sadd.s32 %s592, 1
      %s594 = scalar_select %p591, %s592, %s593
      %p597 = pneg %p591
      %p598 = scmp.eq.s32.totalorder %s43, 3
      %p599 = por %p597, %p598
      %p600 = scmp.ne.s32.totalorder %s592, %s595
      %p601 = scmp.eq.s32.totalorder %s43, 0
      %p602 = por %p600, %p601
      %p603 = scmp.ne.s32.totalorder %s592, %s595
      %p604 = scmp.eq.s32.totalorder %s48, 3
      %p605 = por %p603, %p604
      %p606 = scmp.ne.s32.totalorder %s595, %s596
      %p607 = scmp.eq.s32.totalorder %s48, 0
      %p608 = por %p606, %p607
      %p609 = scmp.ne.s32.totalorder %s595, %s596
      %p610 = scmp.eq.s32.totalorder %s49, 3
      %p611 = por %p609, %p610
      %p613 = scmp.ne.s32.totalorder %s596, %s612
      %p614 = scmp.eq.s32.totalorder %s49, 0
      %p615 = por %p613, %p614
      %s616 = ssub.s32 %s50, %s69
      %p617 = scmp.eq.s32.totalorder %s616, 0
      %s619 = sadd.s32 %s618, 1
      %s620 = scalar_select %p617, %s618, %s619
      %p623 = pneg %p617
      %p624 = scmp.eq.s32.totalorder %s43, 3
      %p625 = por %p623, %p624
      %p626 = scmp.ne.s32.totalorder %s618, %s621
      %p627 = scmp.eq.s32.totalorder %s43, 0
      %p628 = por %p626, %p627
      %p629 = scmp.ne.s32.totalorder %s618, %s621
      %p630 = scmp.eq.s32.totalorder %s48, 3
      %p631 = por %p629, %p630
      %p632 = scmp.ne.s32.totalorder %s621, %s622
      %p633 = scmp.eq.s32.totalorder %s48, 0
      %p634 = por %p632, %p633
      %p635 = scmp.ne.s32.totalorder %s621, %s622
      %p636 = scmp.eq.s32.totalorder %s49, 3
      %p637 = por %p635, %p636
      %p639 = scmp.ne.s32.totalorder %s622, %s638
      %p640 = scmp.eq.s32.totalorder %s49, 0
      %p641 = por %p639, %p640
      %s642 = ssub.s32 %s50, %s69
      %p643 = scmp.eq.s32.totalorder %s642, 0
      %s645 = sadd.s32 %s644, 1
      %s646 = scalar_select %p643, %s644, %s645
      %p649 = pneg %p643
      %p650 = scmp.eq.s32.totalorder %s43, 3
      %p651 = por %p649, %p650
      %p652 = scmp.ne.s32.totalorder %s644, %s647
      %p653 = scmp.eq.s32.totalorder %s43, 0
      %p654 = por %p652, %p653
      %p655 = scmp.ne.s32.totalorder %s644, %s647
      %p656 = scmp.eq.s32.totalorder %s48, 3
      %p657 = por %p655, %p656
      %p658 = scmp.ne.s32.totalorder %s647, %s648
      %p659 = scmp.eq.s32.totalorder %s48, 0
      %p660 = por %p658, %p659
      %p661 = scmp.ne.s32.totalorder %s647, %s648
      %p662 = scmp.eq.s32.totalorder %s49, 3
      %p663 = por %p661, %p662
      %p665 = scmp.ne.s32.totalorder %s648, %s664
      %p666 = scmp.eq.s32.totalorder %s49, 0
      %p667 = por %p665, %p666
      %s669 = sadd.s32 %s668, 1
      %p672 = scmp.eq.s32.totalorder %s43, 3
      %p673 = scmp.ne.s32.totalorder %s668, %s670
      %p674 = scmp.eq.s32.totalorder %s43, 0
      %p675 = por %p673, %p674
      %p676 = scmp.ne.s32.totalorder %s668, %s670
      %p677 = scmp.eq.s32.totalorder %s48, 3
      %p678 = por %p676, %p677
      %p679 = scmp.ne.s32.totalorder %s670, %s671
      %p680 = scmp.eq.s32.totalorder %s48, 0
      %p681 = por %p679, %p680
      %p682 = scmp.ne.s32.totalorder %s670, %s671
      %p683 = scmp.eq.s32.totalorder %s49, 3
      %p684 = por %p682, %p683
      %p686 = scmp.ne.s32.totalorder %s671, %s685
      %p687 = scmp.eq.s32.totalorder %s49, 0
      %p688 = por %p686, %p687
      %s690 = sadd.s32 %s689, 1
      %p693 = scmp.eq.s32.totalorder %s43, 3
      %p694 = scmp.ne.s32.totalorder %s689, %s691
      %p695 = scmp.eq.s32.totalorder %s43, 0
      %p696 = por %p694, %p695
      %p697 = scmp.ne.s32.totalorder %s689, %s691
      %p698 = scmp.eq.s32.totalorder %s48, 3
      %p699 = por %p697, %p698
      %p700 = scmp.ne.s32.totalorder %s691, %s692
      %p701 = scmp.eq.s32.totalorder %s48, 0
      %p702 = por %p700, %p701
      %p703 = scmp.ne.s32.totalorder %s691, %s692
      %p704 = scmp.eq.s32.totalorder %s49, 3
      %p705 = por %p703, %p704
      %p707 = scmp.ne.s32.totalorder %s692, %s706
      %p708 = scmp.eq.s32.totalorder %s49, 0
      %p709 = por %p707, %p708
      %s711 = sadd.s32 %s710, 1
      %p714 = scmp.eq.s32.totalorder %s43, 3
      %p715 = scmp.ne.s32.totalorder %s710, %s712
      %p716 = scmp.eq.s32.totalorder %s43, 0
      %p717 = por %p715, %p716
      %p718 = scmp.ne.s32.totalorder %s710, %s712
      %p719 = scmp.eq.s32.totalorder %s48, 3
      %p720 = por %p718, %p719
      %p721 = scmp.ne.s32.totalorder %s712, %s713
      %p722 = scmp.eq.s32.totalorder %s48, 0
      %p723 = por %p721, %p722
      %p724 = scmp.ne.s32.totalorder %s712, %s713
      %p725 = scmp.eq.s32.totalorder %s49, 3
      %p726 = por %p724, %p725
      %p728 = scmp.ne.s32.totalorder %s713, %s727
      %p729 = scmp.eq.s32.totalorder %s49, 0
      %p730 = por %p728, %p729
      %s732 = sadd.s32 %s731, 1
      %p735 = scmp.eq.s32.totalorder %s43, 3
      %p736 = scmp.ne.s32.totalorder %s731, %s733
      %p737 = scmp.eq.s32.totalorder %s43, 0
      %p738 = por %p736, %p737
      %p739 = scmp.ne.s32.totalorder %s731, %s733
      %p740 = scmp.eq.s32.totalorder %s48, 3
      %p741 = por %p739, %p740
      %p742 = scmp.ne.s32.totalorder %s733, %s734
      %p743 = scmp.eq.s32.totalorder %s48, 0
      %p744 = por %p742, %p743
      %p745 = scmp.ne.s32.totalorder %s733, %s734
      %p746 = scmp.eq.s32.totalorder %s49, 3
      %p747 = por %p745, %p746
      %p749 = scmp.ne.s32.totalorder %s734, %s748
      %p750 = scmp.eq.s32.totalorder %s49, 0
      %p751 = por %p749, %p750
      %s753 = sadd.s32 %s752, 1
      %p756 = scmp.eq.s32.totalorder %s43, 3
      %p757 = scmp.ne.s32.totalorder %s752, %s754
      %p758 = scmp.eq.s32.totalorder %s43, 0
      %p759 = por %p757, %p758
      %p760 = scmp.ne.s32.totalorder %s752, %s754
      %p761 = scmp.eq.s32.totalorder %s48, 3
      %p762 = por %p760, %p761
      %p763 = scmp.ne.s32.totalorder %s754, %s755
      %p764 = scmp.eq.s32.totalorder %s48, 0
      %p765 = por %p763, %p764
      %p766 = scmp.ne.s32.totalorder %s754, %s755
      %p767 = scmp.eq.s32.totalorder %s49, 3
      %p768 = por %p766, %p767
      %p770 = scmp.ne.s32.totalorder %s755, %s769
      %p771 = scmp.eq.s32.totalorder %s49, 0
      %p772 = por %p770, %p771
      %p773 = scmp.le.s32.totalorder 1, %s43
      %p774 = scmp.lt.s32.totalorder %s43, 5
      %p775 = pnand %p773, %p774
      %p776 = pneg %p775
      // Predicated region
      $region9: #{tpu_custom_call.1} parent=5 // pred_check
        _
      $region10: #{tpu_custom_call.1} parent=5 // pred_check_branch
        %778 = sbr.rel (%p775) target = $region12
      $region11: #{tpu_custom_call.1} parent=5 // pred_region
        %s779 = ssub.s32 %s43, 1
        // Predicated region
        $region13: #{tpu_custom_call.1} parent=11 // pred_check
          %p780 = pneg %p114
        $region14: #{tpu_custom_call.1} parent=11 // pred_check_branch
          %782 = sbr.rel (%p780) target = $region16
        $region15: #{tpu_custom_call.1} parent=11 // pred_region
          %s783 = smul.u32 8, %s55
          %p784 = scmp.lt.s32.totalorder %s783, 7
          %s785 = scalar_select %p784, %s783, 7
          %s786 = smul.addr %s785, 8
          %s787 = scalar_lea.vmem %s1, %s786
          %s788 = smul.u32 8, %s55
        $region16: #{tpu_custom_call.1} parent=11 // pred_fallthru
          _
        // Predicated region
        $region17: #{tpu_custom_call.1} parent=11 // pred_check
          %p789 = pneg %p681
        $region18: #{tpu_custom_call.1} parent=11 // pred_check_branch
          %791 = sbr.rel (%p789) target = $region20
        $region19: #{tpu_custom_call.1} parent=11 // pred_region
          _
        $region20: #{tpu_custom_call.1} parent=11 // pred_fallthru
          _
        // Predicated region
        $region21: #{tpu_custom_call.1} parent=11 // pred_check
          %p792 = pneg %p702
        $region22: #{tpu_custom_call.1} parent=11 // pred_check_branch
          %794 = sbr.rel (%p792) target = $region24
        $region23: #{tpu_custom_call.1} parent=11 // pred_region
          _
        $region24: #{tpu_custom_call.1} parent=11 // pred_fallthru
          _
        // Predicated region
        $region25: #{tpu_custom_call.1} parent=11 // pred_check
          %p795 = pneg %p723
        $region26: #{tpu_custom_call.1} parent=11 // pred_check_branch
          %797 = sbr.rel (%p795) target = $region28
        $region27: #{tpu_custom_call.1} parent=11 // pred_region
          _
        $region28: #{tpu_custom_call.1} parent=11 // pred_fallthru
          _
        // Predicated region
        $region29: #{tpu_custom_call.1} parent=11 // pred_check
          %p798 = pneg %p744
        $region30: #{tpu_custom_call.1} parent=11 // pred_check_branch
          %800 = sbr.rel (%p798) target = $region32
        $region31: #{tpu_custom_call.1} parent=11 // pred_region
          _
        $region32: #{tpu_custom_call.1} parent=11 // pred_fallthru
          _
      $region12: #{tpu_custom_call.1} parent=5 // pred_fallthru
        _
      %p801 = scmp.lt.s32.totalorder %s43, 4
      // Predicated region
      $region33: #{tpu_custom_call.1} parent=5 // pred_check
        %p802 = pneg %p801
      $region34: #{tpu_custom_call.1} parent=5 // pred_check_branch
        %804 = sbr.rel (%p802) target = $region36
      $region35: #{tpu_custom_call.1} parent=5 // pred_region
        // Predicated region
        $region37: #{tpu_custom_call.1} parent=35 // pred_check
          %p805 = pneg %p82
        $region38: #{tpu_custom_call.1} parent=35 // pred_check_branch
          %807 = sbr.rel (%p805) target = $region40
        $region39: #{tpu_custom_call.1} parent=35 // pred_region
          %p808 = scmp.lt.s32.totalorder %s51, 1
          %s809 = scalar_select %p808, %s51, 1
          %s810 = smul.addr %s809, 8
          %s811 = scalar_lea.vmem %s0, %s810
        $region40: #{tpu_custom_call.1} parent=35 // pred_fallthru
          _
        // Predicated region
        $region41: #{tpu_custom_call.1} parent=35 // pred_check
          %p812 = pneg %p134
        $region42: #{tpu_custom_call.1} parent=35 // pred_check_branch
          %814 = sbr.rel (%p812) target = $region44
        $region43: #{tpu_custom_call.1} parent=35 // pred_region
          %p815 = scmp.lt.s32.totalorder %s50, 1
          %s816 = scalar_select %p815, %s50, 1
          %s817 = scalar_lea.vmem %s2, %s816
        $region44: #{tpu_custom_call.1} parent=35 // pred_fallthru
          _
        // Predicated region
        $region45: #{tpu_custom_call.1} parent=35 // pred_check
          %p818 = pneg %p160
        $region46: #{tpu_custom_call.1} parent=35 // pred_check_branch
          %820 = sbr.rel (%p818) target = $region48
        $region47: #{tpu_custom_call.1} parent=35 // pred_region
          %p821 = scmp.lt.s32.totalorder %s50, 1
          %s822 = scalar_select %p821, %s50, 1
          %s823 = scalar_lea.vmem %s3, %s822
        $region48: #{tpu_custom_call.1} parent=35 // pred_fallthru
          _
        // Predicated region
        $region49: #{tpu_custom_call.1} parent=35 // pred_check
          %p824 = pneg %p186
        $region50: #{tpu_custom_call.1} parent=35 // pred_check_branch
          %826 = sbr.rel (%p824) target = $region52
        $region51: #{tpu_custom_call.1} parent=35 // pred_region
          %p827 = scmp.lt.s32.totalorder %s50, 1
          %s828 = scalar_select %p827, %s50, 1
          %s829 = scalar_lea.vmem %s4, %s828
        $region52: #{tpu_custom_call.1} parent=35 // pred_fallthru
          _
        // Predicated region
        $region53: #{tpu_custom_call.1} parent=35 // pred_check
          %p830 = pneg %p212
        $region54: #{tpu_custom_call.1} parent=35 // pred_check_branch
          %832 = sbr.rel (%p830) target = $region56
        $region55: #{tpu_custom_call.1} parent=35 // pred_region
          %p833 = scmp.lt.s32.totalorder %s50, 1
          %s834 = scalar_select %p833, %s50, 1
          %s835 = scalar_lea.vmem %s5, %s834
        $region56: #{tpu_custom_call.1} parent=35 // pred_fallthru
          _
        // Predicated region
        $region57: #{tpu_custom_call.1} parent=35 // pred_check
          %p836 = pneg %p238
        $region58: #{tpu_custom_call.1} parent=35 // pred_check_branch
          %838 = sbr.rel (%p836) target = $region60
        $region59: #{tpu_custom_call.1} parent=35 // pred_region
          %s839 = sand.u32 %s228, 1
          %s840 = scalar_lea.sflag [#allocation5], %s839
          %s841 = sand.u32 %s228, 1
          %s842 = smul.addr %s841, 128
          %s843 = scalar_lea.vmem [#allocation4], %s842
          %s845 = ssub.s32 2048, 2048
          %846 = vsyncadd %s840, %s845
          %s847 = smul.addr %s50, 16
          %s848 = smul.addr %s847, 128
          %s849 = scalar_lea.hbm %s6, %s848
          %s850 = sshll.u32 %s843, 4
          %s851 = int_to_ptr.vmem [resolvable:$true] %s850
          %856 = dma.hbm_to_vmem [thread:$0]  %s849, 2048, %s851, %s840, 128, 128, 8
        $region60: #{tpu_custom_call.1} parent=35 // pred_fallthru
          _
        // Predicated region
        $region61: #{tpu_custom_call.1} parent=35 // pred_check
          %p857 = pneg %p264
        $region62: #{tpu_custom_call.1} parent=35 // pred_check_branch
          %859 = sbr.rel (%p857) target = $region64
        $region63: #{tpu_custom_call.1} parent=35 // pred_region
          %p860 = scmp.lt.s32.totalorder %s50, 1
          %s861 = scalar_select %p860, %s50, 1
          %s862 = scalar_lea.vmem %s7, %s861
        $region64: #{tpu_custom_call.1} parent=35 // pred_fallthru
          _
        // Predicated region
        $region65: #{tpu_custom_call.1} parent=35 // pred_check
          %p863 = pneg %p290
        $region66: #{tpu_custom_call.1} parent=35 // pred_check_branch
          %865 = sbr.rel (%p863) target = $region68
        $region67: #{tpu_custom_call.1} parent=35 // pred_region
          %p866 = scmp.lt.s32.totalorder %s50, 1
          %s867 = scalar_select %p866, %s50, 1
          %s868 = scalar_lea.vmem %s8, %s867
        $region68: #{tpu_custom_call.1} parent=35 // pred_fallthru
          _
        // Predicated region
        $region69: #{tpu_custom_call.1} parent=35 // pred_check
          %p869 = pneg %p316
        $region70: #{tpu_custom_call.1} parent=35 // pred_check_branch
          %871 = sbr.rel (%p869) target = $region72
        $region71: #{tpu_custom_call.1} parent=35 // pred_region
          %p872 = scmp.lt.s32.totalorder %s50, 1
          %s873 = scalar_select %p872, %s50, 1
          %s874 = scalar_lea.vmem %s9, %s873
        $region72: #{tpu_custom_call.1} parent=35 // pred_fallthru
          _
        // Predicated region
        $region73: #{tpu_custom_call.1} parent=35 // pred_check
          %p875 = pneg %p342
        $region74: #{tpu_custom_call.1} parent=35 // pred_check_branch
          %877 = sbr.rel (%p875) target = $region76
        $region75: #{tpu_custom_call.1} parent=35 // pred_region
          %s878 = sand.u32 %s43, 1
          %s879 = scalar_lea.sflag [#allocation8], %s878
          %s880 = sand.u32 %s332, 1
          %s881 = smul.addr %s880, 128
          %s882 = scalar_lea.vmem [#allocation7], %s881
          %s884 = ssub.s32 2048, 2048
          %885 = vsyncadd %s879, %s884
          %s886 = smul.addr %s50, 16
          %s887 = smul.addr %s886, 128
          %s888 = scalar_lea.hbm %s10, %s887
          %s889 = sshll.u32 %s882, 4
          %s890 = int_to_ptr.vmem [resolvable:$true] %s889
          %895 = dma.hbm_to_vmem [thread:$0]  %s888, 2048, %s890, %s879, 128, 128, 8
        $region76: #{tpu_custom_call.1} parent=35 // pred_fallthru
          _
        // Predicated region
        $region77: #{tpu_custom_call.1} parent=35 // pred_check
          %p896 = pneg %p368
        $region78: #{tpu_custom_call.1} parent=35 // pred_check_branch
          %898 = sbr.rel (%p896) target = $region80
        $region79: #{tpu_custom_call.1} parent=35 // pred_region
          %p899 = scmp.lt.s32.totalorder %s50, 1
          %s900 = scalar_select %p899, %s50, 1
          %s901 = scalar_lea.vmem %s11, %s900
        $region80: #{tpu_custom_call.1} parent=35 // pred_fallthru
          _
        // Predicated region
        $region81: #{tpu_custom_call.1} parent=35 // pred_check
          %p902 = pneg %p394
        $region82: #{tpu_custom_call.1} parent=35 // pred_check_branch
          %904 = sbr.rel (%p902) target = $region84
        $region83: #{tpu_custom_call.1} parent=35 // pred_region
          %s905 = sand.u32 %s43, 1
          %s906 = scalar_lea.sflag [#allocation8], %s905
          %s907 = sand.u32 %s384, 1
          %s908 = smul.addr %s907, 128
          %s909 = scalar_lea.vmem [#allocation9], %s908
          %s911 = ssub.s32 2048, 2048
          %912 = vsyncadd %s906, %s911
          %s913 = smul.addr %s50, 16
          %s914 = smul.addr %s913, 128
          %s915 = scalar_lea.hbm %s12, %s914
          %s916 = sshll.u32 %s909, 4
          %s917 = int_to_ptr.vmem [resolvable:$true] %s916
          %922 = dma.hbm_to_vmem [thread:$0]  %s915, 2048, %s917, %s906, 128, 128, 8
        $region84: #{tpu_custom_call.1} parent=35 // pred_fallthru
          _
        // Predicated region
        $region85: #{tpu_custom_call.1} parent=35 // pred_check
          %p923 = pneg %p420
        $region86: #{tpu_custom_call.1} parent=35 // pred_check_branch
          %925 = sbr.rel (%p923) target = $region88
        $region87: #{tpu_custom_call.1} parent=35 // pred_region
          %p926 = scmp.lt.s32.totalorder %s50, 1
          %s927 = scalar_select %p926, %s50, 1
          %s928 = scalar_lea.vmem %s13, %s927
        $region88: #{tpu_custom_call.1} parent=35 // pred_fallthru
          _
        // Predicated region
        $region89: #{tpu_custom_call.1} parent=35 // pred_check
          %p929 = pneg %p446
        $region90: #{tpu_custom_call.1} parent=35 // pred_check_branch
          %931 = sbr.rel (%p929) target = $region92
        $region91: #{tpu_custom_call.1} parent=35 // pred_region
          %p932 = scmp.lt.s32.totalorder %s50, 1
          %s933 = scalar_select %p932, %s50, 1
          %s934 = scalar_lea.vmem %s14, %s933
        $region92: #{tpu_custom_call.1} parent=35 // pred_fallthru
          _
        // Predicated region
        $region93: #{tpu_custom_call.1} parent=35 // pred_check
          %p935 = pneg %p472
        $region94: #{tpu_custom_call.1} parent=35 // pred_check_branch
          %937 = sbr.rel (%p935) target = $region96
        $region95: #{tpu_custom_call.1} parent=35 // pred_region
          %p938 = scmp.lt.s32.totalorder %s50, 1
          %s939 = scalar_select %p938, %s50, 1
          %s940 = scalar_lea.vmem %s15, %s939
        $region96: #{tpu_custom_call.1} parent=35 // pred_fallthru
          _
        // Predicated region
        $region97: #{tpu_custom_call.1} parent=35 // pred_check
          %p941 = pneg %p498
        $region98: #{tpu_custom_call.1} parent=35 // pred_check_branch
          %943 = sbr.rel (%p941) target = $region100
        $region99: #{tpu_custom_call.1} parent=35 // pred_region
          %p944 = scmp.lt.s32.totalorder %s50, 1
          %s945 = scalar_select %p944, %s50, 1
          %s946 = scalar_lea.vmem %s16, %s945
        $region100: #{tpu_custom_call.1} parent=35 // pred_fallthru
          _
        // Predicated region
        $region101: #{tpu_custom_call.1} parent=35 // pred_check
          %p947 = pneg %p524
        $region102: #{tpu_custom_call.1} parent=35 // pred_check_branch
          %949 = sbr.rel (%p947) target = $region104
        $region103: #{tpu_custom_call.1} parent=35 // pred_region
          %s950 = sand.u32 %s43, 1
          %s951 = scalar_lea.sflag [#allocation11], %s950
          %s952 = sand.u32 %s514, 1
          %s953 = smul.addr %s952, 128
          %s954 = scalar_lea.vmem [#allocation10], %s953
          %s956 = ssub.s32 2048, 2048
          %957 = vsyncadd %s951, %s956
          %s958 = smul.addr %s50, 16
          %s959 = smul.addr %s958, 128
          %s960 = scalar_lea.hbm %s17, %s959
          %s961 = sshll.u32 %s954, 4
          %s962 = int_to_ptr.vmem [resolvable:$true] %s961
          %967 = dma.hbm_to_vmem [thread:$0]  %s960, 2048, %s962, %s951, 128, 128, 8
        $region104: #{tpu_custom_call.1} parent=35 // pred_fallthru
          _
        // Predicated region
        $region105: #{tpu_custom_call.1} parent=35 // pred_check
          %p968 = pneg %p550
        $region106: #{tpu_custom_call.1} parent=35 // pred_check_branch
          %970 = sbr.rel (%p968) target = $region108
        $region107: #{tpu_custom_call.1} parent=35 // pred_region
          %p971 = scmp.lt.s32.totalorder %s50, 1
          %s972 = scalar_select %p971, %s50, 1
          %s973 = scalar_lea.vmem %s18, %s972
        $region108: #{tpu_custom_call.1} parent=35 // pred_fallthru
          _
        // Predicated region
        $region109: #{tpu_custom_call.1} parent=35 // pred_check
          %p974 = pneg %p576
        $region110: #{tpu_custom_call.1} parent=35 // pred_check_branch
          %976 = sbr.rel (%p974) target = $region112
        $region111: #{tpu_custom_call.1} parent=35 // pred_region
          %s977 = sand.u32 %s43, 1
          %s978 = scalar_lea.sflag [#allocation11], %s977
          %s979 = sand.u32 %s566, 1
          %s980 = smul.addr %s979, 128
          %s981 = scalar_lea.vmem [#allocation12], %s980
          %s983 = ssub.s32 2048, 2048
          %984 = vsyncadd %s978, %s983
          %s985 = smul.addr %s50, 16
          %s986 = smul.addr %s985, 128
          %s987 = scalar_lea.hbm %s19, %s986
          %s988 = sshll.u32 %s981, 4
          %s989 = int_to_ptr.vmem [resolvable:$true] %s988
          %994 = dma.hbm_to_vmem [thread:$0]  %s987, 2048, %s989, %s978, 128, 128, 8
        $region112: #{tpu_custom_call.1} parent=35 // pred_fallthru
          _
        // Predicated region
        $region113: #{tpu_custom_call.1} parent=35 // pred_check
          %p995 = pneg %p602
        $region114: #{tpu_custom_call.1} parent=35 // pred_check_branch
          %997 = sbr.rel (%p995) target = $region116
        $region115: #{tpu_custom_call.1} parent=35 // pred_region
          %p998 = scmp.lt.s32.totalorder %s50, 1
          %s999 = scalar_select %p998, %s50, 1
          %s1000 = scalar_lea.vmem %s20, %s999
        $region116: #{tpu_custom_call.1} parent=35 // pred_fallthru
          _
        // Predicated region
        $region117: #{tpu_custom_call.1} parent=35 // pred_check
          %p1001 = pneg %p628
        $region118: #{tpu_custom_call.1} parent=35 // pred_check_branch
          %1003 = sbr.rel (%p1001) target = $region120
        $region119: #{tpu_custom_call.1} parent=35 // pred_region
          %p1004 = scmp.lt.s32.totalorder %s50, 1
          %s1005 = scalar_select %p1004, %s50, 1
          %s1006 = scalar_lea.vmem %s21, %s1005
        $region120: #{tpu_custom_call.1} parent=35 // pred_fallthru
          _
        // Predicated region
        $region121: #{tpu_custom_call.1} parent=35 // pred_check
          %p1007 = pneg %p654
        $region122: #{tpu_custom_call.1} parent=35 // pred_check_branch
          %1009 = sbr.rel (%p1007) target = $region124
        $region123: #{tpu_custom_call.1} parent=35 // pred_region
          %p1010 = scmp.lt.s32.totalorder %s50, 1
          %s1011 = scalar_select %p1010, %s50, 1
          %s1012 = scalar_lea.vmem %s22, %s1011
        $region124: #{tpu_custom_call.1} parent=35 // pred_fallthru
          _
      $region36: #{tpu_custom_call.1} parent=5 // pred_fallthru
        _
      %p1013 = scmp.le.s32.totalorder 1, %s43
      %p1014 = scmp.lt.s32.totalorder %s43, 5
      %p1015 = pnand %p1013, %p1014
      %p1016 = pneg %p1015
      // Predicated region
      $region125: #{tpu_custom_call.1} parent=5 // pred_check
        _
      $region126: #{tpu_custom_call.1} parent=5 // pred_check_branch
        %1018 = sbr.rel (%p1015) target = $region128
      $region127: #{tpu_custom_call.1} parent=5 // pred_region
        %s1019 = ssub.s32 %s43, 1
        %s1020 = sand.u32 %s231, 1
        %s1021 = scalar_lea.sflag [#allocation5], %s1020
        %s1022 = sand.u32 %s231, 1
        %s1023 = smul.addr %s1022, 128
        %s1024 = scalar_lea.vmem [#allocation4], %s1023
        // Predicated region
        $region129: #{tpu_custom_call.1} parent=127 // pred_check
          %p1025 = pneg %p244
        $region130: #{tpu_custom_call.1} parent=127 // pred_check_branch
          %1027 = sbr.rel (%p1025) target = $region132
        $region131: #{tpu_custom_call.1} parent=127 // pred_region
          %1028 = dma.done %s1021, 2048
        $region132: #{tpu_custom_call.1} parent=127 // pred_fallthru
          _
        %s1029 = sand.u32 %s48, 1
        %s1030 = scalar_lea.sflag [#allocation8], %s1029
        %s1031 = sand.u32 %s335, 1
        %s1032 = smul.addr %s1031, 128
        %s1033 = scalar_lea.vmem [#allocation7], %s1032
        // Predicated region
        $region133: #{tpu_custom_call.1} parent=127 // pred_check
          %p1034 = pneg %p348
        $region134: #{tpu_custom_call.1} parent=127 // pred_check_branch
          %1036 = sbr.rel (%p1034) target = $region136
        $region135: #{tpu_custom_call.1} parent=127 // pred_region
          %1037 = dma.done %s1030, 2048
        $region136: #{tpu_custom_call.1} parent=127 // pred_fallthru
          _
        %s1038 = sand.u32 %s48, 1
        %s1039 = scalar_lea.sflag [#allocation8], %s1038
        %s1040 = sand.u32 %s387, 1
        %s1041 = smul.addr %s1040, 128
        %s1042 = scalar_lea.vmem [#allocation9], %s1041
        // Predicated region
        $region137: #{tpu_custom_call.1} parent=127 // pred_check
          %p1043 = pneg %p400
        $region138: #{tpu_custom_call.1} parent=127 // pred_check_branch
          %1045 = sbr.rel (%p1043) target = $region140
        $region139: #{tpu_custom_call.1} parent=127 // pred_region
          %1046 = dma.done %s1039, 2048
        $region140: #{tpu_custom_call.1} parent=127 // pred_fallthru
          _
        %s1047 = sand.u32 %s48, 1
        %s1048 = scalar_lea.sflag [#allocation11], %s1047
        %s1049 = sand.u32 %s517, 1
        %s1050 = smul.addr %s1049, 128
        %s1051 = scalar_lea.vmem [#allocation10], %s1050
        // Predicated region
        $region141: #{tpu_custom_call.1} parent=127 // pred_check
          %p1052 = pneg %p530
        $region142: #{tpu_custom_call.1} parent=127 // pred_check_branch
          %1054 = sbr.rel (%p1052) target = $region144
        $region143: #{tpu_custom_call.1} parent=127 // pred_region
          %1055 = dma.done %s1048, 2048
        $region144: #{tpu_custom_call.1} parent=127 // pred_fallthru
          _
        %s1056 = sand.u32 %s48, 1
        %s1057 = scalar_lea.sflag [#allocation11], %s1056
        %s1058 = sand.u32 %s569, 1
        %s1059 = smul.addr %s1058, 128
        %s1060 = scalar_lea.vmem [#allocation12], %s1059
        // Predicated region
        $region145: #{tpu_custom_call.1} parent=127 // pred_check
          %p1061 = pneg %p582
        $region146: #{tpu_custom_call.1} parent=127 // pred_check_branch
          %1063 = sbr.rel (%p1061) target = $region148
        $region147: #{tpu_custom_call.1} parent=127 // pred_region
          %1064 = dma.done %s1057, 2048
        $region148: #{tpu_custom_call.1} parent=127 // pred_fallthru
          _
        %p1065 = scmp.lt.s32.totalorder %s54, 1
        %s1066 = scalar_select %p1065, %s54, 1
        %s1067 = smul.addr %s1066, 8
        %s1068 = scalar_lea.vmem %s0, %s1067
        %p1069 = pneg %p88
        %p1070 = pneg %p85
        %s1071 = smul.u32 8, %s55
        %p1072 = scmp.lt.s32.totalorder %s1071, 7
        %s1073 = scalar_select %p1072, %s1071, 7
        %s1074 = smul.addr %s1073, 8
        %s1075 = scalar_lea.vmem %s1, %s1074
        %p1076 = pneg %p114
        %p1077 = pneg %p111
        %p1078 = scmp.lt.s32.totalorder %s53, 1
        %s1079 = scalar_select %p1078, %s53, 1
        %s1080 = scalar_lea.vmem %s2, %s1079
        %p1081 = pneg %p140
        %p1082 = pneg %p137
        %p1083 = scmp.lt.s32.totalorder %s53, 1
        %s1084 = scalar_select %p1083, %s53, 1
        %s1085 = scalar_lea.vmem %s3, %s1084
        %p1086 = pneg %p166
        %p1087 = pneg %p163
        %p1088 = scmp.lt.s32.totalorder %s53, 1
        %s1089 = scalar_select %p1088, %s53, 1
        %s1090 = scalar_lea.vmem %s4, %s1089
        %p1091 = pneg %p192
        %p1092 = pneg %p189
        %p1093 = scmp.lt.s32.totalorder %s53, 1
        %s1094 = scalar_select %p1093, %s53, 1
        %s1095 = scalar_lea.vmem %s5, %s1094
        %p1096 = pneg %p218
        %p1097 = pneg %p215
        %s1098 = sand.u32 %s231, 1
        %s1099 = scalar_lea.sflag [#allocation5], %s1098
        %s1100 = sand.u32 %s231, 1
        %s1101 = smul.addr %s1100, 128
        %s1102 = scalar_lea.vmem [#allocation4], %s1101
        %p1103 = pneg %p244
        %p1104 = pneg %p241
        %p1105 = scmp.lt.s32.totalorder %s53, 1
        %s1106 = scalar_select %p1105, %s53, 1
        %s1107 = scalar_lea.vmem %s7, %s1106
        %p1108 = pneg %p270
        %p1109 = pneg %p267
        %p1110 = scmp.lt.s32.totalorder %s53, 1
        %s1111 = scalar_select %p1110, %s53, 1
        %s1112 = scalar_lea.vmem %s8, %s1111
        %p1113 = pneg %p296
        %p1114 = pneg %p293
        %p1115 = scmp.lt.s32.totalorder %s53, 1
        %s1116 = scalar_select %p1115, %s53, 1
        %s1117 = scalar_lea.vmem %s9, %s1116
        %p1118 = pneg %p322
        %p1119 = pneg %p319
        %s1120 = sand.u32 %s48, 1
        %s1121 = scalar_lea.sflag [#allocation8], %s1120
        %s1122 = sand.u32 %s335, 1
        %s1123 = smul.addr %s1122, 128
        %s1124 = scalar_lea.vmem [#allocation7], %s1123
        %p1125 = pneg %p348
        %p1126 = pneg %p345
        %p1127 = scmp.lt.s32.totalorder %s53, 1
        %s1128 = scalar_select %p1127, %s53, 1
        %s1129 = scalar_lea.vmem %s11, %s1128
        %p1130 = pneg %p374
        %p1131 = pneg %p371
        %s1132 = sand.u32 %s48, 1
        %s1133 = scalar_lea.sflag [#allocation8], %s1132
        %s1134 = sand.u32 %s387, 1
        %s1135 = smul.addr %s1134, 128
        %s1136 = scalar_lea.vmem [#allocation9], %s1135
        %p1137 = pneg %p400
        %p1138 = pneg %p397
        %p1139 = scmp.lt.s32.totalorder %s53, 1
        %s1140 = scalar_select %p1139, %s53, 1
        %s1141 = scalar_lea.vmem %s13, %s1140
        %p1142 = pneg %p426
        %p1143 = pneg %p423
        %p1144 = scmp.lt.s32.totalorder %s53, 1
        %s1145 = scalar_select %p1144, %s53, 1
        %s1146 = scalar_lea.vmem %s14, %s1145
        %p1147 = pneg %p452
        %p1148 = pneg %p449
        %p1149 = scmp.lt.s32.totalorder %s53, 1
        %s1150 = scalar_select %p1149, %s53, 1
        %s1151 = scalar_lea.vmem %s15, %s1150
        %p1152 = pneg %p478
        %p1153 = pneg %p475
        %p1154 = scmp.lt.s32.totalorder %s53, 1
        %s1155 = scalar_select %p1154, %s53, 1
        %s1156 = scalar_lea.vmem %s16, %s1155
        %p1157 = pneg %p504
        %p1158 = pneg %p501
        %s1159 = sand.u32 %s48, 1
        %s1160 = scalar_lea.sflag [#allocation11], %s1159
        %s1161 = sand.u32 %s517, 1
        %s1162 = smul.addr %s1161, 128
        %s1163 = scalar_lea.vmem [#allocation10], %s1162
        %p1164 = pneg %p530
        %p1165 = pneg %p527
        %p1166 = scmp.lt.s32.totalorder %s53, 1
        %s1167 = scalar_select %p1166, %s53, 1
        %s1168 = scalar_lea.vmem %s18, %s1167
        %p1169 = pneg %p556
        %p1170 = pneg %p553
        %s1171 = sand.u32 %s48, 1
        %s1172 = scalar_lea.sflag [#allocation11], %s1171
        %s1173 = sand.u32 %s569, 1
        %s1174 = smul.addr %s1173, 128
        %s1175 = scalar_lea.vmem [#allocation12], %s1174
        %p1176 = pneg %p582
        %p1177 = pneg %p579
        %p1178 = scmp.lt.s32.totalorder %s53, 1
        %s1179 = scalar_select %p1178, %s53, 1
        %s1180 = scalar_lea.vmem %s20, %s1179
        %p1181 = pneg %p608
        %p1182 = pneg %p605
        %p1183 = scmp.lt.s32.totalorder %s53, 1
        %s1184 = scalar_select %p1183, %s53, 1
        %s1185 = scalar_lea.vmem %s21, %s1184
        %p1186 = pneg %p634
        %p1187 = pneg %p631
        %p1188 = scmp.lt.s32.totalorder %s53, 1
        %s1189 = scalar_select %p1188, %s53, 1
        %s1190 = scalar_lea.vmem %s22, %s1189
        %p1191 = pneg %p660
        %p1192 = pneg %p657
        %p1193 = pneg %p681
        %p1194 = pneg %p678
        %p1195 = pneg %p702
        %p1196 = pneg %p699
        %p1197 = pneg %p723
        %p1198 = pneg %p720
        %p1199 = pneg %p744
        %p1200 = pneg %p741
        %p1201 = pneg %p765
        %p1202 = pneg %p762
        %p1203 = scmp.lt.s32.totalorder %s54, 1
        %s1204 = scalar_select %p1203, %s54, 1
        %s1205 = smul.addr %s1204, 8
        %s1206 = scalar_lea.vmem %s0, %s1205
        %s1207 = smul.u32 8, %s55
        %p1208 = scmp.lt.s32.totalorder %s1207, 7
        %s1209 = scalar_select %p1208, %s1207, 7
        %s1210 = smul.addr %s1209, 8
        %s1211 = scalar_lea.vmem %s1, %s1210
        %s1212 = smul.u32 8, %s55
        %p1213 = scmp.lt.s32.totalorder %s53, 1
        %s1214 = scalar_select %p1213, %s53, 1
        %s1215 = scalar_lea.vmem %s2, %s1214
        %p1216 = scmp.lt.s32.totalorder %s53, 1
        %s1217 = scalar_select %p1216, %s53, 1
        %s1218 = scalar_lea.vmem %s3, %s1217
        %p1219 = scmp.lt.s32.totalorder %s53, 1
        %s1220 = scalar_select %p1219, %s53, 1
        %s1221 = scalar_lea.vmem %s4, %s1220
        %p1222 = scmp.lt.s32.totalorder %s53, 1
        %s1223 = scalar_select %p1222, %s53, 1
        %s1224 = scalar_lea.vmem %s5, %s1223
        %p1225 = scmp.lt.s32.totalorder %s53, 1
        %s1226 = scalar_select %p1225, %s53, 1
        %s1227 = scalar_lea.vmem %s7, %s1226
        %p1228 = scmp.lt.s32.totalorder %s53, 1
        %s1229 = scalar_select %p1228, %s53, 1
        %s1230 = scalar_lea.vmem %s8, %s1229
        %p1231 = scmp.lt.s32.totalorder %s53, 1
        %s1232 = scalar_select %p1231, %s53, 1
        %s1233 = scalar_lea.vmem %s9, %s1232
        %p1234 = scmp.lt.s32.totalorder %s53, 1
        %s1235 = scalar_select %p1234, %s53, 1
        %s1236 = scalar_lea.vmem %s11, %s1235
        %p1237 = scmp.lt.s32.totalorder %s53, 1
        %s1238 = scalar_select %p1237, %s53, 1
        %s1239 = scalar_lea.vmem %s13, %s1238
        %p1240 = scmp.lt.s32.totalorder %s53, 1
        %s1241 = scalar_select %p1240, %s53, 1
        %s1242 = scalar_lea.vmem %s14, %s1241
        %p1243 = scmp.lt.s32.totalorder %s53, 1
        %s1244 = scalar_select %p1243, %s53, 1
        %s1245 = scalar_lea.vmem %s15, %s1244
        %p1246 = scmp.lt.s32.totalorder %s53, 1
        %s1247 = scalar_select %p1246, %s53, 1
        %s1248 = scalar_lea.vmem %s16, %s1247
        %p1249 = scmp.lt.s32.totalorder %s53, 1
        %s1250 = scalar_select %p1249, %s53, 1
        %s1251 = scalar_lea.vmem %s18, %s1250
        %p1252 = scmp.lt.s32.totalorder %s53, 1
        %s1253 = scalar_select %p1252, %s53, 1
        %s1254 = scalar_lea.vmem %s20, %s1253
        %p1255 = scmp.lt.s32.totalorder %s53, 1
        %s1256 = scalar_select %p1255, %s53, 1
        %s1257 = scalar_lea.vmem %s21, %s1256
        %p1258 = scmp.lt.s32.totalorder %s53, 1
        %s1259 = scalar_select %p1258, %s53, 1
        %s1260 = scalar_lea.vmem %s22, %s1259
        %p1261 = scmp.lt.s32.totalorder %s53, 0
        %s1262 = ssub.s32 0, %s53
        %s1263 = scalar_select %p1261, %s1262, %s53
        %s1264 = sand.u32 %s1263, 1
        %s1265 = ssub.s32 0, %s1264
        %s1266 = scalar_select %p1261, %s1265, %s1264
        %s1267 = ssub.s32 1, %s1266
        %p1268 = scmp.eq.s32.totalorder %s53, 0
        %p1269 = scmp.eq.s32.totalorder %s55, 0
        %p1270 = pnand %p1268, %p1269
        %p1271 = pneg %p1270
        // Predicated region
        $region149: #{tpu_custom_call.1} parent=127 // pred_check
          _
        $region150: #{tpu_custom_call.1} parent=127 // pred_check_branch
          %1273 = sbr.rel (%p1270) target = $region152
        $region151: #{tpu_custom_call.1} parent=127 // pred_region
          %s1274 = smul.u32 %s54, 8
          %v1275 = vld [vmem:[%s1206] sm:$0xff]
          %s1276 = scalar_lea.vmem [#allocation2], %s1274
          %vm1277 = vcmask 7168
          %1278 = vst.msk [vmem:[%s1276] sm:$0xff] %vm1277, %v1275
          %v1279 = vld [vmem:[%s1206] sm:$0xff]
          %s1280 = scalar_lea.vmem [#allocation3], %s1274
          %1281 = vst.msk [vmem:[%s1280] sm:$0xff] %vm1277, %v1279
        $region152: #{tpu_custom_call.1} parent=127 // pred_fallthru
          _
        %s1282 = smul.u32 %s1266, 16
        %s1283 = smul.u32 %s54, 8
        %s1284 = sadd.s32 %s1282, %s1283
        %s1285 = smul.u32 %s55, 8
        %s1286 = sadd.s32 %s1284, %s1285
        %s1287 = smul.u32 %s1267, 16
        %s1288 = sadd.s32 %s1287, %s1283
        %s1289 = sadd.s32 %s1288, %s1285
        %s1290 = scalar_lea.vmem [#allocation3], %s1284
        %v1291 = vld [vmem:[%s1290] sm:$0xff]
        %s1292 = scalar_lea.vmem [#allocation2], %s1284
        %v1293 = vld [vmem:[%s1292] sm:$0xff]
        %s1294 = scalar_lea.vmem [#allocation3], %s1286
        %v1295 = vld [vmem:[%s1294] sm:$0xff]
        %s1296 = scalar_lea.vmem [#allocation2], %s1286
        %v1297 = vld [vmem:[%s1296] sm:$0xff]
        %v1298 = vld [vmem:[%s1215] sm:$0x1]
        %v1299 = vld [vmem:[%s1218] sm:$0x1]
        %v1300 = vld [vmem:[%s1221] sm:$0x1]
        %v1301 = vld [vmem:[%s1224] sm:$0x1]
        %v1302 = vld [vmem:[%s1024] sm:$0xff]
        %v1303 = vld [vmem:[%s1024 + $0x8] sm:$0xff]
        %v1304 = vld [vmem:[%s1024 + $0x10] sm:$0xff]
        %v1305 = vld [vmem:[%s1024 + $0x18] sm:$0xff]
        %v1306 = vld [vmem:[%s1024 + $0x20] sm:$0xff]
        %v1307 = vld [vmem:[%s1024 + $0x28] sm:$0xff]
        %v1308 = vld [vmem:[%s1024 + $0x30] sm:$0xff]
        %v1309 = vld [vmem:[%s1024 + $0x38] sm:$0xff]
        %v1310 = vld [vmem:[%s1024 + $0x40] sm:$0xff]
        %v1311 = vld [vmem:[%s1024 + $0x48] sm:$0xff]
        %v1312 = vld [vmem:[%s1024 + $0x50] sm:$0xff]
        %v1313 = vld [vmem:[%s1024 + $0x58] sm:$0xff]
        %v1314 = vld [vmem:[%s1024 + $0x60] sm:$0xff]
        %v1315 = vld [vmem:[%s1024 + $0x68] sm:$0xff]
        %v1316 = vld [vmem:[%s1024 + $0x70] sm:$0xff]
        %v1317 = vld [vmem:[%s1024 + $0x78] sm:$0xff]
        %v1318 = vld [vmem:[%s1227] sm:$0x1]
        %v1319 = vld [vmem:[%s1230] sm:$0x1]
        %v1320 = vld [vmem:[%s1233] sm:$0x1]
        %v1321 = vld [vmem:[%s1033] sm:$0xff]
        %v1322 = vld [vmem:[%s1033 + $0x8] sm:$0xff]
        %v1323 = vld [vmem:[%s1033 + $0x10] sm:$0xff]
        %v1324 = vld [vmem:[%s1033 + $0x18] sm:$0xff]
        %v1325 = vld [vmem:[%s1033 + $0x20] sm:$0xff]
        %v1326 = vld [vmem:[%s1033 + $0x28] sm:$0xff]
        %v1327 = vld [vmem:[%s1033 + $0x30] sm:$0xff]
        %v1328 = vld [vmem:[%s1033 + $0x38] sm:$0xff]
        %v1329 = vld [vmem:[%s1033 + $0x40] sm:$0xff]
        %v1330 = vld [vmem:[%s1033 + $0x48] sm:$0xff]
        %v1331 = vld [vmem:[%s1033 + $0x50] sm:$0xff]
        %v1332 = vld [vmem:[%s1033 + $0x58] sm:$0xff]
        %v1333 = vld [vmem:[%s1033 + $0x60] sm:$0xff]
        %v1334 = vld [vmem:[%s1033 + $0x68] sm:$0xff]
        %v1335 = vld [vmem:[%s1033 + $0x70] sm:$0xff]
        %v1336 = vld [vmem:[%s1033 + $0x78] sm:$0xff]
        %v1337 = vld [vmem:[%s1236] sm:$0x1]
        %v1338 = vld [vmem:[%s1042] sm:$0xff]
        %v1339 = vld [vmem:[%s1042 + $0x8] sm:$0xff]
        %v1340 = vld [vmem:[%s1042 + $0x10] sm:$0xff]
        %v1341 = vld [vmem:[%s1042 + $0x18] sm:$0xff]
        %v1342 = vld [vmem:[%s1042 + $0x20] sm:$0xff]
        %v1343 = vld [vmem:[%s1042 + $0x28] sm:$0xff]
        %v1344 = vld [vmem:[%s1042 + $0x30] sm:$0xff]
        %v1345 = vld [vmem:[%s1042 + $0x38] sm:$0xff]
        %v1346 = vld [vmem:[%s1042 + $0x40] sm:$0xff]
        %v1347 = vld [vmem:[%s1042 + $0x48] sm:$0xff]
        %v1348 = vld [vmem:[%s1042 + $0x50] sm:$0xff]
        %v1349 = vld [vmem:[%s1042 + $0x58] sm:$0xff]
        %v1350 = vld [vmem:[%s1042 + $0x60] sm:$0xff]
        %v1351 = vld [vmem:[%s1042 + $0x68] sm:$0xff]
        %v1352 = vld [vmem:[%s1042 + $0x70] sm:$0xff]
        %v1353 = vld [vmem:[%s1042 + $0x78] sm:$0xff]
        %v1354 = vld [vmem:[%s1239] sm:$0x1]
        %v1355 = vld [vmem:[%s1242] sm:$0x1]
        %v1356 = vld [vmem:[%s1245] sm:$0x1]
        %v1357 = vld [vmem:[%s1248] sm:$0x1]
        %v1358 = vld [vmem:[%s1051] sm:$0xff]
        %v1359 = vld [vmem:[%s1051 + $0x8] sm:$0xff]
        %v1360 = vld [vmem:[%s1051 + $0x10] sm:$0xff]
        %v1361 = vld [vmem:[%s1051 + $0x18] sm:$0xff]
        %v1362 = vld [vmem:[%s1051 + $0x20] sm:$0xff]
        %v1363 = vld [vmem:[%s1051 + $0x28] sm:$0xff]
        %v1364 = vld [vmem:[%s1051 + $0x30] sm:$0xff]
        %v1365 = vld [vmem:[%s1051 + $0x38] sm:$0xff]
        %v1366 = vld [vmem:[%s1051 + $0x40] sm:$0xff]
        %v1367 = vld [vmem:[%s1051 + $0x48] sm:$0xff]
        %v1368 = vld [vmem:[%s1051 + $0x50] sm:$0xff]
        %v1369 = vld [vmem:[%s1051 + $0x58] sm:$0xff]
        %v1370 = vld [vmem:[%s1051 + $0x60] sm:$0xff]
        %v1371 = vld [vmem:[%s1051 + $0x68] sm:$0xff]
        %v1372 = vld [vmem:[%s1051 + $0x70] sm:$0xff]
        %v1373 = vld [vmem:[%s1051 + $0x78] sm:$0xff]
        %v1374 = vld [vmem:[%s1251] sm:$0x1]
        %v1375 = vld [vmem:[%s1060] sm:$0xff]
        %v1376 = vld [vmem:[%s1060 + $0x8] sm:$0xff]
        %v1377 = vld [vmem:[%s1060 + $0x10] sm:$0xff]
        %v1378 = vld [vmem:[%s1060 + $0x18] sm:$0xff]
        %v1379 = vld [vmem:[%s1060 + $0x20] sm:$0xff]
        %v1380 = vld [vmem:[%s1060 + $0x28] sm:$0xff]
        %v1381 = vld [vmem:[%s1060 + $0x30] sm:$0xff]
        %v1382 = vld [vmem:[%s1060 + $0x38] sm:$0xff]
        %v1383 = vld [vmem:[%s1060 + $0x40] sm:$0xff]
        %v1384 = vld [vmem:[%s1060 + $0x48] sm:$0xff]
        %v1385 = vld [vmem:[%s1060 + $0x50] sm:$0xff]
        %v1386 = vld [vmem:[%s1060 + $0x58] sm:$0xff]
        %v1387 = vld [vmem:[%s1060 + $0x60] sm:$0xff]
        %v1388 = vld [vmem:[%s1060 + $0x68] sm:$0xff]
        %v1389 = vld [vmem:[%s1060 + $0x70] sm:$0xff]
        %v1390 = vld [vmem:[%s1060 + $0x78] sm:$0xff]
        %v1391 = vld [vmem:[%s1254] sm:$0x1]
        %v1392 = vld [vmem:[%s1257] sm:$0x1]
        %v1393 = vld [vmem:[%s1260] sm:$0x1]
        %v1394 = vld [vmem:[%s1211] sm:$0xff]
        %v1395 = vld [vmem:[%s1211 + $0x8] sm:$0xff]
        %v1396 = vld [vmem:[%s1211 + $0x10] sm:$0xff]
        %v1397 = vld [vmem:[%s1211 + $0x18] sm:$0xff]
        %v1398 = vld [vmem:[%s1211 + $0x20] sm:$0xff]
        %v1399 = vld [vmem:[%s1211 + $0x28] sm:$0xff]
        %v1400 = vld [vmem:[%s1211 + $0x30] sm:$0xff]
        %v1401 = vld [vmem:[%s1211 + $0x38] sm:$0xff]
        %v1402 = vsub.f32 1.0, %v1394
        %v1403 = vsub.f32 1.0, %v1395
        %v1404 = vsub.f32 1.0, %v1396
        %v1405 = vsub.f32 1.0, %v1397
        %v1406 = vsub.f32 1.0, %v1398
        %v1407 = vsub.f32 1.0, %v1399
        %v1408 = vsub.f32 1.0, %v1400
        %v1409 = vsub.f32 1.0, %v1401
        %v1410 = vmul.f32 %v1291, %v1402
        %v1411 = vmul.f32 %v1291, %v1403
        %v1412 = vmul.f32 %v1291, %v1404
        %v1413 = vmul.f32 %v1291, %v1405
        %v1414 = vmul.f32 %v1291, %v1406
        %v1415 = vmul.f32 %v1291, %v1407
        %v1416 = vmul.f32 %v1291, %v1408
        %v1417 = vmul.f32 %v1291, %v1409
        %vm1418 = vcmask 7168
        %v1419 = vsel %vm1418, %v1410, 0.0
        %v1420 = vrot.slane %v1419, 4
        %v1421 = vadd.f32 %v1419, %v1420
        %v1422 = vrot.slane %v1421, 2
        %v1423 = vadd.f32 %v1421, %v1422
        %v1424 = vrot.slane %v1423, 1
        %v1425 = vadd.f32 %v1423, %v1424
        %v1426 = vsel %vm1418, %v1411, 0.0
        %v1427 = vrot.slane %v1426, 4
        %v1428 = vadd.f32 %v1426, %v1427
        %v1429 = vrot.slane %v1428, 2
        %v1430 = vadd.f32 %v1428, %v1429
        %v1431 = vrot.slane %v1430, 1
        %v1432 = vadd.f32 %v1430, %v1431
        %v1433 = vsel %vm1418, %v1412, 0.0
        %v1434 = vrot.slane %v1433, 4
        %v1435 = vadd.f32 %v1433, %v1434
        %v1436 = vrot.slane %v1435, 2
        %v1437 = vadd.f32 %v1435, %v1436
        %v1438 = vrot.slane %v1437, 1
        %v1439 = vadd.f32 %v1437, %v1438
        %v1440 = vsel %vm1418, %v1413, 0.0
        %v1441 = vrot.slane %v1440, 4
        %v1442 = vadd.f32 %v1440, %v1441
        %v1443 = vrot.slane %v1442, 2
        %v1444 = vadd.f32 %v1442, %v1443
        %v1445 = vrot.slane %v1444, 1
        %v1446 = vadd.f32 %v1444, %v1445
        %v1447 = vsel %vm1418, %v1414, 0.0
        %v1448 = vrot.slane %v1447, 4
        %v1449 = vadd.f32 %v1447, %v1448
        %v1450 = vrot.slane %v1449, 2
        %v1451 = vadd.f32 %v1449, %v1450
        %v1452 = vrot.slane %v1451, 1
        %v1453 = vadd.f32 %v1451, %v1452
        %v1454 = vsel %vm1418, %v1415, 0.0
        %v1455 = vrot.slane %v1454, 4
        %v1456 = vadd.f32 %v1454, %v1455
        %v1457 = vrot.slane %v1456, 2
        %v1458 = vadd.f32 %v1456, %v1457
        %v1459 = vrot.slane %v1458, 1
        %v1460 = vadd.f32 %v1458, %v1459
        %v1461 = vsel %vm1418, %v1416, 0.0
        %v1462 = vrot.slane %v1461, 4
        %v1463 = vadd.f32 %v1461, %v1462
        %v1464 = vrot.slane %v1463, 2
        %v1465 = vadd.f32 %v1463, %v1464
        %v1466 = vrot.slane %v1465, 1
        %v1467 = vadd.f32 %v1465, %v1466
        %v1468 = vsel %vm1418, %v1417, 0.0
        %v1469 = vrot.slane %v1468, 4
        %v1470 = vadd.f32 %v1468, %v1469
        %v1471 = vrot.slane %v1470, 2
        %v1472 = vadd.f32 %v1470, %v1471
        %v1473 = vrot.slane %v1472, 1
        %v1474 = vadd.f32 %v1472, %v1473
        %v1475 = vmul.f32 %v1293, %v1402
        %v1476 = vmul.f32 %v1293, %v1403
        %v1477 = vmul.f32 %v1293, %v1404
        %v1478 = vmul.f32 %v1293, %v1405
        %v1479 = vmul.f32 %v1293, %v1406
        %v1480 = vmul.f32 %v1293, %v1407
        %v1481 = vmul.f32 %v1293, %v1408
        %v1482 = vmul.f32 %v1293, %v1409
        %v1483 = vsel %vm1418, %v1475, 0.0
        %v1484 = vrot.slane %v1483, 4
        %v1485 = vadd.f32 %v1483, %v1484
        %v1486 = vrot.slane %v1485, 2
        %v1487 = vadd.f32 %v1485, %v1486
        %v1488 = vrot.slane %v1487, 1
        %v1489 = vadd.f32 %v1487, %v1488
        %v1490 = vsel %vm1418, %v1476, 0.0
        %v1491 = vrot.slane %v1490, 4
        %v1492 = vadd.f32 %v1490, %v1491
        %v1493 = vrot.slane %v1492, 2
        %v1494 = vadd.f32 %v1492, %v1493
        %v1495 = vrot.slane %v1494, 1
        %v1496 = vadd.f32 %v1494, %v1495
        %v1497 = vsel %vm1418, %v1477, 0.0
        %v1498 = vrot.slane %v1497, 4
        %v1499 = vadd.f32 %v1497, %v1498
        %v1500 = vrot.slane %v1499, 2
        %v1501 = vadd.f32 %v1499, %v1500
        %v1502 = vrot.slane %v1501, 1
        %v1503 = vadd.f32 %v1501, %v1502
        %v1504 = vsel %vm1418, %v1478, 0.0
        %v1505 = vrot.slane %v1504, 4
        %v1506 = vadd.f32 %v1504, %v1505
        %v1507 = vrot.slane %v1506, 2
        %v1508 = vadd.f32 %v1506, %v1507
        %v1509 = vrot.slane %v1508, 1
        %v1510 = vadd.f32 %v1508, %v1509
        %v1511 = vsel %vm1418, %v1479, 0.0
        %v1512 = vrot.slane %v1511, 4
        %v1513 = vadd.f32 %v1511, %v1512
        %v1514 = vrot.slane %v1513, 2
        %v1515 = vadd.f32 %v1513, %v1514
        %v1516 = vrot.slane %v1515, 1
        %v1517 = vadd.f32 %v1515, %v1516
        %v1518 = vsel %vm1418, %v1480, 0.0
        %v1519 = vrot.slane %v1518, 4
        %v1520 = vadd.f32 %v1518, %v1519
        %v1521 = vrot.slane %v1520, 2
        %v1522 = vadd.f32 %v1520, %v1521
        %v1523 = vrot.slane %v1522, 1
        %v1524 = vadd.f32 %v1522, %v1523
        %v1525 = vsel %vm1418, %v1481, 0.0
        %v1526 = vrot.slane %v1525, 4
        %v1527 = vadd.f32 %v1525, %v1526
        %v1528 = vrot.slane %v1527, 2
        %v1529 = vadd.f32 %v1527, %v1528
        %v1530 = vrot.slane %v1529, 1
        %v1531 = vadd.f32 %v1529, %v1530
        %v1532 = vsel %vm1418, %v1482, 0.0
        %v1533 = vrot.slane %v1532, 4
        %v1534 = vadd.f32 %v1532, %v1533
        %v1535 = vrot.slane %v1534, 2
        %v1536 = vadd.f32 %v1534, %v1535
        %v1537 = vrot.slane %v1536, 1
        %v1538 = vadd.f32 %v1536, %v1537
        %v1539 = vsub.f32 %v1425, %v1291
        %v1540 = vsub.f32 %v1432, %v1291
        %v1541 = vsub.f32 %v1439, %v1291
        %v1542 = vsub.f32 %v1446, %v1291
        %v1543 = vsub.f32 %v1453, %v1291
        %v1544 = vsub.f32 %v1460, %v1291
        %v1545 = vsub.f32 %v1467, %v1291
        %v1546 = vsub.f32 %v1474, %v1291
        %v1547 = vmul.f32 %v1539, 0.15915494
        %v1548 = vmul.f32 %v1540, 0.15915494
        %v1549 = vmul.f32 %v1541, 0.15915494
        %v1550 = vmul.f32 %v1542, 0.15915494
        %v1551 = vmul.f32 %v1543, 0.15915494
        %v1552 = vmul.f32 %v1544, 0.15915494
        %v1553 = vmul.f32 %v1545, 0.15915494
        %v1554 = vmul.f32 %v1546, 0.15915494
        %v1555 = vround.ne.pseudo %v1547
        %v1556 = vround.ne.pseudo %v1548
        %v1557 = vround.ne.pseudo %v1549
        %v1558 = vround.ne.pseudo %v1550
        %v1559 = vround.ne.pseudo %v1551
        %v1560 = vround.ne.pseudo %v1552
        %v1561 = vround.ne.pseudo %v1553
        %v1562 = vround.ne.pseudo %v1554
        %v1563 = vmul.f32 %v1555, 6.2831855
        %v1564 = vmul.f32 %v1556, 6.2831855
        %v1565 = vmul.f32 %v1557, 6.2831855
        %v1566 = vmul.f32 %v1558, 6.2831855
        %v1567 = vmul.f32 %v1559, 6.2831855
        %v1568 = vmul.f32 %v1560, 6.2831855
        %v1569 = vmul.f32 %v1561, 6.2831855
        %v1570 = vmul.f32 %v1562, 6.2831855
        %v1571 = vsub.f32 %v1539, %v1563
        %v1572 = vsub.f32 %v1540, %v1564
        %v1573 = vsub.f32 %v1541, %v1565
        %v1574 = vsub.f32 %v1542, %v1566
        %v1575 = vsub.f32 %v1543, %v1567
        %v1576 = vsub.f32 %v1544, %v1568
        %v1577 = vsub.f32 %v1545, %v1569
        %v1578 = vsub.f32 %v1546, %v1570
        %v1579 = vmul.f32 %v1571, %v1571
        %v1580 = vmul.f32 %v1572, %v1572
        %v1581 = vmul.f32 %v1573, %v1573
        %v1582 = vmul.f32 %v1574, %v1574
        %v1583 = vmul.f32 %v1575, %v1575
        %v1584 = vmul.f32 %v1576, %v1576
        %v1585 = vmul.f32 %v1577, %v1577
        %v1586 = vmul.f32 %v1578, %v1578
        %1588 = vset.pattern.permute.xlu0 0
        %1589 = vperm.xlu0 %1588, %v1489
        %v1590 = vpop.permute.xlu0 %1589
        %1593 = vset.pattern.permute.xlu0 0
        %1594 = vperm.xlu0 %1593, %v1496
        %v1595 = vpop.permute.xlu0 %1594
        %1598 = vset.pattern.permute.xlu0 0
        %1599 = vperm.xlu0 %1598, %v1503
        %v1600 = vpop.permute.xlu0 %1599
        %1603 = vset.pattern.permute.xlu0 0
        %1604 = vperm.xlu0 %1603, %v1510
        %v1605 = vpop.permute.xlu0 %1604
        %1608 = vset.pattern.permute.xlu0 0
        %1609 = vperm.xlu0 %1608, %v1517
        %v1610 = vpop.permute.xlu0 %1609
        %1613 = vset.pattern.permute.xlu0 0
        %1614 = vperm.xlu0 %1613, %v1524
        %v1615 = vpop.permute.xlu0 %1614
        %1618 = vset.pattern.permute.xlu0 0
        %1619 = vperm.xlu0 %1618, %v1531
        %v1620 = vpop.permute.xlu0 %1619
        %1623 = vset.pattern.permute.xlu0 0
        %1624 = vperm.xlu0 %1623, %v1538
        %v1625 = vpop.permute.xlu0 %1624
        %v1627 = vmul.f32 %v1590, %v1298
        %v1628 = vmul.f32 %v1595, %v1298
        %v1629 = vmul.f32 %v1600, %v1298
        %v1630 = vmul.f32 %v1605, %v1298
        %v1631 = vmul.f32 %v1610, %v1298
        %v1632 = vmul.f32 %v1615, %v1298
        %v1633 = vmul.f32 %v1620, %v1298
        %v1634 = vmul.f32 %v1625, %v1298
        %1636 = vset.pattern.permute.xlu0 0
        %1637 = vperm.xlu0 %1636, %v1293
        %v1638 = vpop.permute.xlu0 %1637
        %v1641 = vlaneseq
        %v1642 = vshrl.u32 %v1641, 7
        %v1643 = vsub.s32 0, %v1642
        %v1644 = vrot.slane %v1299, %v1643
        %v1646 = vmul.f32 %v1638, %v1644
        %v1655 = vlaneseq
        %v1656 = vshrl.u32 %v1655, 7
        %v1657 = vsub.s32 0, %v1656
        %v1658 = vrot.slane %v1627, %v1657
        %v1659 = vlaneseq
        %v1660 = vshrl.u32 %v1659, 7
        %v1661 = vsub.s32 0, %v1660
        %v1662 = vrot.slane %v1628, %v1661
        %v1663 = vlaneseq
        %v1664 = vshrl.u32 %v1663, 7
        %v1665 = vsub.s32 0, %v1664
        %v1666 = vrot.slane %v1629, %v1665
        %v1667 = vlaneseq
        %v1668 = vshrl.u32 %v1667, 7
        %v1669 = vsub.s32 0, %v1668
        %v1670 = vrot.slane %v1630, %v1669
        %v1671 = vlaneseq
        %v1672 = vshrl.u32 %v1671, 7
        %v1673 = vsub.s32 0, %v1672
        %v1674 = vrot.slane %v1631, %v1673
        %v1675 = vlaneseq
        %v1676 = vshrl.u32 %v1675, 7
        %v1677 = vsub.s32 0, %v1676
        %v1678 = vrot.slane %v1632, %v1677
        %v1679 = vlaneseq
        %v1680 = vshrl.u32 %v1679, 7
        %v1681 = vsub.s32 0, %v1680
        %v1682 = vrot.slane %v1633, %v1681
        %v1683 = vlaneseq
        %v1684 = vshrl.u32 %v1683, 7
        %v1685 = vsub.s32 0, %v1684
        %v1686 = vrot.slane %v1634, %v1685
        %v1695 = vadd.f32 %v1658, %v1646
        %v1696 = vadd.f32 %v1662, %v1646
        %v1697 = vadd.f32 %v1666, %v1646
        %v1698 = vadd.f32 %v1670, %v1646
        %v1699 = vadd.f32 %v1674, %v1646
        %v1700 = vadd.f32 %v1678, %v1646
        %v1701 = vadd.f32 %v1682, %v1646
        %v1702 = vadd.f32 %v1686, %v1646
        %1704 = vset.pattern.permute.xlu0 0
        %1705 = vperm.xlu0 %1704, %v1579
        %v1706 = vpop.permute.xlu0 %1705
        %1709 = vset.pattern.permute.xlu0 0
        %1710 = vperm.xlu0 %1709, %v1580
        %v1711 = vpop.permute.xlu0 %1710
        %1714 = vset.pattern.permute.xlu0 0
        %1715 = vperm.xlu0 %1714, %v1581
        %v1716 = vpop.permute.xlu0 %1715
        %1719 = vset.pattern.permute.xlu0 0
        %1720 = vperm.xlu0 %1719, %v1582
        %v1721 = vpop.permute.xlu0 %1720
        %1724 = vset.pattern.permute.xlu0 0
        %1725 = vperm.xlu0 %1724, %v1583
        %v1726 = vpop.permute.xlu0 %1725
        %1729 = vset.pattern.permute.xlu0 0
        %1730 = vperm.xlu0 %1729, %v1584
        %v1731 = vpop.permute.xlu0 %1730
        %1734 = vset.pattern.permute.xlu0 0
        %1735 = vperm.xlu0 %1734, %v1585
        %v1736 = vpop.permute.xlu0 %1735
        %1739 = vset.pattern.permute.xlu0 0
        %1740 = vperm.xlu0 %1739, %v1586
        %v1741 = vpop.permute.xlu0 %1740
        %v1744 = vlaneseq
        %v1745 = vshrl.u32 %v1744, 7
        %v1746 = vsub.s32 0, %v1745
        %v1747 = vrot.slane %v1300, %v1746
        %v1749 = vmul.f32 %v1706, %v1747
        %v1750 = vmul.f32 %v1711, %v1747
        %v1751 = vmul.f32 %v1716, %v1747
        %v1752 = vmul.f32 %v1721, %v1747
        %v1753 = vmul.f32 %v1726, %v1747
        %v1754 = vmul.f32 %v1731, %v1747
        %v1755 = vmul.f32 %v1736, %v1747
        %v1756 = vmul.f32 %v1741, %v1747
        %v1757 = vadd.f32 %v1695, %v1749
        %v1758 = vadd.f32 %v1696, %v1750
        %v1759 = vadd.f32 %v1697, %v1751
        %v1760 = vadd.f32 %v1698, %v1752
        %v1761 = vadd.f32 %v1699, %v1753
        %v1762 = vadd.f32 %v1700, %v1754
        %v1763 = vadd.f32 %v1701, %v1755
        %v1764 = vadd.f32 %v1702, %v1756
        %v1766 = vlaneseq
        %v1767 = vshrl.u32 %v1766, 7
        %v1768 = vsub.s32 0, %v1767
        %v1769 = vrot.slane %v1301, %v1768
        %v1771 = vadd.f32 %v1757, %v1769
        %v1772 = vadd.f32 %v1758, %v1769
        %v1773 = vadd.f32 %v1759, %v1769
        %v1774 = vadd.f32 %v1760, %v1769
        %v1775 = vadd.f32 %v1761, %v1769
        %v1776 = vadd.f32 %v1762, %v1769
        %v1777 = vadd.f32 %v1763, %v1769
        %v1778 = vadd.f32 %v1764, %v1769
        %v1779 = vxor.u32 %v1771, 2147483648
        %v1780 = vxor.u32 %v1772, 2147483648
        %v1781 = vxor.u32 %v1773, 2147483648
        %v1782 = vxor.u32 %v1774, 2147483648
        %v1783 = vxor.u32 %v1775, 2147483648
        %v1784 = vxor.u32 %v1776, 2147483648
        %v1785 = vxor.u32 %v1777, 2147483648
        %v1786 = vxor.u32 %v1778, 2147483648
        %v1787 = vmul.f32 %v1779, 1.442695
        %v1788 = vpow.pop %v1787
        %v1789 = vmul.f32 %v1780, 1.442695
        %v1790 = vpow.pop %v1789
        %v1791 = vmul.f32 %v1781, 1.442695
        %v1792 = vpow.pop %v1791
        %v1793 = vmul.f32 %v1782, 1.442695
        %v1794 = vpow.pop %v1793
        %v1795 = vmul.f32 %v1783, 1.442695
        %v1796 = vpow.pop %v1795
        %v1797 = vmul.f32 %v1784, 1.442695
        %v1798 = vpow.pop %v1797
        %v1799 = vmul.f32 %v1785, 1.442695
        %v1800 = vpow.pop %v1799
        %v1801 = vmul.f32 %v1786, 1.442695
        %v1802 = vpow.pop %v1801
        %v1803 = vadd.f32 %v1788, 1.0
        %v1804 = vadd.f32 %v1790, 1.0
        %v1805 = vadd.f32 %v1792, 1.0
        %v1806 = vadd.f32 %v1794, 1.0
        %v1807 = vadd.f32 %v1796, 1.0
        %v1808 = vadd.f32 %v1798, 1.0
        %v1809 = vadd.f32 %v1800, 1.0
        %v1810 = vadd.f32 %v1802, 1.0
        %v1811 = vrcp.pop %v1803
        %v1812 = vmul.f32 1.0, %v1811
        %v1813 = vrcp.pop %v1804
        %v1814 = vmul.f32 1.0, %v1813
        %v1815 = vrcp.pop %v1805
        %v1816 = vmul.f32 1.0, %v1815
        %v1817 = vrcp.pop %v1806
        %v1818 = vmul.f32 1.0, %v1817
        %v1819 = vrcp.pop %v1807
        %v1820 = vmul.f32 1.0, %v1819
        %v1821 = vrcp.pop %v1808
        %v1822 = vmul.f32 1.0, %v1821
        %v1823 = vrcp.pop %v1809
        %v1824 = vmul.f32 1.0, %v1823
        %v1825 = vrcp.pop %v1810
        %v1826 = vmul.f32 1.0, %v1825
        %v1827 = vmul.f32 %v1771, %v1812
        %v1828 = vmul.f32 %v1772, %v1814
        %v1829 = vmul.f32 %v1773, %v1816
        %v1830 = vmul.f32 %v1774, %v1818
        %v1831 = vmul.f32 %v1775, %v1820
        %v1832 = vmul.f32 %v1776, %v1822
        %v1833 = vmul.f32 %v1777, %v1824
        %v1834 = vmul.f32 %v1778, %v1826
        %v1836 = vlaneseq
        %v1837 = vshrl.u32 %v1836, 7
        %v1838 = vsub.s32 0, %v1837
        %v1839 = vrot.slane %v1318, %v1838
        %1841 = vmatprep.subr.mxu0 0.0
        %1842 = vmatpush1.msra.mxu0 %v1317
        %1843 = vmatprep.subr.mxu0 0.0
        %1844 = vmatpush1.msra.mxu0 %v1316
        %1845 = vmatprep.subr.mxu0 0.0
        %1846 = vmatpush1.msra.mxu0 %v1315
        %1847 = vmatprep.subr.mxu0 0.0
        %1848 = vmatpush1.msra.mxu0 %v1314
        %1849 = vmatprep.subr.mxu0 0.0
        %1850 = vmatpush1.msra.mxu0 %v1313
        %1851 = vmatprep.subr.mxu0 0.0
        %1852 = vmatpush1.msra.mxu0 %v1312
        %1853 = vmatprep.subr.mxu0 0.0
        %1854 = vmatpush1.msra.mxu0 %v1311
        %1855 = vmatprep.subr.mxu0 0.0
        %1856 = vmatpush1.msra.mxu0 %v1310
        %1857 = vmatprep.subr.mxu0 0.0
        %1858 = vmatpush1.msra.mxu0 %v1309
        %1859 = vmatprep.subr.mxu0 0.0
        %1860 = vmatpush1.msra.mxu0 %v1308
        %1861 = vmatprep.subr.mxu0 0.0
        %1862 = vmatpush1.msra.mxu0 %v1307
        %1863 = vmatprep.subr.mxu0 0.0
        %1864 = vmatpush1.msra.mxu0 %v1306
        %1865 = vmatprep.subr.mxu0 0.0
        %1866 = vmatpush1.msra.mxu0 %v1305
        %1867 = vmatprep.subr.mxu0 0.0
        %1868 = vmatpush1.msra.mxu0 %v1304
        %1869 = vmatprep.subr.mxu0 0.0
        %1870 = vmatpush1.msra.mxu0 %v1303
        %1871 = vmatprep.subr.mxu0 0.0
        %1872 = vmatpush1.msra.mxu0 %v1302
        %1873 = vmatprep.subr.mxu0 0.0
        %1874 = vmatpush2.msra.mxu0 0.0
        %1875 = vmatprep.subr.mxu0 0.0
        %1876 = vmatpush2.msra.mxu0 0.0
        %1877 = vmatprep.subr.mxu0 0.0
        %1878 = vmatpush2.msra.mxu0 0.0
        %1879 = vmatprep.subr.mxu0 0.0
        %1880 = vmatpush2.msra.mxu0 0.0
        %1881 = vmatprep.subr.mxu0 0.0
        %1882 = vmatpush2.msra.mxu0 0.0
        %1883 = vmatprep.subr.mxu0 0.0
        %1884 = vmatpush2.msra.mxu0 0.0
        %1885 = vmatprep.subr.mxu0 0.0
        %1886 = vmatpush2.msra.mxu0 0.0
        %1887 = vmatprep.subr.mxu0 0.0
        %1888 = vmatpush2.msra.mxu0 0.0
        %1889 = vmatprep.subr.mxu0 0.0
        %1890 = vmatpush2.msra.mxu0 0.0
        %1891 = vmatprep.subr.mxu0 0.0
        %1892 = vmatpush2.msra.mxu0 0.0
        %1893 = vmatprep.subr.mxu0 0.0
        %1894 = vmatpush2.msra.mxu0 0.0
        %1895 = vmatprep.subr.mxu0 0.0
        %1896 = vmatpush2.msra.mxu0 0.0
        %1897 = vmatprep.subr.mxu0 0.0
        %1898 = vmatpush2.msra.mxu0 0.0
        %1899 = vmatprep.subr.mxu0 0.0
        %1900 = vmatpush2.msra.mxu0 0.0
        %1901 = vmatprep.subr.mxu0 0.0
        %1902 = vmatpush2.msra.mxu0 0.0
        %1903 = vmatprep.subr.mxu0 0.0
        %1904 = vmatpush2.msra.mxu0 0.0
        %1905 = vmatprep.mubr.f32.mxu0 0.0
        %1906 = vmatmul.mubr.f32.gmra.mxu0 %v1827
        %v1907 = vpop.f32.mrf.mxu0
        %v1908 = vadd.f32 %v1839, %v1907
        %v1909 = vpop.f32.mrf.mxu0
        %1910 = vmatprep.mubr.f32.mxu0 0.0
        %1911 = vmatmul.mubr.f32.gmra.mxu0 %v1828
        %v1912 = vpop.f32.mrf.mxu0
        %v1913 = vadd.f32 %v1839, %v1912
        %v1914 = vpop.f32.mrf.mxu0
        %1915 = vmatprep.mubr.f32.mxu0 0.0
        %1916 = vmatmul.mubr.f32.gmra.mxu0 %v1829
        %v1917 = vpop.f32.mrf.mxu0
        %v1918 = vadd.f32 %v1839, %v1917
        %v1919 = vpop.f32.mrf.mxu0
        %1920 = vmatprep.mubr.f32.mxu0 0.0
        %1921 = vmatmul.mubr.f32.gmra.mxu0 %v1830
        %v1922 = vpop.f32.mrf.mxu0
        %v1923 = vadd.f32 %v1839, %v1922
        %v1924 = vpop.f32.mrf.mxu0
        %1925 = vmatprep.mubr.f32.mxu0 0.0
        %1926 = vmatmul.mubr.f32.gmra.mxu0 %v1831
        %v1927 = vpop.f32.mrf.mxu0
        %v1928 = vadd.f32 %v1839, %v1927
        %v1929 = vpop.f32.mrf.mxu0
        %1930 = vmatprep.mubr.f32.mxu0 0.0
        %1931 = vmatmul.mubr.f32.gmra.mxu0 %v1832
        %v1932 = vpop.f32.mrf.mxu0
        %v1933 = vadd.f32 %v1839, %v1932
        %v1934 = vpop.f32.mrf.mxu0
        %1935 = vmatprep.mubr.f32.mxu0 0.0
        %1936 = vmatmul.mubr.f32.gmra.mxu0 %v1833
        %v1937 = vpop.f32.mrf.mxu0
        %v1938 = vadd.f32 %v1839, %v1937
        %v1939 = vpop.f32.mrf.mxu0
        %1940 = vmatprep.mubr.f32.mxu0 0.0
        %1941 = vmatmul.mubr.f32.gmra.mxu0 %v1834
        %v1942 = vpop.f32.mrf.mxu0
        %v1943 = vadd.f32 %v1839, %v1942
        %v1944 = vpop.f32.mrf.mxu0
        %1945 = vdwg.mxu0
        %v1946 = vxor.u32 %v1908, 2147483648
        %v1947 = vxor.u32 %v1913, 2147483648
        %v1948 = vxor.u32 %v1918, 2147483648
        %v1949 = vxor.u32 %v1923, 2147483648
        %v1950 = vxor.u32 %v1928, 2147483648
        %v1951 = vxor.u32 %v1933, 2147483648
        %v1952 = vxor.u32 %v1938, 2147483648
        %v1953 = vxor.u32 %v1943, 2147483648
        %v1954 = vmul.f32 %v1946, 1.442695
        %v1955 = vpow.pop %v1954
        %v1956 = vmul.f32 %v1947, 1.442695
        %v1957 = vpow.pop %v1956
        %v1958 = vmul.f32 %v1948, 1.442695
        %v1959 = vpow.pop %v1958
        %v1960 = vmul.f32 %v1949, 1.442695
        %v1961 = vpow.pop %v1960
        %v1962 = vmul.f32 %v1950, 1.442695
        %v1963 = vpow.pop %v1962
        %v1964 = vmul.f32 %v1951, 1.442695
        %v1965 = vpow.pop %v1964
        %v1966 = vmul.f32 %v1952, 1.442695
        %v1967 = vpow.pop %v1966
        %v1968 = vmul.f32 %v1953, 1.442695
        %v1969 = vpow.pop %v1968
        %v1970 = vadd.f32 %v1955, 1.0
        %v1971 = vadd.f32 %v1957, 1.0
        %v1972 = vadd.f32 %v1959, 1.0
        %v1973 = vadd.f32 %v1961, 1.0
        %v1974 = vadd.f32 %v1963, 1.0
        %v1975 = vadd.f32 %v1965, 1.0
        %v1976 = vadd.f32 %v1967, 1.0
        %v1977 = vadd.f32 %v1969, 1.0
        %v1978 = vrcp.pop %v1970
        %v1979 = vmul.f32 1.0, %v1978
        %v1980 = vrcp.pop %v1971
        %v1981 = vmul.f32 1.0, %v1980
        %v1982 = vrcp.pop %v1972
        %v1983 = vmul.f32 1.0, %v1982
        %v1984 = vrcp.pop %v1973
        %v1985 = vmul.f32 1.0, %v1984
        %v1986 = vrcp.pop %v1974
        %v1987 = vmul.f32 1.0, %v1986
        %v1988 = vrcp.pop %v1975
        %v1989 = vmul.f32 1.0, %v1988
        %v1990 = vrcp.pop %v1976
        %v1991 = vmul.f32 1.0, %v1990
        %v1992 = vrcp.pop %v1977
        %v1993 = vmul.f32 1.0, %v1992
        %v1994 = vmul.f32 %v1908, %v1979
        %v1995 = vmul.f32 %v1913, %v1981
        %v1996 = vmul.f32 %v1918, %v1983
        %v1997 = vmul.f32 %v1923, %v1985
        %v1998 = vmul.f32 %v1928, %v1987
        %v1999 = vmul.f32 %v1933, %v1989
        %v2000 = vmul.f32 %v1938, %v1991
        %v2001 = vmul.f32 %v1943, %v1993
        %v2003 = vlaneseq
        %v2004 = vshrl.u32 %v2003, 7
        %v2005 = vsub.s32 0, %v2004
        %v2006 = vrot.slane %v1319, %v2005
        %v2008 = vmul.f32 %v1994, %v2006
        %v2009 = vmul.f32 %v1995, %v2006
        %v2010 = vmul.f32 %v1996, %v2006
        %v2011 = vmul.f32 %v1997, %v2006
        %v2012 = vmul.f32 %v1998, %v2006
        %v2013 = vmul.f32 %v1999, %v2006
        %v2014 = vmul.f32 %v2000, %v2006
        %v2015 = vmul.f32 %v2001, %v2006
        %2016 = vadd.xlane.f32.xlu0 %v2008
        %v2017 = vpop.xlane.xlu0 %2016
        %2018 = vadd.xlane.f32.xlu0 %v2009
        %v2019 = vpop.xlane.xlu0 %2018
        %2020 = vadd.xlane.f32.xlu0 %v2010
        %v2021 = vpop.xlane.xlu0 %2020
        %2022 = vadd.xlane.f32.xlu0 %v2011
        %v2023 = vpop.xlane.xlu0 %2022
        %2024 = vadd.xlane.f32.xlu0 %v2012
        %v2025 = vpop.xlane.xlu0 %2024
        %2026 = vadd.xlane.f32.xlu0 %v2013
        %v2027 = vpop.xlane.xlu0 %2026
        %2028 = vadd.xlane.f32.xlu0 %v2014
        %v2029 = vpop.xlane.xlu0 %2028
        %2030 = vadd.xlane.f32.xlu0 %v2015
        %v2031 = vpop.xlane.xlu0 %2030
        %v2033 = vlaneseq
        %v2034 = vshrl.u32 %v2033, 7
        %v2035 = vsub.s32 0, %v2034
        %v2036 = vrot.slane %v1320, %v2035
        %v2038 = vadd.f32 %v2017, %v2036
        %v2039 = vadd.f32 %v2019, %v2036
        %v2040 = vadd.f32 %v2021, %v2036
        %v2041 = vadd.f32 %v2023, %v2036
        %v2042 = vadd.f32 %v2025, %v2036
        %v2043 = vadd.f32 %v2027, %v2036
        %v2044 = vadd.f32 %v2029, %v2036
        %v2045 = vadd.f32 %v2031, %v2036
        %v2046 = vxor.u32 %v2038, 2147483648
        %v2047 = vxor.u32 %v2039, 2147483648
        %v2048 = vxor.u32 %v2040, 2147483648
        %v2049 = vxor.u32 %v2041, 2147483648
        %v2050 = vxor.u32 %v2042, 2147483648
        %v2051 = vxor.u32 %v2043, 2147483648
        %v2052 = vxor.u32 %v2044, 2147483648
        %v2053 = vxor.u32 %v2045, 2147483648
        %v2054 = vmul.f32 %v2046, 1.442695
        %v2055 = vpow.pop %v2054
        %v2056 = vmul.f32 %v2047, 1.442695
        %v2057 = vpow.pop %v2056
        %v2058 = vmul.f32 %v2048, 1.442695
        %v2059 = vpow.pop %v2058
        %v2060 = vmul.f32 %v2049, 1.442695
        %v2061 = vpow.pop %v2060
        %v2062 = vmul.f32 %v2050, 1.442695
        %v2063 = vpow.pop %v2062
        %v2064 = vmul.f32 %v2051, 1.442695
        %v2065 = vpow.pop %v2064
        %v2066 = vmul.f32 %v2052, 1.442695
        %v2067 = vpow.pop %v2066
        %v2068 = vmul.f32 %v2053, 1.442695
        %v2069 = vpow.pop %v2068
        %v2070 = vadd.f32 %v2055, 1.0
        %v2071 = vadd.f32 %v2057, 1.0
        %v2072 = vadd.f32 %v2059, 1.0
        %v2073 = vadd.f32 %v2061, 1.0
        %v2074 = vadd.f32 %v2063, 1.0
        %v2075 = vadd.f32 %v2065, 1.0
        %v2076 = vadd.f32 %v2067, 1.0
        %v2077 = vadd.f32 %v2069, 1.0
        %v2078 = vrcp.pop %v2070
        %v2079 = vmul.f32 1.0, %v2078
        %v2080 = vrcp.pop %v2071
        %v2081 = vmul.f32 1.0, %v2080
        %v2082 = vrcp.pop %v2072
        %v2083 = vmul.f32 1.0, %v2082
        %v2084 = vrcp.pop %v2073
        %v2085 = vmul.f32 1.0, %v2084
        %v2086 = vrcp.pop %v2074
        %v2087 = vmul.f32 1.0, %v2086
        %v2088 = vrcp.pop %v2075
        %v2089 = vmul.f32 1.0, %v2088
        %v2090 = vrcp.pop %v2076
        %v2091 = vmul.f32 1.0, %v2090
        %v2092 = vrcp.pop %v2077
        %v2093 = vmul.f32 1.0, %v2092
        %v2094 = vmul.f32 %v2079, %v1394
        %v2095 = vmul.f32 %v2081, %v1395
        %v2096 = vmul.f32 %v2083, %v1396
        %v2097 = vmul.f32 %v2085, %v1397
        %v2098 = vmul.f32 %v2087, %v1398
        %v2099 = vmul.f32 %v2089, %v1399
        %v2100 = vmul.f32 %v2091, %v1400
        %v2101 = vmul.f32 %v2093, %v1401
        %2103 = vset.pattern.permute.xlu0 0
        %2104 = vperm.xlu0 %2103, %v2094
        %v2105 = vpop.permute.xlu0 %2104
        %2108 = vset.pattern.permute.xlu0 0
        %2109 = vperm.xlu0 %2108, %v2095
        %v2110 = vpop.permute.xlu0 %2109
        %2113 = vset.pattern.permute.xlu0 0
        %2114 = vperm.xlu0 %2113, %v2096
        %v2115 = vpop.permute.xlu0 %2114
        %2118 = vset.pattern.permute.xlu0 0
        %2119 = vperm.xlu0 %2118, %v2097
        %v2120 = vpop.permute.xlu0 %2119
        %2123 = vset.pattern.permute.xlu0 0
        %2124 = vperm.xlu0 %2123, %v2098
        %v2125 = vpop.permute.xlu0 %2124
        %2128 = vset.pattern.permute.xlu0 0
        %2129 = vperm.xlu0 %2128, %v2099
        %v2130 = vpop.permute.xlu0 %2129
        %2133 = vset.pattern.permute.xlu0 0
        %2134 = vperm.xlu0 %2133, %v2100
        %v2135 = vpop.permute.xlu0 %2134
        %2138 = vset.pattern.permute.xlu0 0
        %2139 = vperm.xlu0 %2138, %v2101
        %v2140 = vpop.permute.xlu0 %2139
        %v2142 = vmul.f32 %v1994, %v2105
        %v2143 = vmul.f32 %v1995, %v2110
        %v2144 = vmul.f32 %v1996, %v2115
        %v2145 = vmul.f32 %v1997, %v2120
        %v2146 = vmul.f32 %v1998, %v2125
        %v2147 = vmul.f32 %v1999, %v2130
        %v2148 = vmul.f32 %v2000, %v2135
        %v2149 = vmul.f32 %v2001, %v2140
        %v2151 = vlaneseq
        %v2152 = vshrl.u32 %v2151, 7
        %v2153 = vsub.s32 0, %v2152
        %v2154 = vrot.slane %v1337, %v2153
        %2156 = vmatprep.subr.mxu0 0.0
        %2157 = vmatpush1.msra.mxu0 %v1336
        %2158 = vmatprep.subr.mxu0 0.0
        %2159 = vmatpush1.msra.mxu0 %v1335
        %2160 = vmatprep.subr.mxu0 0.0
        %2161 = vmatpush1.msra.mxu0 %v1334
        %2162 = vmatprep.subr.mxu0 0.0
        %2163 = vmatpush1.msra.mxu0 %v1333
        %2164 = vmatprep.subr.mxu0 0.0
        %2165 = vmatpush1.msra.mxu0 %v1332
        %2166 = vmatprep.subr.mxu0 0.0
        %2167 = vmatpush1.msra.mxu0 %v1331
        %2168 = vmatprep.subr.mxu0 0.0
        %2169 = vmatpush1.msra.mxu0 %v1330
        %2170 = vmatprep.subr.mxu0 0.0
        %2171 = vmatpush1.msra.mxu0 %v1329
        %2172 = vmatprep.subr.mxu0 0.0
        %2173 = vmatpush1.msra.mxu0 %v1328
        %2174 = vmatprep.subr.mxu0 0.0
        %2175 = vmatpush1.msra.mxu0 %v1327
        %2176 = vmatprep.subr.mxu0 0.0
        %2177 = vmatpush1.msra.mxu0 %v1326
        %2178 = vmatprep.subr.mxu0 0.0
        %2179 = vmatpush1.msra.mxu0 %v1325
        %2180 = vmatprep.subr.mxu0 0.0
        %2181 = vmatpush1.msra.mxu0 %v1324
        %2182 = vmatprep.subr.mxu0 0.0
        %2183 = vmatpush1.msra.mxu0 %v1323
        %2184 = vmatprep.subr.mxu0 0.0
        %2185 = vmatpush1.msra.mxu0 %v1322
        %2186 = vmatprep.subr.mxu0 0.0
        %2187 = vmatpush1.msra.mxu0 %v1321
        %2188 = vmatprep.subr.mxu0 0.0
        %2189 = vmatpush2.msra.mxu0 0.0
        %2190 = vmatprep.subr.mxu0 0.0
        %2191 = vmatpush2.msra.mxu0 0.0
        %2192 = vmatprep.subr.mxu0 0.0
        %2193 = vmatpush2.msra.mxu0 0.0
        %2194 = vmatprep.subr.mxu0 0.0
        %2195 = vmatpush2.msra.mxu0 0.0
        %2196 = vmatprep.subr.mxu0 0.0
        %2197 = vmatpush2.msra.mxu0 0.0
        %2198 = vmatprep.subr.mxu0 0.0
        %2199 = vmatpush2.msra.mxu0 0.0
        %2200 = vmatprep.subr.mxu0 0.0
        %2201 = vmatpush2.msra.mxu0 0.0
        %2202 = vmatprep.subr.mxu0 0.0
        %2203 = vmatpush2.msra.mxu0 0.0
        %2204 = vmatprep.subr.mxu0 0.0
        %2205 = vmatpush2.msra.mxu0 0.0
        %2206 = vmatprep.subr.mxu0 0.0
        %2207 = vmatpush2.msra.mxu0 0.0
        %2208 = vmatprep.subr.mxu0 0.0
        %2209 = vmatpush2.msra.mxu0 0.0
        %2210 = vmatprep.subr.mxu0 0.0
        %2211 = vmatpush2.msra.mxu0 0.0
        %2212 = vmatprep.subr.mxu0 0.0
        %2213 = vmatpush2.msra.mxu0 0.0
        %2214 = vmatprep.subr.mxu0 0.0
        %2215 = vmatpush2.msra.mxu0 0.0
        %2216 = vmatprep.subr.mxu0 0.0
        %2217 = vmatpush2.msra.mxu0 0.0
        %2218 = vmatprep.subr.mxu0 0.0
        %2219 = vmatpush2.msra.mxu0 0.0
        %2220 = vmatprep.mubr.f32.mxu0 0.0
        %2221 = vmatmul.mubr.f32.gmra.mxu0 %v2142
        %v2222 = vpop.f32.mrf.mxu0
        %v2223 = vadd.f32 %v2154, %v2222
        %v2224 = vpop.f32.mrf.mxu0
        %2225 = vmatprep.mubr.f32.mxu0 0.0
        %2226 = vmatmul.mubr.f32.gmra.mxu0 %v2143
        %v2227 = vpop.f32.mrf.mxu0
        %v2228 = vadd.f32 %v2154, %v2227
        %v2229 = vpop.f32.mrf.mxu0
        %2230 = vmatprep.mubr.f32.mxu0 0.0
        %2231 = vmatmul.mubr.f32.gmra.mxu0 %v2144
        %v2232 = vpop.f32.mrf.mxu0
        %v2233 = vadd.f32 %v2154, %v2232
        %v2234 = vpop.f32.mrf.mxu0
        %2235 = vmatprep.mubr.f32.mxu0 0.0
        %2236 = vmatmul.mubr.f32.gmra.mxu0 %v2145
        %v2237 = vpop.f32.mrf.mxu0
        %v2238 = vadd.f32 %v2154, %v2237
        %v2239 = vpop.f32.mrf.mxu0
        %2240 = vmatprep.mubr.f32.mxu0 0.0
        %2241 = vmatmul.mubr.f32.gmra.mxu0 %v2146
        %v2242 = vpop.f32.mrf.mxu0
        %v2243 = vadd.f32 %v2154, %v2242
        %v2244 = vpop.f32.mrf.mxu0
        %2245 = vmatprep.mubr.f32.mxu0 0.0
        %2246 = vmatmul.mubr.f32.gmra.mxu0 %v2147
        %v2247 = vpop.f32.mrf.mxu0
        %v2248 = vadd.f32 %v2154, %v2247
        %v2249 = vpop.f32.mrf.mxu0
        %2250 = vmatprep.mubr.f32.mxu0 0.0
        %2251 = vmatmul.mubr.f32.gmra.mxu0 %v2148
        %v2252 = vpop.f32.mrf.mxu0
        %v2253 = vadd.f32 %v2154, %v2252
        %v2254 = vpop.f32.mrf.mxu0
        %2255 = vmatprep.mubr.f32.mxu0 0.0
        %2256 = vmatmul.mubr.f32.gmra.mxu0 %v2149
        %v2257 = vpop.f32.mrf.mxu0
        %v2258 = vadd.f32 %v2154, %v2257
        %v2259 = vpop.f32.mrf.mxu0
        %2260 = vdwg.mxu0
        %v2261 = vxor.u32 %v2223, 2147483648
        %v2262 = vxor.u32 %v2228, 2147483648
        %v2263 = vxor.u32 %v2233, 2147483648
        %v2264 = vxor.u32 %v2238, 2147483648
        %v2265 = vxor.u32 %v2243, 2147483648
        %v2266 = vxor.u32 %v2248, 2147483648
        %v2267 = vxor.u32 %v2253, 2147483648
        %v2268 = vxor.u32 %v2258, 2147483648
        %v2269 = vmul.f32 %v2261, 1.442695
        %v2270 = vpow.pop %v2269
        %v2271 = vmul.f32 %v2262, 1.442695
        %v2272 = vpow.pop %v2271
        %v2273 = vmul.f32 %v2263, 1.442695
        %v2274 = vpow.pop %v2273
        %v2275 = vmul.f32 %v2264, 1.442695
        %v2276 = vpow.pop %v2275
        %v2277 = vmul.f32 %v2265, 1.442695
        %v2278 = vpow.pop %v2277
        %v2279 = vmul.f32 %v2266, 1.442695
        %v2280 = vpow.pop %v2279
        %v2281 = vmul.f32 %v2267, 1.442695
        %v2282 = vpow.pop %v2281
        %v2283 = vmul.f32 %v2268, 1.442695
        %v2284 = vpow.pop %v2283
        %v2285 = vadd.f32 %v2270, 1.0
        %v2286 = vadd.f32 %v2272, 1.0
        %v2287 = vadd.f32 %v2274, 1.0
        %v2288 = vadd.f32 %v2276, 1.0
        %v2289 = vadd.f32 %v2278, 1.0
        %v2290 = vadd.f32 %v2280, 1.0
        %v2291 = vadd.f32 %v2282, 1.0
        %v2292 = vadd.f32 %v2284, 1.0
        %v2293 = vrcp.pop %v2285
        %v2294 = vmul.f32 1.0, %v2293
        %v2295 = vrcp.pop %v2286
        %v2296 = vmul.f32 1.0, %v2295
        %v2297 = vrcp.pop %v2287
        %v2298 = vmul.f32 1.0, %v2297
        %v2299 = vrcp.pop %v2288
        %v2300 = vmul.f32 1.0, %v2299
        %v2301 = vrcp.pop %v2289
        %v2302 = vmul.f32 1.0, %v2301
        %v2303 = vrcp.pop %v2290
        %v2304 = vmul.f32 1.0, %v2303
        %v2305 = vrcp.pop %v2291
        %v2306 = vmul.f32 1.0, %v2305
        %v2307 = vrcp.pop %v2292
        %v2308 = vmul.f32 1.0, %v2307
        %v2309 = vmul.f32 %v2223, %v2294
        %v2310 = vmul.f32 %v2228, %v2296
        %v2311 = vmul.f32 %v2233, %v2298
        %v2312 = vmul.f32 %v2238, %v2300
        %v2313 = vmul.f32 %v2243, %v2302
        %v2314 = vmul.f32 %v2248, %v2304
        %v2315 = vmul.f32 %v2253, %v2306
        %v2316 = vmul.f32 %v2258, %v2308
        %v2318 = vlaneseq
        %v2319 = vshrl.u32 %v2318, 7
        %v2320 = vsub.s32 0, %v2319
        %v2321 = vrot.slane %v1354, %v2320
        %2323 = vmatprep.subr.mxu0 0.0
        %2324 = vmatpush1.msra.mxu0 %v1353
        %2325 = vmatprep.subr.mxu0 0.0
        %2326 = vmatpush1.msra.mxu0 %v1352
        %2327 = vmatprep.subr.mxu0 0.0
        %2328 = vmatpush1.msra.mxu0 %v1351
        %2329 = vmatprep.subr.mxu0 0.0
        %2330 = vmatpush1.msra.mxu0 %v1350
        %2331 = vmatprep.subr.mxu0 0.0
        %2332 = vmatpush1.msra.mxu0 %v1349
        %2333 = vmatprep.subr.mxu0 0.0
        %2334 = vmatpush1.msra.mxu0 %v1348
        %2335 = vmatprep.subr.mxu0 0.0
        %2336 = vmatpush1.msra.mxu0 %v1347
        %2337 = vmatprep.subr.mxu0 0.0
        %2338 = vmatpush1.msra.mxu0 %v1346
        %2339 = vmatprep.subr.mxu0 0.0
        %2340 = vmatpush1.msra.mxu0 %v1345
        %2341 = vmatprep.subr.mxu0 0.0
        %2342 = vmatpush1.msra.mxu0 %v1344
        %2343 = vmatprep.subr.mxu0 0.0
        %2344 = vmatpush1.msra.mxu0 %v1343
        %2345 = vmatprep.subr.mxu0 0.0
        %2346 = vmatpush1.msra.mxu0 %v1342
        %2347 = vmatprep.subr.mxu0 0.0
        %2348 = vmatpush1.msra.mxu0 %v1341
        %2349 = vmatprep.subr.mxu0 0.0
        %2350 = vmatpush1.msra.mxu0 %v1340
        %2351 = vmatprep.subr.mxu0 0.0
        %2352 = vmatpush1.msra.mxu0 %v1339
        %2353 = vmatprep.subr.mxu0 0.0
        %2354 = vmatpush1.msra.mxu0 %v1338
        %2355 = vmatprep.subr.mxu0 0.0
        %2356 = vmatpush2.msra.mxu0 0.0
        %2357 = vmatprep.subr.mxu0 0.0
        %2358 = vmatpush2.msra.mxu0 0.0
        %2359 = vmatprep.subr.mxu0 0.0
        %2360 = vmatpush2.msra.mxu0 0.0
        %2361 = vmatprep.subr.mxu0 0.0
        %2362 = vmatpush2.msra.mxu0 0.0
        %2363 = vmatprep.subr.mxu0 0.0
        %2364 = vmatpush2.msra.mxu0 0.0
        %2365 = vmatprep.subr.mxu0 0.0
        %2366 = vmatpush2.msra.mxu0 0.0
        %2367 = vmatprep.subr.mxu0 0.0
        %2368 = vmatpush2.msra.mxu0 0.0
        %2369 = vmatprep.subr.mxu0 0.0
        %2370 = vmatpush2.msra.mxu0 0.0
        %2371 = vmatprep.subr.mxu0 0.0
        %2372 = vmatpush2.msra.mxu0 0.0
        %2373 = vmatprep.subr.mxu0 0.0
        %2374 = vmatpush2.msra.mxu0 0.0
        %2375 = vmatprep.subr.mxu0 0.0
        %2376 = vmatpush2.msra.mxu0 0.0
        %2377 = vmatprep.subr.mxu0 0.0
        %2378 = vmatpush2.msra.mxu0 0.0
        %2379 = vmatprep.subr.mxu0 0.0
        %2380 = vmatpush2.msra.mxu0 0.0
        %2381 = vmatprep.subr.mxu0 0.0
        %2382 = vmatpush2.msra.mxu0 0.0
        %2383 = vmatprep.subr.mxu0 0.0
        %2384 = vmatpush2.msra.mxu0 0.0
        %2385 = vmatprep.subr.mxu0 0.0
        %2386 = vmatpush2.msra.mxu0 0.0
        %2387 = vmatprep.mubr.f32.mxu0 0.0
        %2388 = vmatmul.mubr.f32.gmra.mxu0 %v2309
        %v2389 = vpop.f32.mrf.mxu0
        %v2390 = vadd.f32 %v2321, %v2389
        %v2391 = vpop.f32.mrf.mxu0
        %2392 = vmatprep.mubr.f32.mxu0 0.0
        %2393 = vmatmul.mubr.f32.gmra.mxu0 %v2310
        %v2394 = vpop.f32.mrf.mxu0
        %v2395 = vadd.f32 %v2321, %v2394
        %v2396 = vpop.f32.mrf.mxu0
        %2397 = vmatprep.mubr.f32.mxu0 0.0
        %2398 = vmatmul.mubr.f32.gmra.mxu0 %v2311
        %v2399 = vpop.f32.mrf.mxu0
        %v2400 = vadd.f32 %v2321, %v2399
        %v2401 = vpop.f32.mrf.mxu0
        %2402 = vmatprep.mubr.f32.mxu0 0.0
        %2403 = vmatmul.mubr.f32.gmra.mxu0 %v2312
        %v2404 = vpop.f32.mrf.mxu0
        %v2405 = vadd.f32 %v2321, %v2404
        %v2406 = vpop.f32.mrf.mxu0
        %2407 = vmatprep.mubr.f32.mxu0 0.0
        %2408 = vmatmul.mubr.f32.gmra.mxu0 %v2313
        %v2409 = vpop.f32.mrf.mxu0
        %v2410 = vadd.f32 %v2321, %v2409
        %v2411 = vpop.f32.mrf.mxu0
        %2412 = vmatprep.mubr.f32.mxu0 0.0
        %2413 = vmatmul.mubr.f32.gmra.mxu0 %v2314
        %v2414 = vpop.f32.mrf.mxu0
        %v2415 = vadd.f32 %v2321, %v2414
        %v2416 = vpop.f32.mrf.mxu0
        %2417 = vmatprep.mubr.f32.mxu0 0.0
        %2418 = vmatmul.mubr.f32.gmra.mxu0 %v2315
        %v2419 = vpop.f32.mrf.mxu0
        %v2420 = vadd.f32 %v2321, %v2419
        %v2421 = vpop.f32.mrf.mxu0
        %2422 = vmatprep.mubr.f32.mxu0 0.0
        %2423 = vmatmul.mubr.f32.gmra.mxu0 %v2316
        %v2424 = vpop.f32.mrf.mxu0
        %v2425 = vadd.f32 %v2321, %v2424
        %v2426 = vpop.f32.mrf.mxu0
        %2427 = vdwg.mxu0
        %v2428 = vxor.u32 %v2390, 2147483648
        %v2429 = vxor.u32 %v2395, 2147483648
        %v2430 = vxor.u32 %v2400, 2147483648
        %v2431 = vxor.u32 %v2405, 2147483648
        %v2432 = vxor.u32 %v2410, 2147483648
        %v2433 = vxor.u32 %v2415, 2147483648
        %v2434 = vxor.u32 %v2420, 2147483648
        %v2435 = vxor.u32 %v2425, 2147483648
        %v2436 = vmul.f32 %v2428, 1.442695
        %v2437 = vpow.pop %v2436
        %v2438 = vmul.f32 %v2429, 1.442695
        %v2439 = vpow.pop %v2438
        %v2440 = vmul.f32 %v2430, 1.442695
        %v2441 = vpow.pop %v2440
        %v2442 = vmul.f32 %v2431, 1.442695
        %v2443 = vpow.pop %v2442
        %v2444 = vmul.f32 %v2432, 1.442695
        %v2445 = vpow.pop %v2444
        %v2446 = vmul.f32 %v2433, 1.442695
        %v2447 = vpow.pop %v2446
        %v2448 = vmul.f32 %v2434, 1.442695
        %v2449 = vpow.pop %v2448
        %v2450 = vmul.f32 %v2435, 1.442695
        %v2451 = vpow.pop %v2450
        %v2452 = vadd.f32 %v2437, 1.0
        %v2453 = vadd.f32 %v2439, 1.0
        %v2454 = vadd.f32 %v2441, 1.0
        %v2455 = vadd.f32 %v2443, 1.0
        %v2456 = vadd.f32 %v2445, 1.0
        %v2457 = vadd.f32 %v2447, 1.0
        %v2458 = vadd.f32 %v2449, 1.0
        %v2459 = vadd.f32 %v2451, 1.0
        %v2460 = vrcp.pop %v2452
        %v2461 = vmul.f32 1.0, %v2460
        %v2462 = vrcp.pop %v2453
        %v2463 = vmul.f32 1.0, %v2462
        %v2464 = vrcp.pop %v2454
        %v2465 = vmul.f32 1.0, %v2464
        %v2466 = vrcp.pop %v2455
        %v2467 = vmul.f32 1.0, %v2466
        %v2468 = vrcp.pop %v2456
        %v2469 = vmul.f32 1.0, %v2468
        %v2470 = vrcp.pop %v2457
        %v2471 = vmul.f32 1.0, %v2470
        %v2472 = vrcp.pop %v2458
        %v2473 = vmul.f32 1.0, %v2472
        %v2474 = vrcp.pop %v2459
        %v2475 = vmul.f32 1.0, %v2474
        %v2476 = vmul.f32 %v2390, %v2461
        %v2477 = vmul.f32 %v2395, %v2463
        %v2478 = vmul.f32 %v2400, %v2465
        %v2479 = vmul.f32 %v2405, %v2467
        %v2480 = vmul.f32 %v2410, %v2469
        %v2481 = vmul.f32 %v2415, %v2471
        %v2482 = vmul.f32 %v2420, %v2473
        %v2483 = vmul.f32 %v2425, %v2475
        %v2485 = vlaneseq
        %v2486 = vshrl.u32 %v2485, 7
        %v2487 = vsub.s32 0, %v2486
        %v2488 = vrot.slane %v1355, %v2487
        %v2490 = vmul.f32 %v2476, %v2488
        %v2491 = vmul.f32 %v2477, %v2488
        %v2492 = vmul.f32 %v2478, %v2488
        %v2493 = vmul.f32 %v2479, %v2488
        %v2494 = vmul.f32 %v2480, %v2488
        %v2495 = vmul.f32 %v2481, %v2488
        %v2496 = vmul.f32 %v2482, %v2488
        %v2497 = vmul.f32 %v2483, %v2488
        %2498 = vadd.xlane.f32.xlu0 %v2490
        %v2499 = vpop.xlane.xlu0 %2498
        %2500 = vadd.xlane.f32.xlu0 %v2491
        %v2501 = vpop.xlane.xlu0 %2500
        %2502 = vadd.xlane.f32.xlu0 %v2492
        %v2503 = vpop.xlane.xlu0 %2502
        %2504 = vadd.xlane.f32.xlu0 %v2493
        %v2505 = vpop.xlane.xlu0 %2504
        %2506 = vadd.xlane.f32.xlu0 %v2494
        %v2507 = vpop.xlane.xlu0 %2506
        %2508 = vadd.xlane.f32.xlu0 %v2495
        %v2509 = vpop.xlane.xlu0 %2508
        %2510 = vadd.xlane.f32.xlu0 %v2496
        %v2511 = vpop.xlane.xlu0 %2510
        %2512 = vadd.xlane.f32.xlu0 %v2497
        %v2513 = vpop.xlane.xlu0 %2512
        %v2515 = vlaneseq
        %v2516 = vshrl.u32 %v2515, 7
        %v2517 = vsub.s32 0, %v2516
        %v2518 = vrot.slane %v1356, %v2517
        %v2520 = vadd.f32 %v2499, %v2518
        %v2521 = vadd.f32 %v2501, %v2518
        %v2522 = vadd.f32 %v2503, %v2518
        %v2523 = vadd.f32 %v2505, %v2518
        %v2524 = vadd.f32 %v2507, %v2518
        %v2525 = vadd.f32 %v2509, %v2518
        %v2526 = vadd.f32 %v2511, %v2518
        %v2527 = vadd.f32 %v2513, %v2518
        %v2528 = vadd.f32 %v1579, 6.2831855
        %v2529 = vadd.f32 %v1580, 6.2831855
        %v2530 = vadd.f32 %v1581, 6.2831855
        %v2531 = vadd.f32 %v1582, 6.2831855
        %v2532 = vadd.f32 %v1583, 6.2831855
        %v2533 = vadd.f32 %v1584, 6.2831855
        %v2534 = vadd.f32 %v1585, 6.2831855
        %v2535 = vadd.f32 %v1586, 6.2831855
        %v2536 = vrcp.pop %v2528
        %v2537 = vrcp.pop %v2529
        %v2538 = vrcp.pop %v2530
        %v2539 = vrcp.pop %v2531
        %v2540 = vrcp.pop %v2532
        %v2541 = vrcp.pop %v2533
        %v2542 = vrcp.pop %v2534
        %v2543 = vrcp.pop %v2535
        %v2544 = vmul.f32 %v2520, %v1571
        %v2545 = vmul.f32 %v2521, %v1572
        %v2546 = vmul.f32 %v2522, %v1573
        %v2547 = vmul.f32 %v2523, %v1574
        %v2548 = vmul.f32 %v2524, %v1575
        %v2549 = vmul.f32 %v2525, %v1576
        %v2550 = vmul.f32 %v2526, %v1577
        %v2551 = vmul.f32 %v2527, %v1578
        %v2552 = vmul.f32 %v2544, %v2536
        %v2553 = vmul.f32 %v2545, %v2537
        %v2554 = vmul.f32 %v2546, %v2538
        %v2555 = vmul.f32 %v2547, %v2539
        %v2556 = vmul.f32 %v2548, %v2540
        %v2557 = vmul.f32 %v2549, %v2541
        %v2558 = vmul.f32 %v2550, %v2542
        %v2559 = vmul.f32 %v2551, %v2543
        %v2560 = vsel %vm1418, %v2552, 0.0
        %v2561 = vrot.slane %v2560, 4
        %v2562 = vadd.f32 %v2560, %v2561
        %v2563 = vrot.slane %v2562, 2
        %v2564 = vadd.f32 %v2562, %v2563
        %v2565 = vrot.slane %v2564, 1
        %v2566 = vadd.f32 %v2564, %v2565
        %v2567 = vsel %vm1418, %v2553, 0.0
        %v2568 = vrot.slane %v2567, 4
        %v2569 = vadd.f32 %v2567, %v2568
        %v2570 = vrot.slane %v2569, 2
        %v2571 = vadd.f32 %v2569, %v2570
        %v2572 = vrot.slane %v2571, 1
        %v2573 = vadd.f32 %v2571, %v2572
        %v2574 = vsel %vm1418, %v2554, 0.0
        %v2575 = vrot.slane %v2574, 4
        %v2576 = vadd.f32 %v2574, %v2575
        %v2577 = vrot.slane %v2576, 2
        %v2578 = vadd.f32 %v2576, %v2577
        %v2579 = vrot.slane %v2578, 1
        %v2580 = vadd.f32 %v2578, %v2579
        %v2581 = vsel %vm1418, %v2555, 0.0
        %v2582 = vrot.slane %v2581, 4
        %v2583 = vadd.f32 %v2581, %v2582
        %v2584 = vrot.slane %v2583, 2
        %v2585 = vadd.f32 %v2583, %v2584
        %v2586 = vrot.slane %v2585, 1
        %v2587 = vadd.f32 %v2585, %v2586
        %v2588 = vsel %vm1418, %v2556, 0.0
        %v2589 = vrot.slane %v2588, 4
        %v2590 = vadd.f32 %v2588, %v2589
        %v2591 = vrot.slane %v2590, 2
        %v2592 = vadd.f32 %v2590, %v2591
        %v2593 = vrot.slane %v2592, 1
        %v2594 = vadd.f32 %v2592, %v2593
        %v2595 = vsel %vm1418, %v2557, 0.0
        %v2596 = vrot.slane %v2595, 4
        %v2597 = vadd.f32 %v2595, %v2596
        %v2598 = vrot.slane %v2597, 2
        %v2599 = vadd.f32 %v2597, %v2598
        %v2600 = vrot.slane %v2599, 1
        %v2601 = vadd.f32 %v2599, %v2600
        %v2602 = vsel %vm1418, %v2558, 0.0
        %v2603 = vrot.slane %v2602, 4
        %v2604 = vadd.f32 %v2602, %v2603
        %v2605 = vrot.slane %v2604, 2
        %v2606 = vadd.f32 %v2604, %v2605
        %v2607 = vrot.slane %v2606, 1
        %v2608 = vadd.f32 %v2606, %v2607
        %v2609 = vsel %vm1418, %v2559, 0.0
        %v2610 = vrot.slane %v2609, 4
        %v2611 = vadd.f32 %v2609, %v2610
        %v2612 = vrot.slane %v2611, 2
        %v2613 = vadd.f32 %v2611, %v2612
        %v2614 = vrot.slane %v2613, 1
        %v2615 = vadd.f32 %v2613, %v2614
        %v2617 = vrot.slane %v1295, 1
        %v2618 = vrot.slane %v1295, 2
        %v2619 = vrot.slane %v1295, 3
        %v2620 = vrot.slane %v1295, 4
        %v2621 = vrot.slane %v1295, 5
        %v2622 = vrot.slane %v1295, 6
        %v2623 = vrot.slane %v1295, 7
        %v2632 = vadd.f32 %v2566, %v1295
        %v2633 = vadd.f32 %v2573, %v2617
        %v2634 = vadd.f32 %v2580, %v2618
        %v2635 = vadd.f32 %v2587, %v2619
        %v2636 = vadd.f32 %v2594, %v2620
        %v2637 = vadd.f32 %v2601, %v2621
        %v2638 = vadd.f32 %v2608, %v2622
        %v2639 = vadd.f32 %v2615, %v2623
        %v2640 = vrot.slane %v2142, 4
        %v2641 = vadd.f32 %v2142, %v2640
        %v2642 = vrot.slane %v2641, 2
        %v2643 = vadd.f32 %v2641, %v2642
        %v2644 = vrot.slane %v2643, 1
        %v2645 = vadd.f32 %v2643, %v2644
        %v2646 = vrot.slane %v2143, 4
        %v2647 = vadd.f32 %v2143, %v2646
        %v2648 = vrot.slane %v2647, 2
        %v2649 = vadd.f32 %v2647, %v2648
        %v2650 = vrot.slane %v2649, 1
        %v2651 = vadd.f32 %v2649, %v2650
        %v2652 = vrot.slane %v2144, 4
        %v2653 = vadd.f32 %v2144, %v2652
        %v2654 = vrot.slane %v2653, 2
        %v2655 = vadd.f32 %v2653, %v2654
        %v2656 = vrot.slane %v2655, 1
        %v2657 = vadd.f32 %v2655, %v2656
        %v2658 = vrot.slane %v2145, 4
        %v2659 = vadd.f32 %v2145, %v2658
        %v2660 = vrot.slane %v2659, 2
        %v2661 = vadd.f32 %v2659, %v2660
        %v2662 = vrot.slane %v2661, 1
        %v2663 = vadd.f32 %v2661, %v2662
        %v2664 = vrot.slane %v2146, 4
        %v2665 = vadd.f32 %v2146, %v2664
        %v2666 = vrot.slane %v2665, 2
        %v2667 = vadd.f32 %v2665, %v2666
        %v2668 = vrot.slane %v2667, 1
        %v2669 = vadd.f32 %v2667, %v2668
        %v2670 = vrot.slane %v2147, 4
        %v2671 = vadd.f32 %v2147, %v2670
        %v2672 = vrot.slane %v2671, 2
        %v2673 = vadd.f32 %v2671, %v2672
        %v2674 = vrot.slane %v2673, 1
        %v2675 = vadd.f32 %v2673, %v2674
        %v2676 = vrot.slane %v2148, 4
        %v2677 = vadd.f32 %v2148, %v2676
        %v2678 = vrot.slane %v2677, 2
        %v2679 = vadd.f32 %v2677, %v2678
        %v2680 = vrot.slane %v2679, 1
        %v2681 = vadd.f32 %v2679, %v2680
        %v2682 = vrot.slane %v2149, 4
        %v2683 = vadd.f32 %v2149, %v2682
        %v2684 = vrot.slane %v2683, 2
        %v2685 = vadd.f32 %v2683, %v2684
        %v2686 = vrot.slane %v2685, 1
        %v2687 = vadd.f32 %v2685, %v2686
        %2689 = vset.pattern.permute.xlu0 0
        %2690 = vperm.xlu0 %2689, %v1297
        %v2691 = vpop.permute.xlu0 %2690
        %v2694 = vlaneseq
        %v2695 = vshrl.u32 %v2694, 7
        %v2696 = vsub.s32 0, %v2695
        %v2697 = vrot.slane %v1357, %v2696
        %v2699 = vmul.f32 %v2691, %v2697
        %vm2708 = vcmask 1041409
        %v2709 = vsel %vm2708, %v2651, %v2645
        %vm2710 = vcmask 1042434
        %v2711 = vsel %vm2710, %v2657, %v2709
        %vm2712 = vcmask 1043459
        %v2713 = vsel %vm2712, %v2663, %v2711
        %vm2714 = vcmask 1044484
        %v2715 = vsel %vm2714, %v2669, %v2713
        %vm2716 = vcmask 1045509
        %v2717 = vsel %vm2716, %v2675, %v2715
        %vm2718 = vcmask 1046534
        %v2719 = vsel %vm2718, %v2681, %v2717
        %vm2720 = vcmask 1047559
        %v2721 = vsel %vm2720, %v2687, %v2719
        %2723 = vmatprep.subr.mxu0 0.0
        %2724 = vmatpush1.msra.mxu0 %v1373
        %2725 = vmatprep.subr.mxu0 0.0
        %2726 = vmatpush1.msra.mxu0 %v1372
        %2727 = vmatprep.subr.mxu0 0.0
        %2728 = vmatpush1.msra.mxu0 %v1371
        %2729 = vmatprep.subr.mxu0 0.0
        %2730 = vmatpush1.msra.mxu0 %v1370
        %2731 = vmatprep.subr.mxu0 0.0
        %2732 = vmatpush1.msra.mxu0 %v1369
        %2733 = vmatprep.subr.mxu0 0.0
        %2734 = vmatpush1.msra.mxu0 %v1368
        %2735 = vmatprep.subr.mxu0 0.0
        %2736 = vmatpush1.msra.mxu0 %v1367
        %2737 = vmatprep.subr.mxu0 0.0
        %2738 = vmatpush1.msra.mxu0 %v1366
        %2739 = vmatprep.subr.mxu0 0.0
        %2740 = vmatpush1.msra.mxu0 %v1365
        %2741 = vmatprep.subr.mxu0 0.0
        %2742 = vmatpush1.msra.mxu0 %v1364
        %2743 = vmatprep.subr.mxu0 0.0
        %2744 = vmatpush1.msra.mxu0 %v1363
        %2745 = vmatprep.subr.mxu0 0.0
        %2746 = vmatpush1.msra.mxu0 %v1362
        %2747 = vmatprep.subr.mxu0 0.0
        %2748 = vmatpush1.msra.mxu0 %v1361
        %2749 = vmatprep.subr.mxu0 0.0
        %2750 = vmatpush1.msra.mxu0 %v1360
        %2751 = vmatprep.subr.mxu0 0.0
        %2752 = vmatpush1.msra.mxu0 %v1359
        %2753 = vmatprep.subr.mxu0 0.0
        %2754 = vmatpush1.msra.mxu0 %v1358
        %2755 = vmatprep.subr.mxu0 0.0
        %2756 = vmatpush2.msra.mxu0 0.0
        %2757 = vmatprep.subr.mxu0 0.0
        %2758 = vmatpush2.msra.mxu0 0.0
        %2759 = vmatprep.subr.mxu0 0.0
        %2760 = vmatpush2.msra.mxu0 0.0
        %2761 = vmatprep.subr.mxu0 0.0
        %2762 = vmatpush2.msra.mxu0 0.0
        %2763 = vmatprep.subr.mxu0 0.0
        %2764 = vmatpush2.msra.mxu0 0.0
        %2765 = vmatprep.subr.mxu0 0.0
        %2766 = vmatpush2.msra.mxu0 0.0
        %2767 = vmatprep.subr.mxu0 0.0
        %2768 = vmatpush2.msra.mxu0 0.0
        %2769 = vmatprep.subr.mxu0 0.0
        %2770 = vmatpush2.msra.mxu0 0.0
        %2771 = vmatprep.subr.mxu0 0.0
        %2772 = vmatpush2.msra.mxu0 0.0
        %2773 = vmatprep.subr.mxu0 0.0
        %2774 = vmatpush2.msra.mxu0 0.0
        %2775 = vmatprep.subr.mxu0 0.0
        %2776 = vmatpush2.msra.mxu0 0.0
        %2777 = vmatprep.subr.mxu0 0.0
        %2778 = vmatpush2.msra.mxu0 0.0
        %2779 = vmatprep.subr.mxu0 0.0
        %2780 = vmatpush2.msra.mxu0 0.0
        %2781 = vmatprep.subr.mxu0 0.0
        %2782 = vmatpush2.msra.mxu0 0.0
        %2783 = vmatprep.subr.mxu0 0.0
        %2784 = vmatpush2.msra.mxu0 0.0
        %2785 = vmatprep.subr.mxu0 0.0
        %2786 = vmatpush2.msra.mxu0 0.0
        %2787 = vmatprep.mubr.f32.mxu0 0.0
        %2788 = vmatmul.mubr.f32.gmra.mxu0 %v2721
        %v2789 = vpop.f32.mrf.mxu0
        %v2790 = vadd.f32 0.0, %v2789
        %v2791 = vpop.f32.mrf.mxu0
        %2792 = vdwg.mxu0
        %v2793 = vadd.f32 %v2699, %v2790
        %v2795 = vlaneseq
        %v2796 = vshrl.u32 %v2795, 7
        %v2797 = vsub.s32 0, %v2796
        %v2798 = vrot.slane %v1374, %v2797
        %v2800 = vadd.f32 %v2793, %v2798
        %v2801 = vxor.u32 %v2800, 2147483648
        %v2802 = vmul.f32 %v2801, 1.442695
        %v2803 = vpow.pop %v2802
        %v2804 = vadd.f32 %v2803, 1.0
        %v2805 = vrcp.pop %v2804
        %v2806 = vmul.f32 1.0, %v2805
        %v2807 = vmul.f32 %v2800, %v2806
        %v2809 = vlaneseq
        %v2810 = vshrl.u32 %v2809, 7
        %v2811 = vsub.s32 0, %v2810
        %v2812 = vrot.slane %v1391, %v2811
        %2814 = vmatprep.subr.mxu0 0.0
        %2815 = vmatpush1.msra.mxu0 %v1390
        %2816 = vmatprep.subr.mxu0 0.0
        %2817 = vmatpush1.msra.mxu0 %v1389
        %2818 = vmatprep.subr.mxu0 0.0
        %2819 = vmatpush1.msra.mxu0 %v1388
        %2820 = vmatprep.subr.mxu0 0.0
        %2821 = vmatpush1.msra.mxu0 %v1387
        %2822 = vmatprep.subr.mxu0 0.0
        %2823 = vmatpush1.msra.mxu0 %v1386
        %2824 = vmatprep.subr.mxu0 0.0
        %2825 = vmatpush1.msra.mxu0 %v1385
        %2826 = vmatprep.subr.mxu0 0.0
        %2827 = vmatpush1.msra.mxu0 %v1384
        %2828 = vmatprep.subr.mxu0 0.0
        %2829 = vmatpush1.msra.mxu0 %v1383
        %2830 = vmatprep.subr.mxu0 0.0
        %2831 = vmatpush1.msra.mxu0 %v1382
        %2832 = vmatprep.subr.mxu0 0.0
        %2833 = vmatpush1.msra.mxu0 %v1381
        %2834 = vmatprep.subr.mxu0 0.0
        %2835 = vmatpush1.msra.mxu0 %v1380
        %2836 = vmatprep.subr.mxu0 0.0
        %2837 = vmatpush1.msra.mxu0 %v1379
        %2838 = vmatprep.subr.mxu0 0.0
        %2839 = vmatpush1.msra.mxu0 %v1378
        %2840 = vmatprep.subr.mxu0 0.0
        %2841 = vmatpush1.msra.mxu0 %v1377
        %2842 = vmatprep.subr.mxu0 0.0
        %2843 = vmatpush1.msra.mxu0 %v1376
        %2844 = vmatprep.subr.mxu0 0.0
        %2845 = vmatpush1.msra.mxu0 %v1375
        %2846 = vmatprep.subr.mxu0 0.0
        %2847 = vmatpush2.msra.mxu0 0.0
        %2848 = vmatprep.subr.mxu0 0.0
        %2849 = vmatpush2.msra.mxu0 0.0
        %2850 = vmatprep.subr.mxu0 0.0
        %2851 = vmatpush2.msra.mxu0 0.0
        %2852 = vmatprep.subr.mxu0 0.0
        %2853 = vmatpush2.msra.mxu0 0.0
        %2854 = vmatprep.subr.mxu0 0.0
        %2855 = vmatpush2.msra.mxu0 0.0
        %2856 = vmatprep.subr.mxu0 0.0
        %2857 = vmatpush2.msra.mxu0 0.0
        %2858 = vmatprep.subr.mxu0 0.0
        %2859 = vmatpush2.msra.mxu0 0.0
        %2860 = vmatprep.subr.mxu0 0.0
        %2861 = vmatpush2.msra.mxu0 0.0
        %2862 = vmatprep.subr.mxu0 0.0
        %2863 = vmatpush2.msra.mxu0 0.0
        %2864 = vmatprep.subr.mxu0 0.0
        %2865 = vmatpush2.msra.mxu0 0.0
        %2866 = vmatprep.subr.mxu0 0.0
        %2867 = vmatpush2.msra.mxu0 0.0
        %2868 = vmatprep.subr.mxu0 0.0
        %2869 = vmatpush2.msra.mxu0 0.0
        %2870 = vmatprep.subr.mxu0 0.0
        %2871 = vmatpush2.msra.mxu0 0.0
        %2872 = vmatprep.subr.mxu0 0.0
        %2873 = vmatpush2.msra.mxu0 0.0
        %2874 = vmatprep.subr.mxu0 0.0
        %2875 = vmatpush2.msra.mxu0 0.0
        %2876 = vmatprep.subr.mxu0 0.0
        %2877 = vmatpush2.msra.mxu0 0.0
        %2878 = vmatprep.mubr.f32.mxu0 0.0
        %2879 = vmatmul.mubr.f32.gmra.mxu0 %v2807
        %v2880 = vpop.f32.mrf.mxu0
        %v2881 = vadd.f32 %v2812, %v2880
        %v2882 = vpop.f32.mrf.mxu0
        %2883 = vdwg.mxu0
        %v2884 = vxor.u32 %v2881, 2147483648
        %v2885 = vmul.f32 %v2884, 1.442695
        %v2886 = vpow.pop %v2885
        %v2887 = vadd.f32 %v2886, 1.0
        %v2888 = vrcp.pop %v2887
        %v2889 = vmul.f32 1.0, %v2888
        %v2890 = vmul.f32 %v2881, %v2889
        %v2892 = vlaneseq
        %v2893 = vshrl.u32 %v2892, 7
        %v2894 = vsub.s32 0, %v2893
        %v2895 = vrot.slane %v1392, %v2894
        %v2897 = vmul.f32 %v2890, %v2895
        %2898 = vadd.xlane.f32.xlu0 %v2897
        %v2899 = vpop.xlane.xlu0 %2898
        %v2901 = vlaneseq
        %v2902 = vshrl.u32 %v2901, 7
        %v2903 = vsub.s32 0, %v2902
        %v2904 = vrot.slane %v1393, %v2903
        %v2906 = vadd.f32 %v2899, %v2904
        %v2907 = vadd.f32 %v2906, %v1297
        %s2908 = scalar_lea.vmem [#allocation2], %s1289
        %2909 = vst.msk [vmem:[%s2908] sm:$0xff] %vm1418, %v2907
        %v2918 = vrot.slane %v2633, 7
        %v2919 = vsel %vm2708, %v2918, %v2632
        %v2920 = vrot.slane %v2634, 6
        %v2921 = vsel %vm2710, %v2920, %v2919
        %v2922 = vrot.slane %v2635, 5
        %v2923 = vsel %vm2712, %v2922, %v2921
        %v2924 = vrot.slane %v2636, 4
        %v2925 = vsel %vm2714, %v2924, %v2923
        %v2926 = vrot.slane %v2637, 3
        %v2927 = vsel %vm2716, %v2926, %v2925
        %v2928 = vrot.slane %v2638, 2
        %v2929 = vsel %vm2718, %v2928, %v2927
        %v2930 = vrot.slane %v2639, 1
        %v2931 = vsel %vm2720, %v2930, %v2929
        %s2933 = scalar_lea.vmem [#allocation3], %s1289
        %2934 = vst.msk [vmem:[%s2933] sm:$0xff] %vm1418, %v2931
        %p2935 = scmp.eq.s32.totalorder %s53, 1
        %p2936 = scmp.eq.s32.totalorder %s54, 1
        %p2937 = pnand %p2936, %p1269
        %p2938 = pneg %p2937
        %p2939 = pnand %p2935, %p2938
        %p2940 = pneg %p2939
        // Predicated region
        $region153: #{tpu_custom_call.1} parent=127 // pred_check
          _
        $region154: #{tpu_custom_call.1} parent=127 // pred_check_branch
          %2942 = sbr.rel (%p2939) target = $region156
        $region155: #{tpu_custom_call.1} parent=127 // pred_region
          %s2943 = scalar_lea.vmem [#allocation2], %s1287
          %v2944 = vld [vmem:[%s2943] sm:$0xff]
          %v2945 = vld [vmem:[%s2943 + $0x8] sm:$0xff]
          %v2946 = vsel %vm1418, %v2944, 0.0
          %v2947 = vrot.slane %v2946, 4
          %v2948 = vadd.f32 %v2946, %v2947
          %v2949 = vrot.slane %v2948, 2
          %v2950 = vadd.f32 %v2948, %v2949
          %v2951 = vrot.slane %v2950, 1
          %v2952 = vadd.f32 %v2950, %v2951
          %v2953 = vsel %vm1418, %v2945, 0.0
          %v2954 = vrot.slane %v2953, 4
          %v2955 = vadd.f32 %v2953, %v2954
          %v2956 = vrot.slane %v2955, 2
          %v2957 = vadd.f32 %v2955, %v2956
          %v2958 = vrot.slane %v2957, 1
          %v2959 = vadd.f32 %v2957, %v2958
          %v2960 = vrcp.pop 8.0
          %v2961 = vmul.f32 %v2952, %v2960
          %v2962 = vmul.f32 %v2959, %v2960
          %v2963 = vld [vmem:[%s23] sm:$0x1]
          %2965 = vset.pattern.permute.xlu0 0
          %2966 = vperm.xlu0 %2965, %v2961
          %v2967 = vpop.permute.xlu0 %2966
          %2970 = vset.pattern.permute.xlu0 0
          %2971 = vperm.xlu0 %2970, %v2962
          %v2972 = vpop.permute.xlu0 %2971
          %v2975 = vlaneseq
          %v2976 = vshrl.u32 %v2975, 7
          %v2977 = vsub.s32 0, %v2976
          %v2978 = vrot.slane %v2963, %v2977
          %v2980 = vmul.f32 %v2967, %v2978
          %v2981 = vmul.f32 %v2972, %v2978
          %v2982 = vld [vmem:[%s24] sm:$0x1]
          %v2984 = vlaneseq
          %v2985 = vshrl.u32 %v2984, 7
          %v2986 = vsub.s32 0, %v2985
          %v2987 = vrot.slane %v2982, %v2986
          %v2989 = vadd.f32 %v2980, %v2987
          %v2990 = vadd.f32 %v2981, %v2987
          %v2993 = vrot.slane %v2990, 7
          %v2994 = vsel %vm2708, %v2993, %v2989
          %vm2996 = vcmask 25600
          %v2997 = vsel %vm2996, %v2994, 0.0
          %2998 = vadd.xlane.f32.xlu0 %v2997
          %v2999 = vpop.xlane.xlu0 %2998
          %v3000 = vrcp.pop 4.0
          %v3001 = vmul.f32 %v2999, %v3000
          %v3003 = vrot.slane %v3001, 1
          %v3006 = vsub.f32 %v2989, %v3001
          %v3007 = vsub.f32 %v2990, %v3003
          %v3008 = vmul.f32 %v3006, %v3006
          %v3009 = vmul.f32 %v3007, %v3007
          %v3012 = vrot.slane %v3009, 7
          %v3013 = vsel %vm2708, %v3012, %v3008
          %v3015 = vsel %vm2996, %v3013, 0.0
          %3016 = vadd.xlane.f32.xlu0 %v3015
          %v3017 = vpop.xlane.xlu0 %3016
          %v3018 = vmul.f32 %v3017, %v3000
          %v3019 = vadd.f32 %v3018, 1e-05
          %v3020 = vrsqrt.pop %v3019
          %v3022 = vrot.slane %v3020, 1
          %v3025 = vmul.f32 %v3006, %v3020
          %v3026 = vmul.f32 %v3007, %v3022
          %v3027 = vld [vmem:[%s25] sm:$0x1]
          %v3029 = vlaneseq
          %v3030 = vshrl.u32 %v3029, 7
          %v3031 = vsub.s32 0, %v3030
          %v3032 = vrot.slane %v3027, %v3031
          %v3034 = vmul.f32 %v3025, %v3032
          %v3035 = vmul.f32 %v3026, %v3032
          %v3036 = vld [vmem:[%s26] sm:$0x1]
          %v3038 = vlaneseq
          %v3039 = vshrl.u32 %v3038, 7
          %v3040 = vsub.s32 0, %v3039
          %v3041 = vrot.slane %v3036, %v3040
          %v3043 = vadd.f32 %v3034, %v3041
          %v3044 = vadd.f32 %v3035, %v3041
          %v3047 = vrot.slane %v3044, 7
          %v3048 = vsel %vm2708, %v3047, %v3043
          %3050 = vst.msk [vmem:[#allocation13] sm:$0x3] %vm2996, %v3048
        $region156: #{tpu_custom_call.1} parent=127 // pred_fallthru
          _
        // Predicated region
        $region157: #{tpu_custom_call.1} parent=127 // pred_check
          %p3051 = pneg %p762
        $region158: #{tpu_custom_call.1} parent=127 // pred_check_branch
          %3053 = sbr.rel (%p3051) target = $region160
        $region159: #{tpu_custom_call.1} parent=127 // pred_region
          %s3055 = ssub.s32 32, 32
          %3056 = vsyncadd [#allocation6], %s3055
          %s3058 = sshll.u32 [#allocation13], 4
          %s3059 = int_to_ptr.vmem [resolvable:$true] %s3058
          %3061 = dma.vmem_to_hbm [thread:$0]  %s3059, 32, %s27, [#allocation6]
        $region160: #{tpu_custom_call.1} parent=127 // pred_fallthru
          _
        // Predicated region
        $region161: #{tpu_custom_call.1} parent=127 // pred_check
          %p3062 = pneg %p762
        $region162: #{tpu_custom_call.1} parent=127 // pred_check_branch
          %3064 = sbr.rel (%p3062) target = $region164
        $region163: #{tpu_custom_call.1} parent=127 // pred_region
          %3065 = dma.done [#allocation6], 32
        $region164: #{tpu_custom_call.1} parent=127 // pred_fallthru
          _
      $region128: #{tpu_custom_call.1} parent=5 // pred_fallthru
        _
      %p3066 = scmp.le.s32.totalorder 2, %s43
      // Predicated region
      $region165: #{tpu_custom_call.1} parent=5 // pred_check
        %p3067 = pneg %p3066
      $region166: #{tpu_custom_call.1} parent=5 // pred_check_branch
        %3069 = sbr.rel (%p3067) target = $region168
      $region167: #{tpu_custom_call.1} parent=5 // pred_region
        %s3070 = ssub.s32 %s43, 2
      $region168: #{tpu_custom_call.1} parent=5 // pred_fallthru
        _
    $region6: #{tpu_custom_call.1} parent=1 // loop_footer
      %s47 = sadd.s32 1, %s43
    $region7: #{tpu_custom_call.1} parent=1 // loop_footer_branch
      %42 = sbr.rel target = $region3
    $region8: #{tpu_custom_call.1} parent=1 // loop_exit
      _
    %3071 = vsyncpa [#allocation5], 1
    %s3072 = scalar_lea.sflag [#allocation5], 1
    %3073 = vsyncpa %s3072, 1
    %3074 = vsyncpa [#allocation8], 1
    %s3075 = scalar_lea.sflag [#allocation8], 1
    %3076 = vsyncpa %s3075, 1
    %3077 = vsyncpa [#allocation11], 1
    %s3078 = scalar_lea.sflag [#allocation11], 1
    %3079 = vsyncpa %s3078, 1
    %3080 = vsyncpa [#allocation6], 1
    %s3081 = scalar_lea.sflag [#allocation6], 1
    %3082 = vsyncpa %s3081, 1

</llo_original>
